<compile_context>
chip_gen: v6e
topology: v6e:2x2x1
jax: 0.10.0
libtpu: 0.0.40
codegen_flags: <defaults>
</compile_context>

<pallas_src>
import jax
import jax.numpy as jnp
from jax.experimental import pallas as pl
from jax.experimental.pallas import tpu as pltpu

EPS = 1e-5
# Finite "-inf" sentinel for max-pool padding (every 3x3 window contains its
# real center, so the sentinel never reaches the output).
_NEG = float(jnp.finfo(jnp.float32).min)


# ---------------------------------------------------------------------------
# in-kernel helpers (operate on VMEM-resident NHWC values)
# ---------------------------------------------------------------------------

def _shift_w(t, dx, fill):
    """Value at column x+dx (W = sublane axis), `fill` outside the borders.

    Built once per rep / per pool (3 copies) and reused by all taps instead of
    taking 9 unaligned sublane windows per rep.
    TODO(synk): switch to pltpu.roll (XLU) + iota mask once sublane rotates of
    4-D operands are validated on all target generations.
    """
    if dx == 0:
        return t
    n, h, w, c = t.shape
    col = jnp.full((n, h, abs(dx), c), fill, t.dtype)
    if dx > 0:
        return jnp.concatenate([t[:, :, dx:, :], col], axis=2)
    return jnp.concatenate([col, t[:, :, :dx, :]], axis=2)


def _shift_h(t, dy, fill):
    """Value at row y+dy (H is a leading dim => cheap slices / concat)."""
    if dy == 0:
        return t
    n, h, w, c = t.shape
    row = jnp.full((n, abs(dy), w, c), fill, t.dtype)
    if dy > 0:
        return jnp.concatenate([t[:, dy:], row], axis=1)
    return jnp.concatenate([row, t[:, :dy]], axis=1)


def _bn_affine(y, gamma, beta):
    """Training-mode BatchNorm over axis 0 of (M, C).

    Single pass E[x]/E[x^2] (halves the temp traffic vs. (y-mean)^2), EUP rsqrt,
    and a fused scale/shift so the activation is touched exactly once more.
    """
    inv_m = 1.0 / float(y.shape[0])
    s1 = jnp.sum(y, axis=0, keepdims=True)
    s2 = jnp.sum(y * y, axis=0, keepdims=True)
    mean = s1 * inv_m
    var = jnp.maximum(s2 * inv_m - mean * mean, 0.0)
    scale = jax.lax.rsqrt(var + EPS) * gamma        # EUP rsqrt
    bias = beta - mean * scale
    return y * scale + bias                          # one fused FMA pass


# ---------------------------------------------------------------------------
# fused Block kernel
# ---------------------------------------------------------------------------

def make_block_kernel(reps, strides, has_skip, mxu_dtype):
    pooled = strides != 1

    def kernel(*refs):
        it = 0
        x_ref = refs[it]; it += 1
        sep_refs = []
        for _ in range(reps):
            sep_refs.append(refs[it:it + 4]); it += 4
        if has_skip:
            wsk_ref, gsk_ref, bsk_ref = refs[it:it + 3]; it += 3
        out_ref = refs[it]; it += 1
        scratch = refs[it:]
        pool_buf = scratch[0] if pooled else None
        skip_buf = scratch[1] if (pooled and has_skip) else None

        def sepconv_bn(h, dw_ref, pw_ref, g_ref, b_ref):
            """ReLU -> depthwise 3x3 (stride 1, pad 1) -> pointwise 1x1 (MXU) -> BN."""
            a = jnp.maximum(h, 0.0)                    # ReLU; zero halo == zero pad
            n, hh, ww, ci = a.shape
            dw = dw_ref[...]                           # (9, ci), row k = tap (ky, kx)
            # three W-shifted copies, hoisted out of the 9-tap loop
            aw = (_shift_w(a, -1, 0.0), a, _shift_w(a, 1, 0.0))
            acc = None
            for ky in range(3):
                p = (aw[0] * dw[3 * ky + 0, :]
                     + aw[1] * dw[3 * ky + 1, :]
                     + aw[2] * dw[3 * ky + 2, :])
                p = _shift_h(p, ky - 1, 0.0)           # H halo: leading-dim concat
                acc = p if acc is None else acc + p
            co = pw_ref.shape[-1]
            # pointwise 1x1 conv == channel matmul on the MXU: bf16 in, f32 acc.
            # W % 8 == 0 makes the (N,H,W,C) <-> (N*H*W,C) reshapes layout-preserving.
            y = jnp.dot(acc.reshape(n * hh * ww, ci).astype(mxu_dtype),
                        pw_ref[...].astype(mxu_dtype),
                        preferred_element_type=jnp.float32)
            y = _bn_affine(y, g_ref[...], b_ref[...])
            return y.reshape(n, hh, ww, co)

        # ---- main branch: [ReLU -> sepconv -> BN] x reps (all resident in VMEM)
        x = x_ref[...]
        h = x
        for r in range(reps):
            h = sepconv_bn(h, *sep_refs[r])

        n, hh, ww, co = h.shape
        if pooled:
            s = strides
            ho = (hh - 1) // s + 1
            wo = (ww - 1) // s + 1
            # 3x3 / stride-s max pool evaluated only at the strided outputs:
            #  1) column 3-max at full W (reuses the hoisted W-shift helper)
            cmax = jnp.maximum(jnp.maximum(_shift_w(h, -1, _NEG), h),
                               _shift_w(h, 1, _NEG))
            #  2) row part: H is a leading dim, so the (H -> Ho, s) split is free
            c5 = cmax.reshape(n, ho, s, ww, co)
            rmax = jnp.maximum(c5[:, :, 0], c5[:, :, 1])                   # rows s*i, s*i+1
            rmax = jnp.maximum(rmax, _shift_h(c5[:, :, s - 1], -1, _NEG))  # row s*i-1
            #  3) W subsample (sublane axis) via one strided VMEM-scratch read
            pool_buf[...] = rmax                                   # (N, Ho, W, Co)
            h = pool_buf[:, :, pl.ds(0, wo, stride=s), :]          # (N, Ho, Wo, Co)

        # ---- skip branch + residual add (fused epilogue) ----------------------
        if has_skip:
            n2, ho2, wo2, co2 = h.shape
            if pooled:
                # strided 1x1-conv input: rows via the free leading-dim split,
                # columns via the same strided sublane read pattern.
                skip_buf[...] = x.reshape(
                    n2, ho2, strides, x.shape[2], x.shape[3])[:, :, 0]
                xs = skip_buf[:, :, pl.ds(0, wo2, stride=strides), :]
            else:
                xs = x
            ci0 = xs.shape[-1]
            ys = jnp.dot(xs.reshape(n2 * ho2 * wo2, ci0).astype(mxu_dtype),
                         wsk_ref[...].astype(mxu_dtype),
                         preferred_element_type=jnp.float32)
            ys = _bn_affine(ys, gsk_ref[...], bsk_ref[...])
            out_ref[...] = h + ys.reshape(n2, ho2, wo2, co2)
        else:
            out_ref[...] = h + x           # identity skip (Cin == Cout, stride 1)

    return kernel


# ---------------------------------------------------------------------------
# pallas_call glue
# ---------------------------------------------------------------------------

def _full_spec(shape):
    nd = len(shape)
    return pl.BlockSpec(shape, lambda *_: (0,) * nd)


def block_forward(x_nchw, params, in_filters, out_filters, reps, strides,
                  mxu_dtype=jnp.bfloat16):
    """Forward pass of the PyTorch `Block`, fused into a single pallas_call."""
    x = jnp.transpose(x_nchw, (0, 2, 3, 1)).astype(jnp.float32)  # NCHW -> NHWC (C on lanes)
    n, h, w, cin = x.shape
    assert cin == in_filters
    has_skip = (out_filters != in_filters) or (strides != 1)
    pooled = strides != 1
    ho = (h - 1) // strides + 1
    wo = (w - 1) // strides + 1
    if pooled:
        # TODO(synk): ragged H/stride needs one extra (-inf padded) row group.
        assert h % strides == 0

    args = [x]
    for dw, pw, g, b in params["sep"]:
        args += [dw.reshape(9, dw.shape[-1]), pw, g, b]
    if has_skip:
        args += list(params["skip"])

    scratch_shapes = []
    if pooled:
        scratch_shapes.append(pltpu.VMEM((n, ho, w, out_filters), jnp.float32))  # pool row-max
        if has_skip:
            scratch_shapes.append(pltpu.VMEM((n, ho, w, in_filters), jnp.float32))  # skip rows

    out_struct = jax.ShapeDtypeStruct((n, ho, wo, out_filters), jnp.float32)
    out = pl.pallas_call(
        make_block_kernel(reps, strides, has_skip, mxu_dtype),
        out_shape=out_struct,
        # single fused invocation: BN needs global batch stats and the whole
        # problem fits VMEM (see TODO above for the tiled two-pass variant).
        grid=(1,),
        in_specs=[_full_spec(a.shape) for a in args],
        out_specs=_full_spec(out_struct.shape),
        scratch_shapes=scratch_shapes,
        compiler_params=pltpu.CompilerParams(
            dimension_semantics=("arbitrary",),
            vmem_limit_bytes=32 * 1024 * 1024,   # safe on v7x's 64 MiB VMEM too
        ),
    )(*args)
    return jnp.transpose(out, (0, 3, 1, 2))      # NHWC -> NCHW


def init_params(key, in_filters, out_filters, reps):
    """Deterministic synthetic parameters (shapes follow the PyTorch module)."""
    keys = jax.random.split(key, 2 * reps + 1)
    params = {"sep": []}
    cin = in_filters
    for i in range(reps):
        dw = 0.2 * jax.random.normal(keys[2 * i], (3, 3, cin), jnp.float32)            # depthwise (ky,kx,c)
        pw = 0.2 * jax.random.normal(keys[2 * i + 1], (cin, out_filters), jnp.float32)  # pointwise (cin,cout)
        gamma = jnp.ones((1, out_filters), jnp.float32)
        beta = jnp.zeros((1, out_filters), jnp.float32)
        params["sep"].append((dw, pw, gamma, beta))
        cin = out_filters
    w_skip = 0.2 * jax.random.normal(keys[-1], (in_filters, out_filters), jnp.float32)
    params["skip"] = (w_skip,
                      jnp.ones((1, out_filters), jnp.float32),
                      jnp.zeros((1, out_filters), jnp.float32))
    return params


if __name__ == "__main__":
    key = jax.random.PRNGKey(0)
    kx, kp = jax.random.split(key)

    N, Cin, H, W = 2, 4, 16, 16
    Cout, reps, strides = 8, 2, 2

    x = jax.random.normal(kx, (N, Cin, H, W), jnp.float32)
    params = init_params(kp, Cin, Cout, reps)

    out = block_forward(x, params, Cin, Cout, reps, strides)
    out = jax.block_until_ready(out)

    assert out.shape == (N, Cout, H // strides, W // strides), out.shape
    assert bool(jnp.all(jnp.isfinite(out)))
    print("KERNEL_OK")
</pallas_src>

<mosaic_0001>
module attributes {stable_mosaic.version = 11 : i64} {
  func.func @kernel(%arg0: i32, %arg1: memref<2x16x16x4xf32, #tpu.memory_space<vmem>>, %arg2: memref<9x4xf32, #tpu.memory_space<vmem>>, %arg3: memref<4x8xf32, #tpu.memory_space<vmem>>, %arg4: memref<1x8xf32, #tpu.memory_space<vmem>>, %arg5: memref<1x8xf32, #tpu.memory_space<vmem>>, %arg6: memref<9x8xf32, #tpu.memory_space<vmem>>, %arg7: memref<8x8xf32, #tpu.memory_space<vmem>>, %arg8: memref<1x8xf32, #tpu.memory_space<vmem>>, %arg9: memref<1x8xf32, #tpu.memory_space<vmem>>, %arg10: memref<4x8xf32, #tpu.memory_space<vmem>>, %arg11: memref<1x8xf32, #tpu.memory_space<vmem>>, %arg12: memref<1x8xf32, #tpu.memory_space<vmem>>, %arg13: memref<2x8x8x8xf32, #tpu.memory_space<vmem>>, %arg14: memref<2x8x16x8xf32, #tpu.memory_space<vmem>>, %arg15: memref<2x8x16x4xf32, #tpu.memory_space<vmem>>) attributes {dimension_semantics = [#tpu.dimension_semantics<arbitrary>], iteration_bounds = array<i64: 1>, scalar_prefetch = 0 : i64, scratch_operands = 2 : i64, tpu.core_type = #tpu.core_type<tc>, window_params = [{pipeline_mode = #tpu.pipeline_mode<synchronous>, transform_indices = @transform_0, window_bounds = array<i64: 2, 16, 16, 4>}, {pipeline_mode = #tpu.pipeline_mode<synchronous>, transform_indices = @transform_1, window_bounds = array<i64: 9, 4>}, {pipeline_mode = #tpu.pipeline_mode<synchronous>, transform_indices = @transform_2, window_bounds = array<i64: 4, 8>}, {pipeline_mode = #tpu.pipeline_mode<synchronous>, transform_indices = @transform_3, window_bounds = array<i64: 1, 8>}, {pipeline_mode = #tpu.pipeline_mode<synchronous>, transform_indices = @transform_4, window_bounds = array<i64: 1, 8>}, {pipeline_mode = #tpu.pipeline_mode<synchronous>, transform_indices = @transform_5, window_bounds = array<i64: 9, 8>}, {pipeline_mode = #tpu.pipeline_mode<synchronous>, transform_indices = @transform_6, window_bounds = array<i64: 8, 8>}, {pipeline_mode = #tpu.pipeline_mode<synchronous>, transform_indices = @transform_7, window_bounds = array<i64: 1, 8>}, {pipeline_mode = #tpu.pipeline_mode<synchronous>, transform_indices = @transform_8, window_bounds = array<i64: 1, 8>}, {pipeline_mode = #tpu.pipeline_mode<synchronous>, transform_indices = @transform_9, window_bounds = array<i64: 4, 8>}, {pipeline_mode = #tpu.pipeline_mode<synchronous>, transform_indices = @transform_10, window_bounds = array<i64: 1, 8>}, {pipeline_mode = #tpu.pipeline_mode<synchronous>, transform_indices = @transform_11, window_bounds = array<i64: 1, 8>}, {pipeline_mode = #tpu.pipeline_mode<synchronous>, transform_indices = @transform_12, window_bounds = array<i64: 2, 8, 8, 8>}]} {
    %c0 = arith.constant 0 : index
    %c0_0 = arith.constant 0 : index
    %c0_1 = arith.constant 0 : index
    %c0_2 = arith.constant 0 : index
    %0 = vector.load %arg1[%c0, %c0_0, %c0_1, %c0_2] : memref<2x16x16x4xf32, #tpu.memory_space<vmem>>, vector<2x16x16x4xf32>
    %cst = arith.constant 0.000000e+00 : f32
    %1 = vector.broadcast %cst : f32 to vector<2x16x16x4xf32>
    %2 = arith.maximumf %0, %1 : vector<2x16x16x4xf32>
    %c0_3 = arith.constant 0 : index
    %c0_4 = arith.constant 0 : index
    %3 = vector.load %arg2[%c0_3, %c0_4] : memref<9x4xf32, #tpu.memory_space<vmem>>, vector<9x4xf32>
    %cst_5 = arith.constant 0.000000e+00 : f32
    %4 = vector.broadcast %cst_5 : f32 to vector<2x16x1x4xf32>
    %5 = vector.extract_strided_slice %2 {offsets = [0, 0, 0, 0], sizes = [2, 16, 15, 4], strides = [1, 1, 1, 1]} : vector<2x16x16x4xf32> to vector<2x16x15x4xf32>
    %6 = tpu.concatenate %4, %5 in 2 : vector<2x16x1x4xf32>, vector<2x16x15x4xf32> -> vector<2x16x16x4xf32>
    %cst_6 = arith.constant 0.000000e+00 : f32
    %7 = vector.broadcast %cst_6 : f32 to vector<2x16x1x4xf32>
    %8 = vector.extract_strided_slice %2 {offsets = [0, 0, 1, 0], sizes = [2, 16, 15, 4], strides = [1, 1, 1, 1]} : vector<2x16x16x4xf32> to vector<2x16x15x4xf32>
    %9 = tpu.concatenate %8, %7 in 2 : vector<2x16x15x4xf32>, vector<2x16x1x4xf32> -> vector<2x16x16x4xf32>
    %10 = vector.extract_strided_slice %3 {offsets = [0, 0], sizes = [1, 4], strides = [1, 1]} : vector<9x4xf32> to vector<1x4xf32>
    %11 = vector.shape_cast %10 : vector<1x4xf32> to vector<4xf32>
    %12 = vector.shape_cast %11 : vector<4xf32> to vector<1x1x1x4xf32>
    %13 = vector.broadcast %12 : vector<1x1x1x4xf32> to vector<2x16x16x4xf32>
    %14 = arith.mulf %6, %13 : vector<2x16x16x4xf32>
    %15 = vector.extract_strided_slice %3 {offsets = [1, 0], sizes = [1, 4], strides = [1, 1]} : vector<9x4xf32> to vector<1x4xf32>
    %16 = vector.shape_cast %15 : vector<1x4xf32> to vector<4xf32>
    %17 = vector.shape_cast %16 : vector<4xf32> to vector<1x1x1x4xf32>
    %18 = vector.broadcast %17 : vector<1x1x1x4xf32> to vector<2x16x16x4xf32>
    %19 = arith.mulf %2, %18 : vector<2x16x16x4xf32>
    %20 = arith.addf %14, %19 : vector<2x16x16x4xf32>
    %21 = vector.extract_strided_slice %3 {offsets = [2, 0], sizes = [1, 4], strides = [1, 1]} : vector<9x4xf32> to vector<1x4xf32>
    %22 = vector.shape_cast %21 : vector<1x4xf32> to vector<4xf32>
    %23 = vector.shape_cast %22 : vector<4xf32> to vector<1x1x1x4xf32>
    %24 = vector.broadcast %23 : vector<1x1x1x4xf32> to vector<2x16x16x4xf32>
    %25 = arith.mulf %9, %24 : vector<2x16x16x4xf32>
    %26 = arith.addf %20, %25 : vector<2x16x16x4xf32>
    %cst_7 = arith.constant 0.000000e+00 : f32
    %27 = vector.broadcast %cst_7 : f32 to vector<2x1x16x4xf32>
    %28 = vector.extract_strided_slice %26 {offsets = [0, 0, 0, 0], sizes = [2, 15, 16, 4], strides = [1, 1, 1, 1]} : vector<2x16x16x4xf32> to vector<2x15x16x4xf32>
    %29 = tpu.concatenate %27, %28 in 1 : vector<2x1x16x4xf32>, vector<2x15x16x4xf32> -> vector<2x16x16x4xf32>
    %30 = vector.extract_strided_slice %3 {offsets = [3, 0], sizes = [1, 4], strides = [1, 1]} : vector<9x4xf32> to vector<1x4xf32>
    %31 = vector.shape_cast %30 : vector<1x4xf32> to vector<4xf32>
    %32 = vector.shape_cast %31 : vector<4xf32> to vector<1x1x1x4xf32>
    %33 = vector.broadcast %32 : vector<1x1x1x4xf32> to vector<2x16x16x4xf32>
    %34 = arith.mulf %6, %33 : vector<2x16x16x4xf32>
    %35 = vector.extract_strided_slice %3 {offsets = [4, 0], sizes = [1, 4], strides = [1, 1]} : vector<9x4xf32> to vector<1x4xf32>
    %36 = vector.shape_cast %35 : vector<1x4xf32> to vector<4xf32>
    %37 = vector.shape_cast %36 : vector<4xf32> to vector<1x1x1x4xf32>
    %38 = vector.broadcast %37 : vector<1x1x1x4xf32> to vector<2x16x16x4xf32>
    %39 = arith.mulf %2, %38 : vector<2x16x16x4xf32>
    %40 = arith.addf %34, %39 : vector<2x16x16x4xf32>
    %41 = vector.extract_strided_slice %3 {offsets = [5, 0], sizes = [1, 4], strides = [1, 1]} : vector<9x4xf32> to vector<1x4xf32>
    %42 = vector.shape_cast %41 : vector<1x4xf32> to vector<4xf32>
    %43 = vector.shape_cast %42 : vector<4xf32> to vector<1x1x1x4xf32>
    %44 = vector.broadcast %43 : vector<1x1x1x4xf32> to vector<2x16x16x4xf32>
    %45 = arith.mulf %9, %44 : vector<2x16x16x4xf32>
    %46 = arith.addf %40, %45 : vector<2x16x16x4xf32>
    %47 = arith.addf %29, %46 : vector<2x16x16x4xf32>
    %48 = vector.extract_strided_slice %3 {offsets = [6, 0], sizes = [1, 4], strides = [1, 1]} : vector<9x4xf32> to vector<1x4xf32>
    %49 = vector.shape_cast %48 : vector<1x4xf32> to vector<4xf32>
    %50 = vector.shape_cast %49 : vector<4xf32> to vector<1x1x1x4xf32>
    %51 = vector.broadcast %50 : vector<1x1x1x4xf32> to vector<2x16x16x4xf32>
    %52 = arith.mulf %6, %51 : vector<2x16x16x4xf32>
    %53 = vector.extract_strided_slice %3 {offsets = [7, 0], sizes = [1, 4], strides = [1, 1]} : vector<9x4xf32> to vector<1x4xf32>
    %54 = vector.shape_cast %53 : vector<1x4xf32> to vector<4xf32>
    %55 = vector.shape_cast %54 : vector<4xf32> to vector<1x1x1x4xf32>
    %56 = vector.broadcast %55 : vector<1x1x1x4xf32> to vector<2x16x16x4xf32>
    %57 = arith.mulf %2, %56 : vector<2x16x16x4xf32>
    %58 = arith.addf %52, %57 : vector<2x16x16x4xf32>
    %59 = vector.extract_strided_slice %3 {offsets = [8, 0], sizes = [1, 4], strides = [1, 1]} : vector<9x4xf32> to vector<1x4xf32>
    %60 = vector.shape_cast %59 : vector<1x4xf32> to vector<4xf32>
    %61 = vector.shape_cast %60 : vector<4xf32> to vector<1x1x1x4xf32>
    %62 = vector.broadcast %61 : vector<1x1x1x4xf32> to vector<2x16x16x4xf32>
    %63 = arith.mulf %9, %62 : vector<2x16x16x4xf32>
    %64 = arith.addf %58, %63 : vector<2x16x16x4xf32>
    %cst_8 = arith.constant 0.000000e+00 : f32
    %65 = vector.broadcast %cst_8 : f32 to vector<2x1x16x4xf32>
    %66 = vector.extract_strided_slice %64 {offsets = [0, 1, 0, 0], sizes = [2, 15, 16, 4], strides = [1, 1, 1, 1]} : vector<2x16x16x4xf32> to vector<2x15x16x4xf32>
    %67 = tpu.concatenate %66, %65 in 1 : vector<2x15x16x4xf32>, vector<2x1x16x4xf32> -> vector<2x16x16x4xf32>
    %68 = arith.addf %47, %67 : vector<2x16x16x4xf32>
    %69 = vector.shape_cast %68 : vector<2x16x16x4xf32> to vector<512x4xf32>
    %70 = arith.truncf %69 : vector<512x4xf32> to vector<512x4xbf16>
    %c0_9 = arith.constant 0 : index
    %c0_10 = arith.constant 0 : index
    %71 = vector.load %arg3[%c0_9, %c0_10] : memref<4x8xf32, #tpu.memory_space<vmem>>, vector<4x8xf32>
    %72 = arith.truncf %71 : vector<4x8xf32> to vector<4x8xbf16>
    %cst_11 = arith.constant dense<0.000000e+00> : vector<512x8xf32>
    %73 = tpu.matmul %70, %72, %cst_11 {dimension_numbers = #tpu.dot_dimension_numbers<[1], [0], [0], [1], [0, 0, 1, 1], [], []>} : vector<512x4xbf16>, vector<4x8xbf16>, vector<512x8xf32> -> vector<512x8xf32>
    %c0_12 = arith.constant 0 : index
    %c0_13 = arith.constant 0 : index
    %74 = vector.load %arg4[%c0_12, %c0_13] : memref<1x8xf32, #tpu.memory_space<vmem>>, vector<1x8xf32>
    %c0_14 = arith.constant 0 : index
    %c0_15 = arith.constant 0 : index
    %75 = vector.load %arg5[%c0_14, %c0_15] : memref<1x8xf32, #tpu.memory_space<vmem>>, vector<1x8xf32>
    %cst_16 = arith.constant dense<0.000000e+00> : vector<8xf32>
    %76 = vector.multi_reduction <add>, %73, %cst_16 [0] : vector<512x8xf32> to vector<8xf32>
    %77 = vector.shape_cast %76 : vector<8xf32> to vector<1x8xf32>
    %78 = arith.mulf %73, %73 : vector<512x8xf32>
    %cst_17 = arith.constant dense<0.000000e+00> : vector<8xf32>
    %79 = vector.multi_reduction <add>, %78, %cst_17 [0] : vector<512x8xf32> to vector<8xf32>
    %80 = vector.shape_cast %79 : vector<8xf32> to vector<1x8xf32>
    %cst_18 = arith.constant 0.001953125 : f32
    %81 = vector.broadcast %cst_18 : f32 to vector<1x8xf32>
    %82 = arith.mulf %77, %81 : vector<1x8xf32>
    %cst_19 = arith.constant 0.001953125 : f32
    %83 = vector.broadcast %cst_19 : f32 to vector<1x8xf32>
    %84 = arith.mulf %80, %83 : vector<1x8xf32>
    %85 = arith.mulf %82, %82 : vector<1x8xf32>
    %86 = arith.subf %84, %85 : vector<1x8xf32>
    %cst_20 = arith.constant 0.000000e+00 : f32
    %87 = vector.broadcast %cst_20 : f32 to vector<1x8xf32>
    %88 = arith.maximumf %86, %87 : vector<1x8xf32>
    %cst_21 = arith.constant 9.99999974E-6 : f32
    %89 = vector.broadcast %cst_21 : f32 to vector<1x8xf32>
    %90 = arith.addf %88, %89 : vector<1x8xf32>
    %91 = math.rsqrt %90 : vector<1x8xf32>
    %92 = arith.mulf %91, %74 : vector<1x8xf32>
    %93 = arith.mulf %82, %92 : vector<1x8xf32>
    %94 = arith.subf %75, %93 : vector<1x8xf32>
    %95 = vector.broadcast %92 : vector<1x8xf32> to vector<512x8xf32>
    %96 = arith.mulf %73, %95 : vector<512x8xf32>
    %97 = vector.broadcast %94 : vector<1x8xf32> to vector<512x8xf32>
    %98 = arith.addf %96, %97 : vector<512x8xf32>
    %99 = vector.shape_cast %98 : vector<512x8xf32> to vector<2x16x16x8xf32>
    %cst_22 = arith.constant 0.000000e+00 : f32
    %100 = vector.broadcast %cst_22 : f32 to vector<2x16x16x8xf32>
    %101 = arith.maximumf %99, %100 : vector<2x16x16x8xf32>
    %c0_23 = arith.constant 0 : index
    %c0_24 = arith.constant 0 : index
    %102 = vector.load %arg6[%c0_23, %c0_24] : memref<9x8xf32, #tpu.memory_space<vmem>>, vector<9x8xf32>
    %cst_25 = arith.constant 0.000000e+00 : f32
    %103 = vector.broadcast %cst_25 : f32 to vector<2x16x1x8xf32>
    %104 = vector.extract_strided_slice %101 {offsets = [0, 0, 0, 0], sizes = [2, 16, 15, 8], strides = [1, 1, 1, 1]} : vector<2x16x16x8xf32> to vector<2x16x15x8xf32>
    %105 = tpu.concatenate %103, %104 in 2 : vector<2x16x1x8xf32>, vector<2x16x15x8xf32> -> vector<2x16x16x8xf32>
    %cst_26 = arith.constant 0.000000e+00 : f32
    %106 = vector.broadcast %cst_26 : f32 to vector<2x16x1x8xf32>
    %107 = vector.extract_strided_slice %101 {offsets = [0, 0, 1, 0], sizes = [2, 16, 15, 8], strides = [1, 1, 1, 1]} : vector<2x16x16x8xf32> to vector<2x16x15x8xf32>
    %108 = tpu.concatenate %107, %106 in 2 : vector<2x16x15x8xf32>, vector<2x16x1x8xf32> -> vector<2x16x16x8xf32>
    %109 = vector.extract_strided_slice %102 {offsets = [0, 0], sizes = [1, 8], strides = [1, 1]} : vector<9x8xf32> to vector<1x8xf32>
    %110 = vector.shape_cast %109 : vector<1x8xf32> to vector<8xf32>
    %111 = vector.shape_cast %110 : vector<8xf32> to vector<1x1x1x8xf32>
    %112 = vector.broadcast %111 : vector<1x1x1x8xf32> to vector<2x16x16x8xf32>
    %113 = arith.mulf %105, %112 : vector<2x16x16x8xf32>
    %114 = vector.extract_strided_slice %102 {offsets = [1, 0], sizes = [1, 8], strides = [1, 1]} : vector<9x8xf32> to vector<1x8xf32>
    %115 = vector.shape_cast %114 : vector<1x8xf32> to vector<8xf32>
    %116 = vector.shape_cast %115 : vector<8xf32> to vector<1x1x1x8xf32>
    %117 = vector.broadcast %116 : vector<1x1x1x8xf32> to vector<2x16x16x8xf32>
    %118 = arith.mulf %101, %117 : vector<2x16x16x8xf32>
    %119 = arith.addf %113, %118 : vector<2x16x16x8xf32>
    %120 = vector.extract_strided_slice %102 {offsets = [2, 0], sizes = [1, 8], strides = [1, 1]} : vector<9x8xf32> to vector<1x8xf32>
    %121 = vector.shape_cast %120 : vector<1x8xf32> to vector<8xf32>
    %122 = vector.shape_cast %121 : vector<8xf32> to vector<1x1x1x8xf32>
    %123 = vector.broadcast %122 : vector<1x1x1x8xf32> to vector<2x16x16x8xf32>
    %124 = arith.mulf %108, %123 : vector<2x16x16x8xf32>
    %125 = arith.addf %119, %124 : vector<2x16x16x8xf32>
    %cst_27 = arith.constant 0.000000e+00 : f32
    %126 = vector.broadcast %cst_27 : f32 to vector<2x1x16x8xf32>
    %127 = vector.extract_strided_slice %125 {offsets = [0, 0, 0, 0], sizes = [2, 15, 16, 8], strides = [1, 1, 1, 1]} : vector<2x16x16x8xf32> to vector<2x15x16x8xf32>
    %128 = tpu.concatenate %126, %127 in 1 : vector<2x1x16x8xf32>, vector<2x15x16x8xf32> -> vector<2x16x16x8xf32>
    %129 = vector.extract_strided_slice %102 {offsets = [3, 0], sizes = [1, 8], strides = [1, 1]} : vector<9x8xf32> to vector<1x8xf32>
    %130 = vector.shape_cast %129 : vector<1x8xf32> to vector<8xf32>
    %131 = vector.shape_cast %130 : vector<8xf32> to vector<1x1x1x8xf32>
    %132 = vector.broadcast %131 : vector<1x1x1x8xf32> to vector<2x16x16x8xf32>
    %133 = arith.mulf %105, %132 : vector<2x16x16x8xf32>
    %134 = vector.extract_strided_slice %102 {offsets = [4, 0], sizes = [1, 8], strides = [1, 1]} : vector<9x8xf32> to vector<1x8xf32>
    %135 = vector.shape_cast %134 : vector<1x8xf32> to vector<8xf32>
    %136 = vector.shape_cast %135 : vector<8xf32> to vector<1x1x1x8xf32>
    %137 = vector.broadcast %136 : vector<1x1x1x8xf32> to vector<2x16x16x8xf32>
    %138 = arith.mulf %101, %137 : vector<2x16x16x8xf32>
    %139 = arith.addf %133, %138 : vector<2x16x16x8xf32>
    %140 = vector.extract_strided_slice %102 {offsets = [5, 0], sizes = [1, 8], strides = [1, 1]} : vector<9x8xf32> to vector<1x8xf32>
    %141 = vector.shape_cast %140 : vector<1x8xf32> to vector<8xf32>
    %142 = vector.shape_cast %141 : vector<8xf32> to vector<1x1x1x8xf32>
    %143 = vector.broadcast %142 : vector<1x1x1x8xf32> to vector<2x16x16x8xf32>
    %144 = arith.mulf %108, %143 : vector<2x16x16x8xf32>
    %145 = arith.addf %139, %144 : vector<2x16x16x8xf32>
    %146 = arith.addf %128, %145 : vector<2x16x16x8xf32>
    %147 = vector.extract_strided_slice %102 {offsets = [6, 0], sizes = [1, 8], strides = [1, 1]} : vector<9x8xf32> to vector<1x8xf32>
    %148 = vector.shape_cast %147 : vector<1x8xf32> to vector<8xf32>
    %149 = vector.shape_cast %148 : vector<8xf32> to vector<1x1x1x8xf32>
    %150 = vector.broadcast %149 : vector<1x1x1x8xf32> to vector<2x16x16x8xf32>
    %151 = arith.mulf %105, %150 : vector<2x16x16x8xf32>
    %152 = vector.extract_strided_slice %102 {offsets = [7, 0], sizes = [1, 8], strides = [1, 1]} : vector<9x8xf32> to vector<1x8xf32>
    %153 = vector.shape_cast %152 : vector<1x8xf32> to vector<8xf32>
    %154 = vector.shape_cast %153 : vector<8xf32> to vector<1x1x1x8xf32>
    %155 = vector.broadcast %154 : vector<1x1x1x8xf32> to vector<2x16x16x8xf32>
    %156 = arith.mulf %101, %155 : vector<2x16x16x8xf32>
    %157 = arith.addf %151, %156 : vector<2x16x16x8xf32>
    %158 = vector.extract_strided_slice %102 {offsets = [8, 0], sizes = [1, 8], strides = [1, 1]} : vector<9x8xf32> to vector<1x8xf32>
    %159 = vector.shape_cast %158 : vector<1x8xf32> to vector<8xf32>
    %160 = vector.shape_cast %159 : vector<8xf32> to vector<1x1x1x8xf32>
    %161 = vector.broadcast %160 : vector<1x1x1x8xf32> to vector<2x16x16x8xf32>
    %162 = arith.mulf %108, %161 : vector<2x16x16x8xf32>
    %163 = arith.addf %157, %162 : vector<2x16x16x8xf32>
    %cst_28 = arith.constant 0.000000e+00 : f32
    %164 = vector.broadcast %cst_28 : f32 to vector<2x1x16x8xf32>
    %165 = vector.extract_strided_slice %163 {offsets = [0, 1, 0, 0], sizes = [2, 15, 16, 8], strides = [1, 1, 1, 1]} : vector<2x16x16x8xf32> to vector<2x15x16x8xf32>
    %166 = tpu.concatenate %165, %164 in 1 : vector<2x15x16x8xf32>, vector<2x1x16x8xf32> -> vector<2x16x16x8xf32>
    %167 = arith.addf %146, %166 : vector<2x16x16x8xf32>
    %168 = vector.shape_cast %167 : vector<2x16x16x8xf32> to vector<512x8xf32>
    %169 = arith.truncf %168 : vector<512x8xf32> to vector<512x8xbf16>
    %c0_29 = arith.constant 0 : index
    %c0_30 = arith.constant 0 : index
    %170 = vector.load %arg7[%c0_29, %c0_30] : memref<8x8xf32, #tpu.memory_space<vmem>>, vector<8x8xf32>
    %171 = arith.truncf %170 : vector<8x8xf32> to vector<8x8xbf16>
    %cst_31 = arith.constant dense<0.000000e+00> : vector<512x8xf32>
    %172 = tpu.matmul %169, %171, %cst_31 {dimension_numbers = #tpu.dot_dimension_numbers<[1], [0], [0], [1], [0, 0, 1, 1], [], []>} : vector<512x8xbf16>, vector<8x8xbf16>, vector<512x8xf32> -> vector<512x8xf32>
    %c0_32 = arith.constant 0 : index
    %c0_33 = arith.constant 0 : index
    %173 = vector.load %arg8[%c0_32, %c0_33] : memref<1x8xf32, #tpu.memory_space<vmem>>, vector<1x8xf32>
    %c0_34 = arith.constant 0 : index
    %c0_35 = arith.constant 0 : index
    %174 = vector.load %arg9[%c0_34, %c0_35] : memref<1x8xf32, #tpu.memory_space<vmem>>, vector<1x8xf32>
    %cst_36 = arith.constant dense<0.000000e+00> : vector<8xf32>
    %175 = vector.multi_reduction <add>, %172, %cst_36 [0] : vector<512x8xf32> to vector<8xf32>
    %176 = vector.shape_cast %175 : vector<8xf32> to vector<1x8xf32>
    %177 = arith.mulf %172, %172 : vector<512x8xf32>
    %cst_37 = arith.constant dense<0.000000e+00> : vector<8xf32>
    %178 = vector.multi_reduction <add>, %177, %cst_37 [0] : vector<512x8xf32> to vector<8xf32>
    %179 = vector.shape_cast %178 : vector<8xf32> to vector<1x8xf32>
    %cst_38 = arith.constant 0.001953125 : f32
    %180 = vector.broadcast %cst_38 : f32 to vector<1x8xf32>
    %181 = arith.mulf %176, %180 : vector<1x8xf32>
    %cst_39 = arith.constant 0.001953125 : f32
    %182 = vector.broadcast %cst_39 : f32 to vector<1x8xf32>
    %183 = arith.mulf %179, %182 : vector<1x8xf32>
    %184 = arith.mulf %181, %181 : vector<1x8xf32>
    %185 = arith.subf %183, %184 : vector<1x8xf32>
    %cst_40 = arith.constant 0.000000e+00 : f32
    %186 = vector.broadcast %cst_40 : f32 to vector<1x8xf32>
    %187 = arith.maximumf %185, %186 : vector<1x8xf32>
    %cst_41 = arith.constant 9.99999974E-6 : f32
    %188 = vector.broadcast %cst_41 : f32 to vector<1x8xf32>
    %189 = arith.addf %187, %188 : vector<1x8xf32>
    %190 = math.rsqrt %189 : vector<1x8xf32>
    %191 = arith.mulf %190, %173 : vector<1x8xf32>
    %192 = arith.mulf %181, %191 : vector<1x8xf32>
    %193 = arith.subf %174, %192 : vector<1x8xf32>
    %194 = vector.broadcast %191 : vector<1x8xf32> to vector<512x8xf32>
    %195 = arith.mulf %172, %194 : vector<512x8xf32>
    %196 = vector.broadcast %193 : vector<1x8xf32> to vector<512x8xf32>
    %197 = arith.addf %195, %196 : vector<512x8xf32>
    %198 = vector.shape_cast %197 : vector<512x8xf32> to vector<2x16x16x8xf32>
    %cst_42 = arith.constant -3.40282347E+38 : f32
    %199 = vector.broadcast %cst_42 : f32 to vector<2x16x1x8xf32>
    %200 = vector.extract_strided_slice %198 {offsets = [0, 0, 0, 0], sizes = [2, 16, 15, 8], strides = [1, 1, 1, 1]} : vector<2x16x16x8xf32> to vector<2x16x15x8xf32>
    %201 = tpu.concatenate %199, %200 in 2 : vector<2x16x1x8xf32>, vector<2x16x15x8xf32> -> vector<2x16x16x8xf32>
    %202 = arith.maximumf %201, %198 : vector<2x16x16x8xf32>
    %cst_43 = arith.constant -3.40282347E+38 : f32
    %203 = vector.broadcast %cst_43 : f32 to vector<2x16x1x8xf32>
    %204 = vector.extract_strided_slice %198 {offsets = [0, 0, 1, 0], sizes = [2, 16, 15, 8], strides = [1, 1, 1, 1]} : vector<2x16x16x8xf32> to vector<2x16x15x8xf32>
    %205 = tpu.concatenate %204, %203 in 2 : vector<2x16x15x8xf32>, vector<2x16x1x8xf32> -> vector<2x16x16x8xf32>
    %206 = arith.maximumf %202, %205 : vector<2x16x16x8xf32>
    %207 = vector.shape_cast %206 : vector<2x16x16x8xf32> to vector<2x8x2x16x8xf32>
    %208 = vector.extract_strided_slice %207 {offsets = [0, 0, 0, 0, 0], sizes = [2, 8, 1, 16, 8], strides = [1, 1, 1, 1, 1]} : vector<2x8x2x16x8xf32> to vector<2x8x1x16x8xf32>
    %209 = vector.shape_cast %208 : vector<2x8x1x16x8xf32> to vector<2x8x16x8xf32>
    %210 = vector.extract_strided_slice %207 {offsets = [0, 0, 1, 0, 0], sizes = [2, 8, 1, 16, 8], strides = [1, 1, 1, 1, 1]} : vector<2x8x2x16x8xf32> to vector<2x8x1x16x8xf32>
    %211 = vector.shape_cast %210 : vector<2x8x1x16x8xf32> to vector<2x8x16x8xf32>
    %212 = arith.maximumf %209, %211 : vector<2x8x16x8xf32>
    %213 = vector.extract_strided_slice %207 {offsets = [0, 0, 1, 0, 0], sizes = [2, 8, 1, 16, 8], strides = [1, 1, 1, 1, 1]} : vector<2x8x2x16x8xf32> to vector<2x8x1x16x8xf32>
    %214 = vector.shape_cast %213 : vector<2x8x1x16x8xf32> to vector<2x8x16x8xf32>
    %cst_44 = arith.constant -3.40282347E+38 : f32
    %215 = vector.broadcast %cst_44 : f32 to vector<2x1x16x8xf32>
    %216 = vector.extract_strided_slice %214 {offsets = [0, 0, 0, 0], sizes = [2, 7, 16, 8], strides = [1, 1, 1, 1]} : vector<2x8x16x8xf32> to vector<2x7x16x8xf32>
    %217 = tpu.concatenate %215, %216 in 1 : vector<2x1x16x8xf32>, vector<2x7x16x8xf32> -> vector<2x8x16x8xf32>
    %218 = arith.maximumf %212, %217 : vector<2x8x16x8xf32>
    %c0_45 = arith.constant 0 : index
    %c0_46 = arith.constant 0 : index
    %c0_47 = arith.constant 0 : index
    %c0_48 = arith.constant 0 : index
    %219 = vector.load %arg14[%c0_45, %c0_46, %c0_47, %c0_48] : memref<2x8x16x8xf32, #tpu.memory_space<vmem>>, vector<2x8x16x8xf32>
    tpu.vector_store %arg14[%c0_45, %c0_46, %c0_47, %c0_48], %218 {strides = array<i32>} : memref<2x8x16x8xf32, #tpu.memory_space<vmem>>, vector<2x8x16x8xf32>,
    %c0_49 = arith.constant 0 : index
    %c0_50 = arith.constant 0 : index
    %c0_51 = arith.constant 0 : index
    %c0_52 = arith.constant 0 : index
    %220 = tpu.strided_load %arg14[%c0_49, %c0_50, %c0_51, %c0_52] {strides = array<i32: 1, 1, 2, 1>} : memref<2x8x16x8xf32, #tpu.memory_space<vmem>>, vector<2x8x8x8xf32>
    %221 = vector.shape_cast %0 : vector<2x16x16x4xf32> to vector<2x8x2x16x4xf32>
    %222 = vector.extract_strided_slice %221 {offsets = [0, 0, 0, 0, 0], sizes = [2, 8, 1, 16, 4], strides = [1, 1, 1, 1, 1]} : vector<2x8x2x16x4xf32> to vector<2x8x1x16x4xf32>
    %223 = vector.shape_cast %222 : vector<2x8x1x16x4xf32> to vector<2x8x16x4xf32>
    %c0_53 = arith.constant 0 : index
    %c0_54 = arith.constant 0 : index
    %c0_55 = arith.constant 0 : index
    %c0_56 = arith.constant 0 : index
    %224 = vector.load %arg15[%c0_53, %c0_54, %c0_55, %c0_56] : memref<2x8x16x4xf32, #tpu.memory_space<vmem>>, vector<2x8x16x4xf32>
    tpu.vector_store %arg15[%c0_53, %c0_54, %c0_55, %c0_56], %223 {strides = array<i32>} : memref<2x8x16x4xf32, #tpu.memory_space<vmem>>, vector<2x8x16x4xf32>,
    %c0_57 = arith.constant 0 : index
    %c0_58 = arith.constant 0 : index
    %c0_59 = arith.constant 0 : index
    %c0_60 = arith.constant 0 : index
    %225 = tpu.strided_load %arg15[%c0_57, %c0_58, %c0_59, %c0_60] {strides = array<i32: 1, 1, 2, 1>} : memref<2x8x16x4xf32, #tpu.memory_space<vmem>>, vector<2x8x8x4xf32>
    %226 = vector.shape_cast %225 : vector<2x8x8x4xf32> to vector<128x4xf32>
    %227 = arith.truncf %226 : vector<128x4xf32> to vector<128x4xbf16>
    %c0_61 = arith.constant 0 : index
    %c0_62 = arith.constant 0 : index
    %228 = vector.load %arg10[%c0_61, %c0_62] : memref<4x8xf32, #tpu.memory_space<vmem>>, vector<4x8xf32>
    %229 = arith.truncf %228 : vector<4x8xf32> to vector<4x8xbf16>
    %cst_63 = arith.constant dense<0.000000e+00> : vector<128x8xf32>
    %230 = tpu.matmul %227, %229, %cst_63 {dimension_numbers = #tpu.dot_dimension_numbers<[1], [0], [0], [1], [0, 0, 1, 1], [], []>} : vector<128x4xbf16>, vector<4x8xbf16>, vector<128x8xf32> -> vector<128x8xf32>
    %c0_64 = arith.constant 0 : index
    %c0_65 = arith.constant 0 : index
    %231 = vector.load %arg11[%c0_64, %c0_65] : memref<1x8xf32, #tpu.memory_space<vmem>>, vector<1x8xf32>
    %c0_66 = arith.constant 0 : index
    %c0_67 = arith.constant 0 : index
    %232 = vector.load %arg12[%c0_66, %c0_67] : memref<1x8xf32, #tpu.memory_space<vmem>>, vector<1x8xf32>
    %cst_68 = arith.constant dense<0.000000e+00> : vector<8xf32>
    %233 = vector.multi_reduction <add>, %230, %cst_68 [0] : vector<128x8xf32> to vector<8xf32>
    %234 = vector.shape_cast %233 : vector<8xf32> to vector<1x8xf32>
    %235 = arith.mulf %230, %230 : vector<128x8xf32>
    %cst_69 = arith.constant dense<0.000000e+00> : vector<8xf32>
    %236 = vector.multi_reduction <add>, %235, %cst_69 [0] : vector<128x8xf32> to vector<8xf32>
    %237 = vector.shape_cast %236 : vector<8xf32> to vector<1x8xf32>
    %cst_70 = arith.constant 7.812500e-03 : f32
    %238 = vector.broadcast %cst_70 : f32 to vector<1x8xf32>
    %239 = arith.mulf %234, %238 : vector<1x8xf32>
    %cst_71 = arith.constant 7.812500e-03 : f32
    %240 = vector.broadcast %cst_71 : f32 to vector<1x8xf32>
    %241 = arith.mulf %237, %240 : vector<1x8xf32>
    %242 = arith.mulf %239, %239 : vector<1x8xf32>
    %243 = arith.subf %241, %242 : vector<1x8xf32>
    %cst_72 = arith.constant 0.000000e+00 : f32
    %244 = vector.broadcast %cst_72 : f32 to vector<1x8xf32>
    %245 = arith.maximumf %243, %244 : vector<1x8xf32>
    %cst_73 = arith.constant 9.99999974E-6 : f32
    %246 = vector.broadcast %cst_73 : f32 to vector<1x8xf32>
    %247 = arith.addf %245, %246 : vector<1x8xf32>
    %248 = math.rsqrt %247 : vector<1x8xf32>
    %249 = arith.mulf %248, %231 : vector<1x8xf32>
    %250 = arith.mulf %239, %249 : vector<1x8xf32>
    %251 = arith.subf %232, %250 : vector<1x8xf32>
    %252 = vector.broadcast %249 : vector<1x8xf32> to vector<128x8xf32>
    %253 = arith.mulf %230, %252 : vector<128x8xf32>
    %254 = vector.broadcast %251 : vector<1x8xf32> to vector<128x8xf32>
    %255 = arith.addf %253, %254 : vector<128x8xf32>
    %256 = vector.shape_cast %255 : vector<128x8xf32> to vector<2x8x8x8xf32>
    %257 = arith.addf %220, %256 : vector<2x8x8x8xf32>
    %c0_74 = arith.constant 0 : index
    %c0_75 = arith.constant 0 : index
    %c0_76 = arith.constant 0 : index
    %c0_77 = arith.constant 0 : index
    %258 = vector.load %arg13[%c0_74, %c0_75, %c0_76, %c0_77] : memref<2x8x8x8xf32, #tpu.memory_space<vmem>>, vector<2x8x8x8xf32>
    tpu.vector_store %arg13[%c0_74, %c0_75, %c0_76, %c0_77], %257 {strides = array<i32>} : memref<2x8x8x8xf32, #tpu.memory_space<vmem>>, vector<2x8x8x8xf32>,
    return
  }
  func.func @transform_0(%arg0: i32) -> (i32, i32, i32, i32) {
    %c0_i32 = arith.constant 0 : i32
    %c0_i32_0 = arith.constant 0 : i32
    %c0_i32_1 = arith.constant 0 : i32
    %c0_i32_2 = arith.constant 0 : i32
    %c0_i32_3 = arith.constant 0 : i32
    return %c0_i32, %c0_i32_0, %c0_i32_1, %c0_i32_2 : i32, i32, i32, i32
  }
  func.func @transform_1(%arg0: i32) -> (i32, i32) {
    %c0_i32 = arith.constant 0 : i32
    %c0_i32_0 = arith.constant 0 : i32
    %c0_i32_1 = arith.constant 0 : i32
    return %c0_i32, %c0_i32_0 : i32, i32
  }
  func.func @transform_2(%arg0: i32) -> (i32, i32) {
    %c0_i32 = arith.constant 0 : i32
    %c0_i32_0 = arith.constant 0 : i32
    %c0_i32_1 = arith.constant 0 : i32
    return %c0_i32, %c0_i32_0 : i32, i32
  }
  func.func @transform_3(%arg0: i32) -> (i32, i32) {
    %c0_i32 = arith.constant 0 : i32
    %c0_i32_0 = arith.constant 0 : i32
    %c0_i32_1 = arith.constant 0 : i32
    return %c0_i32, %c0_i32_0 : i32, i32
  }
  func.func @transform_4(%arg0: i32) -> (i32, i32) {
    %c0_i32 = arith.constant 0 : i32
    %c0_i32_0 = arith.constant 0 : i32
    %c0_i32_1 = arith.constant 0 : i32
    return %c0_i32, %c0_i32_0 : i32, i32
  }
  func.func @transform_5(%arg0: i32) -> (i32, i32) {
    %c0_i32 = arith.constant 0 : i32
    %c0_i32_0 = arith.constant 0 : i32
    %c0_i32_1 = arith.constant 0 : i32
    return %c0_i32, %c0_i32_0 : i32, i32
  }
  func.func @transform_6(%arg0: i32) -> (i32, i32) {
    %c0_i32 = arith.constant 0 : i32
    %c0_i32_0 = arith.constant 0 : i32
    %c0_i32_1 = arith.constant 0 : i32
    return %c0_i32, %c0_i32_0 : i32, i32
  }
  func.func @transform_7(%arg0: i32) -> (i32, i32) {
    %c0_i32 = arith.constant 0 : i32
    %c0_i32_0 = arith.constant 0 : i32
    %c0_i32_1 = arith.constant 0 : i32
    return %c0_i32, %c0_i32_0 : i32, i32
  }
  func.func @transform_8(%arg0: i32) -> (i32, i32) {
    %c0_i32 = arith.constant 0 : i32
    %c0_i32_0 = arith.constant 0 : i32
    %c0_i32_1 = arith.constant 0 : i32
    return %c0_i32, %c0_i32_0 : i32, i32
  }
  func.func @transform_9(%arg0: i32) -> (i32, i32) {
    %c0_i32 = arith.constant 0 : i32
    %c0_i32_0 = arith.constant 0 : i32
    %c0_i32_1 = arith.constant 0 : i32
    return %c0_i32, %c0_i32_0 : i32, i32
  }
  func.func @transform_10(%arg0: i32) -> (i32, i32) {
    %c0_i32 = arith.constant 0 : i32
    %c0_i32_0 = arith.constant 0 : i32
    %c0_i32_1 = arith.constant 0 : i32
    return %c0_i32, %c0_i32_0 : i32, i32
  }
  func.func @transform_11(%arg0: i32) -> (i32, i32) {
    %c0_i32 = arith.constant 0 : i32
    %c0_i32_0 = arith.constant 0 : i32
    %c0_i32_1 = arith.constant 0 : i32
    return %c0_i32, %c0_i32_0 : i32, i32
  }
  func.func @transform_12(%arg0: i32) -> (i32, i32, i32, i32) {
    %c0_i32 = arith.constant 0 : i32
    %c0_i32_0 = arith.constant 0 : i32
    %c0_i32_1 = arith.constant 0 : i32
    %c0_i32_2 = arith.constant 0 : i32
    %c0_i32_3 = arith.constant 0 : i32
    return %c0_i32, %c0_i32_0, %c0_i32_1, %c0_i32_2 : i32, i32, i32, i32
  }
}

</mosaic_0001>

<llo_original>
// kernel: tpu_custom_call.1
$region0: #{tpu_custom_call.1}
  #allocation0 [shape = 'u32[]', space=smem, size = 0x4, offset = 0x4, fixed_abs, tag = 'smem constant byte address 0x4 - core index']
  #allocation1 [shape = 'u32[144,128]{1,0:T(1,128)}', space=vmem, size = 0x12000, scoped, tag = 'internal scratch']
  #allocation2 [shape = 'f32[2,8,16,8]{3,2,1,0:T(8,128)}', space=vmem, size = 0x20000, scoped, tag = 'scratch operand']
  #allocation3 [shape = 'f32[2,8,16,4]{3,2,1,0:T(8,128)}', space=vmem, size = 0x20000, scoped, tag = 'scratch operand']
  %s0 = inlined_call_operand.vmem [shape: f32[2,16,16,4], index: 0, kind: input, shape index: {}]
  %s1 = inlined_call_operand.vmem [shape: f32[9,4], index: 1, kind: input, shape index: {}]
  %s2 = inlined_call_operand.vmem [shape: f32[4,8], index: 2, kind: input, shape index: {}]
  %s3 = inlined_call_operand.vmem [shape: f32[1,8], index: 3, kind: input, shape index: {}]
  %s4 = inlined_call_operand.vmem [shape: f32[1,8], index: 4, kind: input, shape index: {}]
  %s5 = inlined_call_operand.vmem [shape: f32[9,8], index: 5, kind: input, shape index: {}]
  %s6 = inlined_call_operand.vmem [shape: f32[8,8], index: 6, kind: input, shape index: {}]
  %s7 = inlined_call_operand.vmem [shape: f32[1,8], index: 7, kind: input, shape index: {}]
  %s8 = inlined_call_operand.vmem [shape: f32[1,8], index: 8, kind: input, shape index: {}]
  %s9 = inlined_call_operand.vmem [shape: f32[4,8], index: 9, kind: input, shape index: {}]
  %s10 = inlined_call_operand.vmem [shape: f32[1,8], index: 10, kind: input, shape index: {}]
  %s11 = inlined_call_operand.vmem [shape: f32[1,8], index: 11, kind: input, shape index: {}]
  %s12 = inlined_call_operand.hbm [shape: f32[2,8,8,8], index: 12, kind: output, shape index: {}]
  %s13 = sld [smem:[#allocation0]]
  $region58: #{tpu_custom_call.1} parent=0
    _
  %s15 = ssub.s32 1, %s13
  %s16 = scalar_select 0, %s15, %s13
  $region1: #{tpu_custom_call.1} parent=0
    #allocation4 [shape = 'u8[65536]{0}', space=vmem, size = 0x10000, scoped, tag = 'output window, operand 0, single buffered']
    #allocation5 [shape = 's32[1]{0}', space=sflag, size = 0x4, scoped, tag = 'scoped memory for tpu_custom_call.1']
    %17 = vsyncpa [#allocation5], 0
    // Predicated region
    $region2: #{tpu_custom_call.1} parent=1 // pred_check
      _
    $region3: #{tpu_custom_call.1} parent=1 // pred_check_branch
      %19 = sbr.rel (0) target = $region5
    $region4: #{tpu_custom_call.1} parent=1 // pred_region
      _
    $region5: #{tpu_custom_call.1} parent=1 // pred_fallthru
      _
    // Predicated region
    $region6: #{tpu_custom_call.1} parent=1 // pred_check
      _
    $region7: #{tpu_custom_call.1} parent=1 // pred_check_branch
      %21 = sbr.rel (0) target = $region9
    $region8: #{tpu_custom_call.1} parent=1 // pred_region
      _
    $region9: #{tpu_custom_call.1} parent=1 // pred_fallthru
      _
    // Predicated region
    $region10: #{tpu_custom_call.1} parent=1 // pred_check
      _
    $region11: #{tpu_custom_call.1} parent=1 // pred_check_branch
      %23 = sbr.rel (0) target = $region13
    $region12: #{tpu_custom_call.1} parent=1 // pred_region
      _
    $region13: #{tpu_custom_call.1} parent=1 // pred_fallthru
      _
    // Predicated region
    $region14: #{tpu_custom_call.1} parent=1 // pred_check
      _
    $region15: #{tpu_custom_call.1} parent=1 // pred_check_branch
      %25 = sbr.rel (0) target = $region17
    $region16: #{tpu_custom_call.1} parent=1 // pred_region
      _
    $region17: #{tpu_custom_call.1} parent=1 // pred_fallthru
      _
    // Predicated region
    $region18: #{tpu_custom_call.1} parent=1 // pred_check
      _
    $region19: #{tpu_custom_call.1} parent=1 // pred_check_branch
      %27 = sbr.rel (0) target = $region21
    $region20: #{tpu_custom_call.1} parent=1 // pred_region
      _
    $region21: #{tpu_custom_call.1} parent=1 // pred_fallthru
      _
    // Predicated region
    $region22: #{tpu_custom_call.1} parent=1 // pred_check
      _
    $region23: #{tpu_custom_call.1} parent=1 // pred_check_branch
      %29 = sbr.rel (0) target = $region25
    $region24: #{tpu_custom_call.1} parent=1 // pred_region
      _
    $region25: #{tpu_custom_call.1} parent=1 // pred_fallthru
      _
    // Predicated region
    $region26: #{tpu_custom_call.1} parent=1 // pred_check
      _
    $region27: #{tpu_custom_call.1} parent=1 // pred_check_branch
      %31 = sbr.rel (0) target = $region29
    $region28: #{tpu_custom_call.1} parent=1 // pred_region
      _
    $region29: #{tpu_custom_call.1} parent=1 // pred_fallthru
      _
    // Predicated region
    $region30: #{tpu_custom_call.1} parent=1 // pred_check
      _
    $region31: #{tpu_custom_call.1} parent=1 // pred_check_branch
      %33 = sbr.rel (0) target = $region33
    $region32: #{tpu_custom_call.1} parent=1 // pred_region
      _
    $region33: #{tpu_custom_call.1} parent=1 // pred_fallthru
      _
    // Predicated region
    $region34: #{tpu_custom_call.1} parent=1 // pred_check
      _
    $region35: #{tpu_custom_call.1} parent=1 // pred_check_branch
      %35 = sbr.rel (0) target = $region37
    $region36: #{tpu_custom_call.1} parent=1 // pred_region
      _
    $region37: #{tpu_custom_call.1} parent=1 // pred_fallthru
      _
    // Predicated region
    $region38: #{tpu_custom_call.1} parent=1 // pred_check
      _
    $region39: #{tpu_custom_call.1} parent=1 // pred_check_branch
      %37 = sbr.rel (0) target = $region41
    $region40: #{tpu_custom_call.1} parent=1 // pred_region
      _
    $region41: #{tpu_custom_call.1} parent=1 // pred_fallthru
      _
    // Predicated region
    $region42: #{tpu_custom_call.1} parent=1 // pred_check
      _
    $region43: #{tpu_custom_call.1} parent=1 // pred_check_branch
      %39 = sbr.rel (0) target = $region45
    $region44: #{tpu_custom_call.1} parent=1 // pred_region
      _
    $region45: #{tpu_custom_call.1} parent=1 // pred_fallthru
      _
    // Predicated region
    $region46: #{tpu_custom_call.1} parent=1 // pred_check
      _
    $region47: #{tpu_custom_call.1} parent=1 // pred_check_branch
      %41 = sbr.rel (0) target = $region49
    $region48: #{tpu_custom_call.1} parent=1 // pred_region
      _
    $region49: #{tpu_custom_call.1} parent=1 // pred_fallthru
      _
    %v43 = vld [vmem:[%s0] sm:$0xff]
    %v44 = vld [vmem:[%s0 + $0x8] sm:$0xff]
    %v45 = vld [vmem:[%s0 + $0x10] sm:$0xff]
    %v46 = vld [vmem:[%s0 + $0x18] sm:$0xff]
    %v47 = vld [vmem:[%s0 + $0x20] sm:$0xff]
    %v48 = vld [vmem:[%s0 + $0x28] sm:$0xff]
    %v49 = vld [vmem:[%s0 + $0x30] sm:$0xff]
    %v50 = vld [vmem:[%s0 + $0x38] sm:$0xff]
    %v51 = vld [vmem:[%s0 + $0x40] sm:$0xff]
    %v52 = vld [vmem:[%s0 + $0x48] sm:$0xff]
    %v53 = vld [vmem:[%s0 + $0x50] sm:$0xff]
    %v54 = vld [vmem:[%s0 + $0x58] sm:$0xff]
    %v55 = vld [vmem:[%s0 + $0x60] sm:$0xff]
    %v56 = vld [vmem:[%s0 + $0x68] sm:$0xff]
    %v57 = vld [vmem:[%s0 + $0x70] sm:$0xff]
    %v58 = vld [vmem:[%s0 + $0x78] sm:$0xff]
    %v59 = vld [vmem:[%s0 + $0x80] sm:$0xff]
    %v60 = vld [vmem:[%s0 + $0x88] sm:$0xff]
    %v61 = vld [vmem:[%s0 + $0x90] sm:$0xff]
    %v62 = vld [vmem:[%s0 + $0x98] sm:$0xff]
    %v63 = vld [vmem:[%s0 + $0xa0] sm:$0xff]
    %v64 = vld [vmem:[%s0 + $0xa8] sm:$0xff]
    %v65 = vld [vmem:[%s0 + $0xb0] sm:$0xff]
    %v66 = vld [vmem:[%s0 + $0xb8] sm:$0xff]
    %v67 = vld [vmem:[%s0 + $0xc0] sm:$0xff]
    %v68 = vld [vmem:[%s0 + $0xc8] sm:$0xff]
    %v69 = vld [vmem:[%s0 + $0xd0] sm:$0xff]
    %v70 = vld [vmem:[%s0 + $0xd8] sm:$0xff]
    %v71 = vld [vmem:[%s0 + $0xe0] sm:$0xff]
    %v72 = vld [vmem:[%s0 + $0xe8] sm:$0xff]
    %v73 = vld [vmem:[%s0 + $0xf0] sm:$0xff]
    %v74 = vld [vmem:[%s0 + $0xf8] sm:$0xff]
    %v75 = vld [vmem:[%s0 + $0x100] sm:$0xff]
    %v76 = vld [vmem:[%s0 + $0x108] sm:$0xff]
    %v77 = vld [vmem:[%s0 + $0x110] sm:$0xff]
    %v78 = vld [vmem:[%s0 + $0x118] sm:$0xff]
    %v79 = vld [vmem:[%s0 + $0x120] sm:$0xff]
    %v80 = vld [vmem:[%s0 + $0x128] sm:$0xff]
    %v81 = vld [vmem:[%s0 + $0x130] sm:$0xff]
    %v82 = vld [vmem:[%s0 + $0x138] sm:$0xff]
    %v83 = vld [vmem:[%s0 + $0x140] sm:$0xff]
    %v84 = vld [vmem:[%s0 + $0x148] sm:$0xff]
    %v85 = vld [vmem:[%s0 + $0x150] sm:$0xff]
    %v86 = vld [vmem:[%s0 + $0x158] sm:$0xff]
    %v87 = vld [vmem:[%s0 + $0x160] sm:$0xff]
    %v88 = vld [vmem:[%s0 + $0x168] sm:$0xff]
    %v89 = vld [vmem:[%s0 + $0x170] sm:$0xff]
    %v90 = vld [vmem:[%s0 + $0x178] sm:$0xff]
    %v91 = vld [vmem:[%s0 + $0x180] sm:$0xff]
    %v92 = vld [vmem:[%s0 + $0x188] sm:$0xff]
    %v93 = vld [vmem:[%s0 + $0x190] sm:$0xff]
    %v94 = vld [vmem:[%s0 + $0x198] sm:$0xff]
    %v95 = vld [vmem:[%s0 + $0x1a0] sm:$0xff]
    %v96 = vld [vmem:[%s0 + $0x1a8] sm:$0xff]
    %v97 = vld [vmem:[%s0 + $0x1b0] sm:$0xff]
    %v98 = vld [vmem:[%s0 + $0x1b8] sm:$0xff]
    %v99 = vld [vmem:[%s0 + $0x1c0] sm:$0xff]
    %v100 = vld [vmem:[%s0 + $0x1c8] sm:$0xff]
    %v101 = vld [vmem:[%s0 + $0x1d0] sm:$0xff]
    %v102 = vld [vmem:[%s0 + $0x1d8] sm:$0xff]
    %v103 = vld [vmem:[%s0 + $0x1e0] sm:$0xff]
    %v104 = vld [vmem:[%s0 + $0x1e8] sm:$0xff]
    %v105 = vld [vmem:[%s0 + $0x1f0] sm:$0xff]
    %v106 = vld [vmem:[%s0 + $0x1f8] sm:$0xff]
    %v107 = vmax.f32 %v43, 0.0
    %v108 = vmax.f32 %v44, 0.0
    %v109 = vmax.f32 %v45, 0.0
    %v110 = vmax.f32 %v46, 0.0
    %v111 = vmax.f32 %v47, 0.0
    %v112 = vmax.f32 %v48, 0.0
    %v113 = vmax.f32 %v49, 0.0
    %v114 = vmax.f32 %v50, 0.0
    %v115 = vmax.f32 %v51, 0.0
    %v116 = vmax.f32 %v52, 0.0
    %v117 = vmax.f32 %v53, 0.0
    %v118 = vmax.f32 %v54, 0.0
    %v119 = vmax.f32 %v55, 0.0
    %v120 = vmax.f32 %v56, 0.0
    %v121 = vmax.f32 %v57, 0.0
    %v122 = vmax.f32 %v58, 0.0
    %v123 = vmax.f32 %v59, 0.0
    %v124 = vmax.f32 %v60, 0.0
    %v125 = vmax.f32 %v61, 0.0
    %v126 = vmax.f32 %v62, 0.0
    %v127 = vmax.f32 %v63, 0.0
    %v128 = vmax.f32 %v64, 0.0
    %v129 = vmax.f32 %v65, 0.0
    %v130 = vmax.f32 %v66, 0.0
    %v131 = vmax.f32 %v67, 0.0
    %v132 = vmax.f32 %v68, 0.0
    %v133 = vmax.f32 %v69, 0.0
    %v134 = vmax.f32 %v70, 0.0
    %v135 = vmax.f32 %v71, 0.0
    %v136 = vmax.f32 %v72, 0.0
    %v137 = vmax.f32 %v73, 0.0
    %v138 = vmax.f32 %v74, 0.0
    %v139 = vmax.f32 %v75, 0.0
    %v140 = vmax.f32 %v76, 0.0
    %v141 = vmax.f32 %v77, 0.0
    %v142 = vmax.f32 %v78, 0.0
    %v143 = vmax.f32 %v79, 0.0
    %v144 = vmax.f32 %v80, 0.0
    %v145 = vmax.f32 %v81, 0.0
    %v146 = vmax.f32 %v82, 0.0
    %v147 = vmax.f32 %v83, 0.0
    %v148 = vmax.f32 %v84, 0.0
    %v149 = vmax.f32 %v85, 0.0
    %v150 = vmax.f32 %v86, 0.0
    %v151 = vmax.f32 %v87, 0.0
    %v152 = vmax.f32 %v88, 0.0
    %v153 = vmax.f32 %v89, 0.0
    %v154 = vmax.f32 %v90, 0.0
    %v155 = vmax.f32 %v91, 0.0
    %v156 = vmax.f32 %v92, 0.0
    %v157 = vmax.f32 %v93, 0.0
    %v158 = vmax.f32 %v94, 0.0
    %v159 = vmax.f32 %v95, 0.0
    %v160 = vmax.f32 %v96, 0.0
    %v161 = vmax.f32 %v97, 0.0
    %v162 = vmax.f32 %v98, 0.0
    %v163 = vmax.f32 %v99, 0.0
    %v164 = vmax.f32 %v100, 0.0
    %v165 = vmax.f32 %v101, 0.0
    %v166 = vmax.f32 %v102, 0.0
    %v167 = vmax.f32 %v103, 0.0
    %v168 = vmax.f32 %v104, 0.0
    %v169 = vmax.f32 %v105, 0.0
    %v170 = vmax.f32 %v106, 0.0
    %v171 = vld [vmem:[%s1] sm:$0xff]
    %v172 = vld [vmem:[%s1 + $0x8] sm:$0x1]
    %vm237 = vcmask 1040384
    %v238 = vrot.slane %v107, 7
    %v239 = vrot.slane %v108, 7
    %v240 = vsel %vm237, %v238, %v239
    %v241 = vrot.slane %v109, 7
    %v242 = vrot.slane %v110, 7
    %v243 = vsel %vm237, %v241, %v242
    %v244 = vrot.slane %v111, 7
    %v245 = vrot.slane %v112, 7
    %v246 = vsel %vm237, %v244, %v245
    %v247 = vrot.slane %v113, 7
    %v248 = vrot.slane %v114, 7
    %v249 = vsel %vm237, %v247, %v248
    %v250 = vrot.slane %v115, 7
    %v251 = vrot.slane %v116, 7
    %v252 = vsel %vm237, %v250, %v251
    %v253 = vrot.slane %v117, 7
    %v254 = vrot.slane %v118, 7
    %v255 = vsel %vm237, %v253, %v254
    %v256 = vrot.slane %v119, 7
    %v257 = vrot.slane %v120, 7
    %v258 = vsel %vm237, %v256, %v257
    %v259 = vrot.slane %v121, 7
    %v260 = vrot.slane %v122, 7
    %v261 = vsel %vm237, %v259, %v260
    %v262 = vrot.slane %v123, 7
    %v263 = vrot.slane %v124, 7
    %v264 = vsel %vm237, %v262, %v263
    %v265 = vrot.slane %v125, 7
    %v266 = vrot.slane %v126, 7
    %v267 = vsel %vm237, %v265, %v266
    %v268 = vrot.slane %v127, 7
    %v269 = vrot.slane %v128, 7
    %v270 = vsel %vm237, %v268, %v269
    %v271 = vrot.slane %v129, 7
    %v272 = vrot.slane %v130, 7
    %v273 = vsel %vm237, %v271, %v272
    %v274 = vrot.slane %v131, 7
    %v275 = vrot.slane %v132, 7
    %v276 = vsel %vm237, %v274, %v275
    %v277 = vrot.slane %v133, 7
    %v278 = vrot.slane %v134, 7
    %v279 = vsel %vm237, %v277, %v278
    %v280 = vrot.slane %v135, 7
    %v281 = vrot.slane %v136, 7
    %v282 = vsel %vm237, %v280, %v281
    %v283 = vrot.slane %v137, 7
    %v284 = vrot.slane %v138, 7
    %v285 = vsel %vm237, %v283, %v284
    %v286 = vrot.slane %v139, 7
    %v287 = vrot.slane %v140, 7
    %v288 = vsel %vm237, %v286, %v287
    %v289 = vrot.slane %v141, 7
    %v290 = vrot.slane %v142, 7
    %v291 = vsel %vm237, %v289, %v290
    %v292 = vrot.slane %v143, 7
    %v293 = vrot.slane %v144, 7
    %v294 = vsel %vm237, %v292, %v293
    %v295 = vrot.slane %v145, 7
    %v296 = vrot.slane %v146, 7
    %v297 = vsel %vm237, %v295, %v296
    %v298 = vrot.slane %v147, 7
    %v299 = vrot.slane %v148, 7
    %v300 = vsel %vm237, %v298, %v299
    %v301 = vrot.slane %v149, 7
    %v302 = vrot.slane %v150, 7
    %v303 = vsel %vm237, %v301, %v302
    %v304 = vrot.slane %v151, 7
    %v305 = vrot.slane %v152, 7
    %v306 = vsel %vm237, %v304, %v305
    %v307 = vrot.slane %v153, 7
    %v308 = vrot.slane %v154, 7
    %v309 = vsel %vm237, %v307, %v308
    %v310 = vrot.slane %v155, 7
    %v311 = vrot.slane %v156, 7
    %v312 = vsel %vm237, %v310, %v311
    %v313 = vrot.slane %v157, 7
    %v314 = vrot.slane %v158, 7
    %v315 = vsel %vm237, %v313, %v314
    %v316 = vrot.slane %v159, 7
    %v317 = vrot.slane %v160, 7
    %v318 = vsel %vm237, %v316, %v317
    %v319 = vrot.slane %v161, 7
    %v320 = vrot.slane %v162, 7
    %v321 = vsel %vm237, %v319, %v320
    %v322 = vrot.slane %v163, 7
    %v323 = vrot.slane %v164, 7
    %v324 = vsel %vm237, %v322, %v323
    %v325 = vrot.slane %v165, 7
    %v326 = vrot.slane %v166, 7
    %v327 = vsel %vm237, %v325, %v326
    %v328 = vrot.slane %v167, 7
    %v329 = vrot.slane %v168, 7
    %v330 = vsel %vm237, %v328, %v329
    %v331 = vrot.slane %v169, 7
    %v332 = vrot.slane %v170, 7
    %v333 = vsel %vm237, %v331, %v332
    %v398 = vsel %vm237, 0.0, %v238
    %v399 = vsel %vm237, 0.0, %v241
    %v400 = vsel %vm237, 0.0, %v244
    %v401 = vsel %vm237, 0.0, %v247
    %v402 = vsel %vm237, 0.0, %v250
    %v403 = vsel %vm237, 0.0, %v253
    %v404 = vsel %vm237, 0.0, %v256
    %v405 = vsel %vm237, 0.0, %v259
    %v406 = vsel %vm237, 0.0, %v262
    %v407 = vsel %vm237, 0.0, %v265
    %v408 = vsel %vm237, 0.0, %v268
    %v409 = vsel %vm237, 0.0, %v271
    %v410 = vsel %vm237, 0.0, %v274
    %v411 = vsel %vm237, 0.0, %v277
    %v412 = vsel %vm237, 0.0, %v280
    %v413 = vsel %vm237, 0.0, %v283
    %v414 = vsel %vm237, 0.0, %v286
    %v415 = vsel %vm237, 0.0, %v289
    %v416 = vsel %vm237, 0.0, %v292
    %v417 = vsel %vm237, 0.0, %v295
    %v418 = vsel %vm237, 0.0, %v298
    %v419 = vsel %vm237, 0.0, %v301
    %v420 = vsel %vm237, 0.0, %v304
    %v421 = vsel %vm237, 0.0, %v307
    %v422 = vsel %vm237, 0.0, %v310
    %v423 = vsel %vm237, 0.0, %v313
    %v424 = vsel %vm237, 0.0, %v316
    %v425 = vsel %vm237, 0.0, %v319
    %v426 = vsel %vm237, 0.0, %v322
    %v427 = vsel %vm237, 0.0, %v325
    %v428 = vsel %vm237, 0.0, %v328
    %v429 = vsel %vm237, 0.0, %v331
    %vm430 = vcmask 1046528
    %v431 = vrot.slane %v107, 1
    %v432 = vrot.slane %v108, 1
    %v433 = vsel %vm430, %v431, %v432
    %v434 = vrot.slane %v109, 1
    %v435 = vrot.slane %v110, 1
    %v436 = vsel %vm430, %v434, %v435
    %v437 = vrot.slane %v111, 1
    %v438 = vrot.slane %v112, 1
    %v439 = vsel %vm430, %v437, %v438
    %v440 = vrot.slane %v113, 1
    %v441 = vrot.slane %v114, 1
    %v442 = vsel %vm430, %v440, %v441
    %v443 = vrot.slane %v115, 1
    %v444 = vrot.slane %v116, 1
    %v445 = vsel %vm430, %v443, %v444
    %v446 = vrot.slane %v117, 1
    %v447 = vrot.slane %v118, 1
    %v448 = vsel %vm430, %v446, %v447
    %v449 = vrot.slane %v119, 1
    %v450 = vrot.slane %v120, 1
    %v451 = vsel %vm430, %v449, %v450
    %v452 = vrot.slane %v121, 1
    %v453 = vrot.slane %v122, 1
    %v454 = vsel %vm430, %v452, %v453
    %v455 = vrot.slane %v123, 1
    %v456 = vrot.slane %v124, 1
    %v457 = vsel %vm430, %v455, %v456
    %v458 = vrot.slane %v125, 1
    %v459 = vrot.slane %v126, 1
    %v460 = vsel %vm430, %v458, %v459
    %v461 = vrot.slane %v127, 1
    %v462 = vrot.slane %v128, 1
    %v463 = vsel %vm430, %v461, %v462
    %v464 = vrot.slane %v129, 1
    %v465 = vrot.slane %v130, 1
    %v466 = vsel %vm430, %v464, %v465
    %v467 = vrot.slane %v131, 1
    %v468 = vrot.slane %v132, 1
    %v469 = vsel %vm430, %v467, %v468
    %v470 = vrot.slane %v133, 1
    %v471 = vrot.slane %v134, 1
    %v472 = vsel %vm430, %v470, %v471
    %v473 = vrot.slane %v135, 1
    %v474 = vrot.slane %v136, 1
    %v475 = vsel %vm430, %v473, %v474
    %v476 = vrot.slane %v137, 1
    %v477 = vrot.slane %v138, 1
    %v478 = vsel %vm430, %v476, %v477
    %v479 = vrot.slane %v139, 1
    %v480 = vrot.slane %v140, 1
    %v481 = vsel %vm430, %v479, %v480
    %v482 = vrot.slane %v141, 1
    %v483 = vrot.slane %v142, 1
    %v484 = vsel %vm430, %v482, %v483
    %v485 = vrot.slane %v143, 1
    %v486 = vrot.slane %v144, 1
    %v487 = vsel %vm430, %v485, %v486
    %v488 = vrot.slane %v145, 1
    %v489 = vrot.slane %v146, 1
    %v490 = vsel %vm430, %v488, %v489
    %v491 = vrot.slane %v147, 1
    %v492 = vrot.slane %v148, 1
    %v493 = vsel %vm430, %v491, %v492
    %v494 = vrot.slane %v149, 1
    %v495 = vrot.slane %v150, 1
    %v496 = vsel %vm430, %v494, %v495
    %v497 = vrot.slane %v151, 1
    %v498 = vrot.slane %v152, 1
    %v499 = vsel %vm430, %v497, %v498
    %v500 = vrot.slane %v153, 1
    %v501 = vrot.slane %v154, 1
    %v502 = vsel %vm430, %v500, %v501
    %v503 = vrot.slane %v155, 1
    %v504 = vrot.slane %v156, 1
    %v505 = vsel %vm430, %v503, %v504
    %v506 = vrot.slane %v157, 1
    %v507 = vrot.slane %v158, 1
    %v508 = vsel %vm430, %v506, %v507
    %v509 = vrot.slane %v159, 1
    %v510 = vrot.slane %v160, 1
    %v511 = vsel %vm430, %v509, %v510
    %v512 = vrot.slane %v161, 1
    %v513 = vrot.slane %v162, 1
    %v514 = vsel %vm430, %v512, %v513
    %v515 = vrot.slane %v163, 1
    %v516 = vrot.slane %v164, 1
    %v517 = vsel %vm430, %v515, %v516
    %v518 = vrot.slane %v165, 1
    %v519 = vrot.slane %v166, 1
    %v520 = vsel %vm430, %v518, %v519
    %v521 = vrot.slane %v167, 1
    %v522 = vrot.slane %v168, 1
    %v523 = vsel %vm430, %v521, %v522
    %v524 = vrot.slane %v169, 1
    %v525 = vrot.slane %v170, 1
    %v526 = vsel %vm430, %v524, %v525
    %v591 = vsel %vm430, %v432, 0.0
    %v592 = vsel %vm430, %v435, 0.0
    %v593 = vsel %vm430, %v438, 0.0
    %v594 = vsel %vm430, %v441, 0.0
    %v595 = vsel %vm430, %v444, 0.0
    %v596 = vsel %vm430, %v447, 0.0
    %v597 = vsel %vm430, %v450, 0.0
    %v598 = vsel %vm430, %v453, 0.0
    %v599 = vsel %vm430, %v456, 0.0
    %v600 = vsel %vm430, %v459, 0.0
    %v601 = vsel %vm430, %v462, 0.0
    %v602 = vsel %vm430, %v465, 0.0
    %v603 = vsel %vm430, %v468, 0.0
    %v604 = vsel %vm430, %v471, 0.0
    %v605 = vsel %vm430, %v474, 0.0
    %v606 = vsel %vm430, %v477, 0.0
    %v607 = vsel %vm430, %v480, 0.0
    %v608 = vsel %vm430, %v483, 0.0
    %v609 = vsel %vm430, %v486, 0.0
    %v610 = vsel %vm430, %v489, 0.0
    %v611 = vsel %vm430, %v492, 0.0
    %v612 = vsel %vm430, %v495, 0.0
    %v613 = vsel %vm430, %v498, 0.0
    %v614 = vsel %vm430, %v501, 0.0
    %v615 = vsel %vm430, %v504, 0.0
    %v616 = vsel %vm430, %v507, 0.0
    %v617 = vsel %vm430, %v510, 0.0
    %v618 = vsel %vm430, %v513, 0.0
    %v619 = vsel %vm430, %v516, 0.0
    %v620 = vsel %vm430, %v519, 0.0
    %v621 = vsel %vm430, %v522, 0.0
    %v622 = vsel %vm430, %v525, 0.0
    %v623 = vlaneseq
    %v624 = vshrl.u32 %v623, 7
    %v625 = vsub.s32 0, %v624
    %v626 = vrot.slane %v171, %v625
    %v627 = vmul.f32 %v398, %v626
    %v628 = vmul.f32 %v240, %v626
    %v629 = vmul.f32 %v399, %v626
    %v630 = vmul.f32 %v243, %v626
    %v631 = vmul.f32 %v400, %v626
    %v632 = vmul.f32 %v246, %v626
    %v633 = vmul.f32 %v401, %v626
    %v634 = vmul.f32 %v249, %v626
    %v635 = vmul.f32 %v402, %v626
    %v636 = vmul.f32 %v252, %v626
    %v637 = vmul.f32 %v403, %v626
    %v638 = vmul.f32 %v255, %v626
    %v639 = vmul.f32 %v404, %v626
    %v640 = vmul.f32 %v258, %v626
    %v641 = vmul.f32 %v405, %v626
    %v642 = vmul.f32 %v261, %v626
    %v643 = vmul.f32 %v406, %v626
    %v644 = vmul.f32 %v264, %v626
    %v645 = vmul.f32 %v407, %v626
    %v646 = vmul.f32 %v267, %v626
    %v647 = vmul.f32 %v408, %v626
    %v648 = vmul.f32 %v270, %v626
    %v649 = vmul.f32 %v409, %v626
    %v650 = vmul.f32 %v273, %v626
    %v651 = vmul.f32 %v410, %v626
    %v652 = vmul.f32 %v276, %v626
    %v653 = vmul.f32 %v411, %v626
    %v654 = vmul.f32 %v279, %v626
    %v655 = vmul.f32 %v412, %v626
    %v656 = vmul.f32 %v282, %v626
    %v657 = vmul.f32 %v414, %v626
    %v658 = vmul.f32 %v288, %v626
    %v659 = vmul.f32 %v415, %v626
    %v660 = vmul.f32 %v291, %v626
    %v661 = vmul.f32 %v416, %v626
    %v662 = vmul.f32 %v294, %v626
    %v663 = vmul.f32 %v417, %v626
    %v664 = vmul.f32 %v297, %v626
    %v665 = vmul.f32 %v418, %v626
    %v666 = vmul.f32 %v300, %v626
    %v667 = vmul.f32 %v419, %v626
    %v668 = vmul.f32 %v303, %v626
    %v669 = vmul.f32 %v420, %v626
    %v670 = vmul.f32 %v306, %v626
    %v671 = vmul.f32 %v421, %v626
    %v672 = vmul.f32 %v309, %v626
    %v673 = vmul.f32 %v422, %v626
    %v674 = vmul.f32 %v312, %v626
    %v675 = vmul.f32 %v423, %v626
    %v676 = vmul.f32 %v315, %v626
    %v677 = vmul.f32 %v424, %v626
    %v678 = vmul.f32 %v318, %v626
    %v679 = vmul.f32 %v425, %v626
    %v680 = vmul.f32 %v321, %v626
    %v681 = vmul.f32 %v426, %v626
    %v682 = vmul.f32 %v324, %v626
    %v683 = vmul.f32 %v427, %v626
    %v684 = vmul.f32 %v327, %v626
    %v685 = vmul.f32 %v428, %v626
    %v686 = vmul.f32 %v330, %v626
    %v687 = vlaneseq
    %v688 = vshrl.u32 %v687, 7
    %v689 = vsub.s32 1, %v688
    %v690 = vrot.slane %v171, %v689
    %v691 = vmul.f32 %v107, %v690
    %v692 = vmul.f32 %v108, %v690
    %v693 = vmul.f32 %v109, %v690
    %v694 = vmul.f32 %v110, %v690
    %v695 = vmul.f32 %v111, %v690
    %v696 = vmul.f32 %v112, %v690
    %v697 = vmul.f32 %v113, %v690
    %v698 = vmul.f32 %v114, %v690
    %v699 = vmul.f32 %v115, %v690
    %v700 = vmul.f32 %v116, %v690
    %v701 = vmul.f32 %v117, %v690
    %v702 = vmul.f32 %v118, %v690
    %v703 = vmul.f32 %v119, %v690
    %v704 = vmul.f32 %v120, %v690
    %v705 = vmul.f32 %v121, %v690
    %v706 = vmul.f32 %v122, %v690
    %v707 = vmul.f32 %v123, %v690
    %v708 = vmul.f32 %v124, %v690
    %v709 = vmul.f32 %v125, %v690
    %v710 = vmul.f32 %v126, %v690
    %v711 = vmul.f32 %v127, %v690
    %v712 = vmul.f32 %v128, %v690
    %v713 = vmul.f32 %v129, %v690
    %v714 = vmul.f32 %v130, %v690
    %v715 = vmul.f32 %v131, %v690
    %v716 = vmul.f32 %v132, %v690
    %v717 = vmul.f32 %v133, %v690
    %v718 = vmul.f32 %v134, %v690
    %v719 = vmul.f32 %v135, %v690
    %v720 = vmul.f32 %v136, %v690
    %v721 = vmul.f32 %v139, %v690
    %v722 = vmul.f32 %v140, %v690
    %v723 = vmul.f32 %v141, %v690
    %v724 = vmul.f32 %v142, %v690
    %v725 = vmul.f32 %v143, %v690
    %v726 = vmul.f32 %v144, %v690
    %v727 = vmul.f32 %v145, %v690
    %v728 = vmul.f32 %v146, %v690
    %v729 = vmul.f32 %v147, %v690
    %v730 = vmul.f32 %v148, %v690
    %v731 = vmul.f32 %v149, %v690
    %v732 = vmul.f32 %v150, %v690
    %v733 = vmul.f32 %v151, %v690
    %v734 = vmul.f32 %v152, %v690
    %v735 = vmul.f32 %v153, %v690
    %v736 = vmul.f32 %v154, %v690
    %v737 = vmul.f32 %v155, %v690
    %v738 = vmul.f32 %v156, %v690
    %v739 = vmul.f32 %v157, %v690
    %v740 = vmul.f32 %v158, %v690
    %v741 = vmul.f32 %v159, %v690
    %v742 = vmul.f32 %v160, %v690
    %v743 = vmul.f32 %v161, %v690
    %v744 = vmul.f32 %v162, %v690
    %v745 = vmul.f32 %v163, %v690
    %v746 = vmul.f32 %v164, %v690
    %v747 = vmul.f32 %v165, %v690
    %v748 = vmul.f32 %v166, %v690
    %v749 = vmul.f32 %v167, %v690
    %v750 = vmul.f32 %v168, %v690
    %v751 = vadd.f32 %v627, %v691
    %v752 = vadd.f32 %v628, %v692
    %v753 = vadd.f32 %v629, %v693
    %v754 = vadd.f32 %v630, %v694
    %v755 = vadd.f32 %v631, %v695
    %v756 = vadd.f32 %v632, %v696
    %v757 = vadd.f32 %v633, %v697
    %v758 = vadd.f32 %v634, %v698
    %v759 = vadd.f32 %v635, %v699
    %v760 = vadd.f32 %v636, %v700
    %v761 = vadd.f32 %v637, %v701
    %v762 = vadd.f32 %v638, %v702
    %v763 = vadd.f32 %v639, %v703
    %v764 = vadd.f32 %v640, %v704
    %v765 = vadd.f32 %v641, %v705
    %v766 = vadd.f32 %v642, %v706
    %v767 = vadd.f32 %v643, %v707
    %v768 = vadd.f32 %v644, %v708
    %v769 = vadd.f32 %v645, %v709
    %v770 = vadd.f32 %v646, %v710
    %v771 = vadd.f32 %v647, %v711
    %v772 = vadd.f32 %v648, %v712
    %v773 = vadd.f32 %v649, %v713
    %v774 = vadd.f32 %v650, %v714
    %v775 = vadd.f32 %v651, %v715
    %v776 = vadd.f32 %v652, %v716
    %v777 = vadd.f32 %v653, %v717
    %v778 = vadd.f32 %v654, %v718
    %v779 = vadd.f32 %v655, %v719
    %v780 = vadd.f32 %v656, %v720
    %v781 = vadd.f32 %v657, %v721
    %v782 = vadd.f32 %v658, %v722
    %v783 = vadd.f32 %v659, %v723
    %v784 = vadd.f32 %v660, %v724
    %v785 = vadd.f32 %v661, %v725
    %v786 = vadd.f32 %v662, %v726
    %v787 = vadd.f32 %v663, %v727
    %v788 = vadd.f32 %v664, %v728
    %v789 = vadd.f32 %v665, %v729
    %v790 = vadd.f32 %v666, %v730
    %v791 = vadd.f32 %v667, %v731
    %v792 = vadd.f32 %v668, %v732
    %v793 = vadd.f32 %v669, %v733
    %v794 = vadd.f32 %v670, %v734
    %v795 = vadd.f32 %v671, %v735
    %v796 = vadd.f32 %v672, %v736
    %v797 = vadd.f32 %v673, %v737
    %v798 = vadd.f32 %v674, %v738
    %v799 = vadd.f32 %v675, %v739
    %v800 = vadd.f32 %v676, %v740
    %v801 = vadd.f32 %v677, %v741
    %v802 = vadd.f32 %v678, %v742
    %v803 = vadd.f32 %v679, %v743
    %v804 = vadd.f32 %v680, %v744
    %v805 = vadd.f32 %v681, %v745
    %v806 = vadd.f32 %v682, %v746
    %v807 = vadd.f32 %v683, %v747
    %v808 = vadd.f32 %v684, %v748
    %v809 = vadd.f32 %v685, %v749
    %v810 = vadd.f32 %v686, %v750
    %v811 = vlaneseq
    %v812 = vshrl.u32 %v811, 7
    %v813 = vsub.s32 2, %v812
    %v814 = vrot.slane %v171, %v813
    %v815 = vmul.f32 %v433, %v814
    %v816 = vmul.f32 %v591, %v814
    %v817 = vmul.f32 %v436, %v814
    %v818 = vmul.f32 %v592, %v814
    %v819 = vmul.f32 %v439, %v814
    %v820 = vmul.f32 %v593, %v814
    %v821 = vmul.f32 %v442, %v814
    %v822 = vmul.f32 %v594, %v814
    %v823 = vmul.f32 %v445, %v814
    %v824 = vmul.f32 %v595, %v814
    %v825 = vmul.f32 %v448, %v814
    %v826 = vmul.f32 %v596, %v814
    %v827 = vmul.f32 %v451, %v814
    %v828 = vmul.f32 %v597, %v814
    %v829 = vmul.f32 %v454, %v814
    %v830 = vmul.f32 %v598, %v814
    %v831 = vmul.f32 %v457, %v814
    %v832 = vmul.f32 %v599, %v814
    %v833 = vmul.f32 %v460, %v814
    %v834 = vmul.f32 %v600, %v814
    %v835 = vmul.f32 %v463, %v814
    %v836 = vmul.f32 %v601, %v814
    %v837 = vmul.f32 %v466, %v814
    %v838 = vmul.f32 %v602, %v814
    %v839 = vmul.f32 %v469, %v814
    %v840 = vmul.f32 %v603, %v814
    %v841 = vmul.f32 %v472, %v814
    %v842 = vmul.f32 %v604, %v814
    %v843 = vmul.f32 %v475, %v814
    %v844 = vmul.f32 %v605, %v814
    %v845 = vmul.f32 %v481, %v814
    %v846 = vmul.f32 %v607, %v814
    %v847 = vmul.f32 %v484, %v814
    %v848 = vmul.f32 %v608, %v814
    %v849 = vmul.f32 %v487, %v814
    %v850 = vmul.f32 %v609, %v814
    %v851 = vmul.f32 %v490, %v814
    %v852 = vmul.f32 %v610, %v814
    %v853 = vmul.f32 %v493, %v814
    %v854 = vmul.f32 %v611, %v814
    %v855 = vmul.f32 %v496, %v814
    %v856 = vmul.f32 %v612, %v814
    %v857 = vmul.f32 %v499, %v814
    %v858 = vmul.f32 %v613, %v814
    %v859 = vmul.f32 %v502, %v814
    %v860 = vmul.f32 %v614, %v814
    %v861 = vmul.f32 %v505, %v814
    %v862 = vmul.f32 %v615, %v814
    %v863 = vmul.f32 %v508, %v814
    %v864 = vmul.f32 %v616, %v814
    %v865 = vmul.f32 %v511, %v814
    %v866 = vmul.f32 %v617, %v814
    %v867 = vmul.f32 %v514, %v814
    %v868 = vmul.f32 %v618, %v814
    %v869 = vmul.f32 %v517, %v814
    %v870 = vmul.f32 %v619, %v814
    %v871 = vmul.f32 %v520, %v814
    %v872 = vmul.f32 %v620, %v814
    %v873 = vmul.f32 %v523, %v814
    %v874 = vmul.f32 %v621, %v814
    %v875 = vadd.f32 %v751, %v815
    %v876 = vadd.f32 %v752, %v816
    %v877 = vadd.f32 %v753, %v817
    %v878 = vadd.f32 %v754, %v818
    %v879 = vadd.f32 %v755, %v819
    %v880 = vadd.f32 %v756, %v820
    %v881 = vadd.f32 %v757, %v821
    %v882 = vadd.f32 %v758, %v822
    %v883 = vadd.f32 %v759, %v823
    %v884 = vadd.f32 %v760, %v824
    %v885 = vadd.f32 %v761, %v825
    %v886 = vadd.f32 %v762, %v826
    %v887 = vadd.f32 %v763, %v827
    %v888 = vadd.f32 %v764, %v828
    %v889 = vadd.f32 %v765, %v829
    %v890 = vadd.f32 %v766, %v830
    %v891 = vadd.f32 %v767, %v831
    %v892 = vadd.f32 %v768, %v832
    %v893 = vadd.f32 %v769, %v833
    %v894 = vadd.f32 %v770, %v834
    %v895 = vadd.f32 %v771, %v835
    %v896 = vadd.f32 %v772, %v836
    %v897 = vadd.f32 %v773, %v837
    %v898 = vadd.f32 %v774, %v838
    %v899 = vadd.f32 %v775, %v839
    %v900 = vadd.f32 %v776, %v840
    %v901 = vadd.f32 %v777, %v841
    %v902 = vadd.f32 %v778, %v842
    %v903 = vadd.f32 %v779, %v843
    %v904 = vadd.f32 %v780, %v844
    %v905 = vadd.f32 %v781, %v845
    %v906 = vadd.f32 %v782, %v846
    %v907 = vadd.f32 %v783, %v847
    %v908 = vadd.f32 %v784, %v848
    %v909 = vadd.f32 %v785, %v849
    %v910 = vadd.f32 %v786, %v850
    %v911 = vadd.f32 %v787, %v851
    %v912 = vadd.f32 %v788, %v852
    %v913 = vadd.f32 %v789, %v853
    %v914 = vadd.f32 %v790, %v854
    %v915 = vadd.f32 %v791, %v855
    %v916 = vadd.f32 %v792, %v856
    %v917 = vadd.f32 %v793, %v857
    %v918 = vadd.f32 %v794, %v858
    %v919 = vadd.f32 %v795, %v859
    %v920 = vadd.f32 %v796, %v860
    %v921 = vadd.f32 %v797, %v861
    %v922 = vadd.f32 %v798, %v862
    %v923 = vadd.f32 %v799, %v863
    %v924 = vadd.f32 %v800, %v864
    %v925 = vadd.f32 %v801, %v865
    %v926 = vadd.f32 %v802, %v866
    %v927 = vadd.f32 %v803, %v867
    %v928 = vadd.f32 %v804, %v868
    %v929 = vadd.f32 %v805, %v869
    %v930 = vadd.f32 %v806, %v870
    %v931 = vadd.f32 %v807, %v871
    %v932 = vadd.f32 %v808, %v872
    %v933 = vadd.f32 %v809, %v873
    %v934 = vadd.f32 %v810, %v874
    %v935 = vlaneseq
    %v936 = vshrl.u32 %v935, 7
    %v937 = vsub.s32 3, %v936
    %v938 = vrot.slane %v171, %v937
    %v939 = vmul.f32 %v398, %v938
    %v940 = vmul.f32 %v240, %v938
    %v941 = vmul.f32 %v399, %v938
    %v942 = vmul.f32 %v243, %v938
    %v943 = vmul.f32 %v400, %v938
    %v944 = vmul.f32 %v246, %v938
    %v945 = vmul.f32 %v401, %v938
    %v946 = vmul.f32 %v249, %v938
    %v947 = vmul.f32 %v402, %v938
    %v948 = vmul.f32 %v252, %v938
    %v949 = vmul.f32 %v403, %v938
    %v950 = vmul.f32 %v255, %v938
    %v951 = vmul.f32 %v404, %v938
    %v952 = vmul.f32 %v258, %v938
    %v953 = vmul.f32 %v405, %v938
    %v954 = vmul.f32 %v261, %v938
    %v955 = vmul.f32 %v406, %v938
    %v956 = vmul.f32 %v264, %v938
    %v957 = vmul.f32 %v407, %v938
    %v958 = vmul.f32 %v267, %v938
    %v959 = vmul.f32 %v408, %v938
    %v960 = vmul.f32 %v270, %v938
    %v961 = vmul.f32 %v409, %v938
    %v962 = vmul.f32 %v273, %v938
    %v963 = vmul.f32 %v410, %v938
    %v964 = vmul.f32 %v276, %v938
    %v965 = vmul.f32 %v411, %v938
    %v966 = vmul.f32 %v279, %v938
    %v967 = vmul.f32 %v412, %v938
    %v968 = vmul.f32 %v282, %v938
    %v969 = vmul.f32 %v413, %v938
    %v970 = vmul.f32 %v285, %v938
    %v971 = vmul.f32 %v414, %v938
    %v972 = vmul.f32 %v288, %v938
    %v973 = vmul.f32 %v415, %v938
    %v974 = vmul.f32 %v291, %v938
    %v975 = vmul.f32 %v416, %v938
    %v976 = vmul.f32 %v294, %v938
    %v977 = vmul.f32 %v417, %v938
    %v978 = vmul.f32 %v297, %v938
    %v979 = vmul.f32 %v418, %v938
    %v980 = vmul.f32 %v300, %v938
    %v981 = vmul.f32 %v419, %v938
    %v982 = vmul.f32 %v303, %v938
    %v983 = vmul.f32 %v420, %v938
    %v984 = vmul.f32 %v306, %v938
    %v985 = vmul.f32 %v421, %v938
    %v986 = vmul.f32 %v309, %v938
    %v987 = vmul.f32 %v422, %v938
    %v988 = vmul.f32 %v312, %v938
    %v989 = vmul.f32 %v423, %v938
    %v990 = vmul.f32 %v315, %v938
    %v991 = vmul.f32 %v424, %v938
    %v992 = vmul.f32 %v318, %v938
    %v993 = vmul.f32 %v425, %v938
    %v994 = vmul.f32 %v321, %v938
    %v995 = vmul.f32 %v426, %v938
    %v996 = vmul.f32 %v324, %v938
    %v997 = vmul.f32 %v427, %v938
    %v998 = vmul.f32 %v327, %v938
    %v999 = vmul.f32 %v428, %v938
    %v1000 = vmul.f32 %v330, %v938
    %v1001 = vmul.f32 %v429, %v938
    %v1002 = vmul.f32 %v333, %v938
    %v1003 = vlaneseq
    %v1004 = vshrl.u32 %v1003, 7
    %v1005 = vsub.s32 4, %v1004
    %v1006 = vrot.slane %v171, %v1005
    %v1007 = vmul.f32 %v107, %v1006
    %v1008 = vmul.f32 %v108, %v1006
    %v1009 = vmul.f32 %v109, %v1006
    %v1010 = vmul.f32 %v110, %v1006
    %v1011 = vmul.f32 %v111, %v1006
    %v1012 = vmul.f32 %v112, %v1006
    %v1013 = vmul.f32 %v113, %v1006
    %v1014 = vmul.f32 %v114, %v1006
    %v1015 = vmul.f32 %v115, %v1006
    %v1016 = vmul.f32 %v116, %v1006
    %v1017 = vmul.f32 %v117, %v1006
    %v1018 = vmul.f32 %v118, %v1006
    %v1019 = vmul.f32 %v119, %v1006
    %v1020 = vmul.f32 %v120, %v1006
    %v1021 = vmul.f32 %v121, %v1006
    %v1022 = vmul.f32 %v122, %v1006
    %v1023 = vmul.f32 %v123, %v1006
    %v1024 = vmul.f32 %v124, %v1006
    %v1025 = vmul.f32 %v125, %v1006
    %v1026 = vmul.f32 %v126, %v1006
    %v1027 = vmul.f32 %v127, %v1006
    %v1028 = vmul.f32 %v128, %v1006
    %v1029 = vmul.f32 %v129, %v1006
    %v1030 = vmul.f32 %v130, %v1006
    %v1031 = vmul.f32 %v131, %v1006
    %v1032 = vmul.f32 %v132, %v1006
    %v1033 = vmul.f32 %v133, %v1006
    %v1034 = vmul.f32 %v134, %v1006
    %v1035 = vmul.f32 %v135, %v1006
    %v1036 = vmul.f32 %v136, %v1006
    %v1037 = vmul.f32 %v137, %v1006
    %v1038 = vmul.f32 %v138, %v1006
    %v1039 = vmul.f32 %v139, %v1006
    %v1040 = vmul.f32 %v140, %v1006
    %v1041 = vmul.f32 %v141, %v1006
    %v1042 = vmul.f32 %v142, %v1006
    %v1043 = vmul.f32 %v143, %v1006
    %v1044 = vmul.f32 %v144, %v1006
    %v1045 = vmul.f32 %v145, %v1006
    %v1046 = vmul.f32 %v146, %v1006
    %v1047 = vmul.f32 %v147, %v1006
    %v1048 = vmul.f32 %v148, %v1006
    %v1049 = vmul.f32 %v149, %v1006
    %v1050 = vmul.f32 %v150, %v1006
    %v1051 = vmul.f32 %v151, %v1006
    %v1052 = vmul.f32 %v152, %v1006
    %v1053 = vmul.f32 %v153, %v1006
    %v1054 = vmul.f32 %v154, %v1006
    %v1055 = vmul.f32 %v155, %v1006
    %v1056 = vmul.f32 %v156, %v1006
    %v1057 = vmul.f32 %v157, %v1006
    %v1058 = vmul.f32 %v158, %v1006
    %v1059 = vmul.f32 %v159, %v1006
    %v1060 = vmul.f32 %v160, %v1006
    %v1061 = vmul.f32 %v161, %v1006
    %v1062 = vmul.f32 %v162, %v1006
    %v1063 = vmul.f32 %v163, %v1006
    %v1064 = vmul.f32 %v164, %v1006
    %v1065 = vmul.f32 %v165, %v1006
    %v1066 = vmul.f32 %v166, %v1006
    %v1067 = vmul.f32 %v167, %v1006
    %v1068 = vmul.f32 %v168, %v1006
    %v1069 = vmul.f32 %v169, %v1006
    %v1070 = vmul.f32 %v170, %v1006
    %v1071 = vadd.f32 %v939, %v1007
    %v1072 = vadd.f32 %v940, %v1008
    %v1073 = vadd.f32 %v941, %v1009
    %v1074 = vadd.f32 %v942, %v1010
    %v1075 = vadd.f32 %v943, %v1011
    %v1076 = vadd.f32 %v944, %v1012
    %v1077 = vadd.f32 %v945, %v1013
    %v1078 = vadd.f32 %v946, %v1014
    %v1079 = vadd.f32 %v947, %v1015
    %v1080 = vadd.f32 %v948, %v1016
    %v1081 = vadd.f32 %v949, %v1017
    %v1082 = vadd.f32 %v950, %v1018
    %v1083 = vadd.f32 %v951, %v1019
    %v1084 = vadd.f32 %v952, %v1020
    %v1085 = vadd.f32 %v953, %v1021
    %v1086 = vadd.f32 %v954, %v1022
    %v1087 = vadd.f32 %v955, %v1023
    %v1088 = vadd.f32 %v956, %v1024
    %v1089 = vadd.f32 %v957, %v1025
    %v1090 = vadd.f32 %v958, %v1026
    %v1091 = vadd.f32 %v959, %v1027
    %v1092 = vadd.f32 %v960, %v1028
    %v1093 = vadd.f32 %v961, %v1029
    %v1094 = vadd.f32 %v962, %v1030
    %v1095 = vadd.f32 %v963, %v1031
    %v1096 = vadd.f32 %v964, %v1032
    %v1097 = vadd.f32 %v965, %v1033
    %v1098 = vadd.f32 %v966, %v1034
    %v1099 = vadd.f32 %v967, %v1035
    %v1100 = vadd.f32 %v968, %v1036
    %v1101 = vadd.f32 %v969, %v1037
    %v1102 = vadd.f32 %v970, %v1038
    %v1103 = vadd.f32 %v971, %v1039
    %v1104 = vadd.f32 %v972, %v1040
    %v1105 = vadd.f32 %v973, %v1041
    %v1106 = vadd.f32 %v974, %v1042
    %v1107 = vadd.f32 %v975, %v1043
    %v1108 = vadd.f32 %v976, %v1044
    %v1109 = vadd.f32 %v977, %v1045
    %v1110 = vadd.f32 %v978, %v1046
    %v1111 = vadd.f32 %v979, %v1047
    %v1112 = vadd.f32 %v980, %v1048
    %v1113 = vadd.f32 %v981, %v1049
    %v1114 = vadd.f32 %v982, %v1050
    %v1115 = vadd.f32 %v983, %v1051
    %v1116 = vadd.f32 %v984, %v1052
    %v1117 = vadd.f32 %v985, %v1053
    %v1118 = vadd.f32 %v986, %v1054
    %v1119 = vadd.f32 %v987, %v1055
    %v1120 = vadd.f32 %v988, %v1056
    %v1121 = vadd.f32 %v989, %v1057
    %v1122 = vadd.f32 %v990, %v1058
    %v1123 = vadd.f32 %v991, %v1059
    %v1124 = vadd.f32 %v992, %v1060
    %v1125 = vadd.f32 %v993, %v1061
    %v1126 = vadd.f32 %v994, %v1062
    %v1127 = vadd.f32 %v995, %v1063
    %v1128 = vadd.f32 %v996, %v1064
    %v1129 = vadd.f32 %v997, %v1065
    %v1130 = vadd.f32 %v998, %v1066
    %v1131 = vadd.f32 %v999, %v1067
    %v1132 = vadd.f32 %v1000, %v1068
    %v1133 = vadd.f32 %v1001, %v1069
    %v1134 = vadd.f32 %v1002, %v1070
    %v1135 = vlaneseq
    %v1136 = vshrl.u32 %v1135, 7
    %v1137 = vsub.s32 5, %v1136
    %v1138 = vrot.slane %v171, %v1137
    %v1139 = vmul.f32 %v433, %v1138
    %v1140 = vmul.f32 %v591, %v1138
    %v1141 = vmul.f32 %v436, %v1138
    %v1142 = vmul.f32 %v592, %v1138
    %v1143 = vmul.f32 %v439, %v1138
    %v1144 = vmul.f32 %v593, %v1138
    %v1145 = vmul.f32 %v442, %v1138
    %v1146 = vmul.f32 %v594, %v1138
    %v1147 = vmul.f32 %v445, %v1138
    %v1148 = vmul.f32 %v595, %v1138
    %v1149 = vmul.f32 %v448, %v1138
    %v1150 = vmul.f32 %v596, %v1138
    %v1151 = vmul.f32 %v451, %v1138
    %v1152 = vmul.f32 %v597, %v1138
    %v1153 = vmul.f32 %v454, %v1138
    %v1154 = vmul.f32 %v598, %v1138
    %v1155 = vmul.f32 %v457, %v1138
    %v1156 = vmul.f32 %v599, %v1138
    %v1157 = vmul.f32 %v460, %v1138
    %v1158 = vmul.f32 %v600, %v1138
    %v1159 = vmul.f32 %v463, %v1138
    %v1160 = vmul.f32 %v601, %v1138
    %v1161 = vmul.f32 %v466, %v1138
    %v1162 = vmul.f32 %v602, %v1138
    %v1163 = vmul.f32 %v469, %v1138
    %v1164 = vmul.f32 %v603, %v1138
    %v1165 = vmul.f32 %v472, %v1138
    %v1166 = vmul.f32 %v604, %v1138
    %v1167 = vmul.f32 %v475, %v1138
    %v1168 = vmul.f32 %v605, %v1138
    %v1169 = vmul.f32 %v478, %v1138
    %v1170 = vmul.f32 %v606, %v1138
    %v1171 = vmul.f32 %v481, %v1138
    %v1172 = vmul.f32 %v607, %v1138
    %v1173 = vmul.f32 %v484, %v1138
    %v1174 = vmul.f32 %v608, %v1138
    %v1175 = vmul.f32 %v487, %v1138
    %v1176 = vmul.f32 %v609, %v1138
    %v1177 = vmul.f32 %v490, %v1138
    %v1178 = vmul.f32 %v610, %v1138
    %v1179 = vmul.f32 %v493, %v1138
    %v1180 = vmul.f32 %v611, %v1138
    %v1181 = vmul.f32 %v496, %v1138
    %v1182 = vmul.f32 %v612, %v1138
    %v1183 = vmul.f32 %v499, %v1138
    %v1184 = vmul.f32 %v613, %v1138
    %v1185 = vmul.f32 %v502, %v1138
    %v1186 = vmul.f32 %v614, %v1138
    %v1187 = vmul.f32 %v505, %v1138
    %v1188 = vmul.f32 %v615, %v1138
    %v1189 = vmul.f32 %v508, %v1138
    %v1190 = vmul.f32 %v616, %v1138
    %v1191 = vmul.f32 %v511, %v1138
    %v1192 = vmul.f32 %v617, %v1138
    %v1193 = vmul.f32 %v514, %v1138
    %v1194 = vmul.f32 %v618, %v1138
    %v1195 = vmul.f32 %v517, %v1138
    %v1196 = vmul.f32 %v619, %v1138
    %v1197 = vmul.f32 %v520, %v1138
    %v1198 = vmul.f32 %v620, %v1138
    %v1199 = vmul.f32 %v523, %v1138
    %v1200 = vmul.f32 %v621, %v1138
    %v1201 = vmul.f32 %v526, %v1138
    %v1202 = vmul.f32 %v622, %v1138
    %v1203 = vadd.f32 %v1071, %v1139
    %v1204 = vadd.f32 %v1072, %v1140
    %v1205 = vadd.f32 %v1073, %v1141
    %v1206 = vadd.f32 %v1074, %v1142
    %v1207 = vadd.f32 %v1075, %v1143
    %v1208 = vadd.f32 %v1076, %v1144
    %v1209 = vadd.f32 %v1077, %v1145
    %v1210 = vadd.f32 %v1078, %v1146
    %v1211 = vadd.f32 %v1079, %v1147
    %v1212 = vadd.f32 %v1080, %v1148
    %v1213 = vadd.f32 %v1081, %v1149
    %v1214 = vadd.f32 %v1082, %v1150
    %v1215 = vadd.f32 %v1083, %v1151
    %v1216 = vadd.f32 %v1084, %v1152
    %v1217 = vadd.f32 %v1085, %v1153
    %v1218 = vadd.f32 %v1086, %v1154
    %v1219 = vadd.f32 %v1087, %v1155
    %v1220 = vadd.f32 %v1088, %v1156
    %v1221 = vadd.f32 %v1089, %v1157
    %v1222 = vadd.f32 %v1090, %v1158
    %v1223 = vadd.f32 %v1091, %v1159
    %v1224 = vadd.f32 %v1092, %v1160
    %v1225 = vadd.f32 %v1093, %v1161
    %v1226 = vadd.f32 %v1094, %v1162
    %v1227 = vadd.f32 %v1095, %v1163
    %v1228 = vadd.f32 %v1096, %v1164
    %v1229 = vadd.f32 %v1097, %v1165
    %v1230 = vadd.f32 %v1098, %v1166
    %v1231 = vadd.f32 %v1099, %v1167
    %v1232 = vadd.f32 %v1100, %v1168
    %v1233 = vadd.f32 %v1101, %v1169
    %v1234 = vadd.f32 %v1102, %v1170
    %v1235 = vadd.f32 %v1103, %v1171
    %v1236 = vadd.f32 %v1104, %v1172
    %v1237 = vadd.f32 %v1105, %v1173
    %v1238 = vadd.f32 %v1106, %v1174
    %v1239 = vadd.f32 %v1107, %v1175
    %v1240 = vadd.f32 %v1108, %v1176
    %v1241 = vadd.f32 %v1109, %v1177
    %v1242 = vadd.f32 %v1110, %v1178
    %v1243 = vadd.f32 %v1111, %v1179
    %v1244 = vadd.f32 %v1112, %v1180
    %v1245 = vadd.f32 %v1113, %v1181
    %v1246 = vadd.f32 %v1114, %v1182
    %v1247 = vadd.f32 %v1115, %v1183
    %v1248 = vadd.f32 %v1116, %v1184
    %v1249 = vadd.f32 %v1117, %v1185
    %v1250 = vadd.f32 %v1118, %v1186
    %v1251 = vadd.f32 %v1119, %v1187
    %v1252 = vadd.f32 %v1120, %v1188
    %v1253 = vadd.f32 %v1121, %v1189
    %v1254 = vadd.f32 %v1122, %v1190
    %v1255 = vadd.f32 %v1123, %v1191
    %v1256 = vadd.f32 %v1124, %v1192
    %v1257 = vadd.f32 %v1125, %v1193
    %v1258 = vadd.f32 %v1126, %v1194
    %v1259 = vadd.f32 %v1127, %v1195
    %v1260 = vadd.f32 %v1128, %v1196
    %v1261 = vadd.f32 %v1129, %v1197
    %v1262 = vadd.f32 %v1130, %v1198
    %v1263 = vadd.f32 %v1131, %v1199
    %v1264 = vadd.f32 %v1132, %v1200
    %v1265 = vadd.f32 %v1133, %v1201
    %v1266 = vadd.f32 %v1134, %v1202
    %v1267 = vadd.f32 %v1203, 0.0
    %v1268 = vadd.f32 %v1204, 0.0
    %v1269 = vadd.f32 %v875, %v1205
    %v1270 = vadd.f32 %v876, %v1206
    %v1271 = vadd.f32 %v877, %v1207
    %v1272 = vadd.f32 %v878, %v1208
    %v1273 = vadd.f32 %v879, %v1209
    %v1274 = vadd.f32 %v880, %v1210
    %v1275 = vadd.f32 %v881, %v1211
    %v1276 = vadd.f32 %v882, %v1212
    %v1277 = vadd.f32 %v883, %v1213
    %v1278 = vadd.f32 %v884, %v1214
    %v1279 = vadd.f32 %v885, %v1215
    %v1280 = vadd.f32 %v886, %v1216
    %v1281 = vadd.f32 %v887, %v1217
    %v1282 = vadd.f32 %v888, %v1218
    %v1283 = vadd.f32 %v889, %v1219
    %v1284 = vadd.f32 %v890, %v1220
    %v1285 = vadd.f32 %v891, %v1221
    %v1286 = vadd.f32 %v892, %v1222
    %v1287 = vadd.f32 %v893, %v1223
    %v1288 = vadd.f32 %v894, %v1224
    %v1289 = vadd.f32 %v895, %v1225
    %v1290 = vadd.f32 %v896, %v1226
    %v1291 = vadd.f32 %v897, %v1227
    %v1292 = vadd.f32 %v898, %v1228
    %v1293 = vadd.f32 %v899, %v1229
    %v1294 = vadd.f32 %v900, %v1230
    %v1295 = vadd.f32 %v901, %v1231
    %v1296 = vadd.f32 %v902, %v1232
    %v1297 = vadd.f32 %v903, %v1233
    %v1298 = vadd.f32 %v904, %v1234
    %v1299 = vadd.f32 %v1235, 0.0
    %v1300 = vadd.f32 %v1236, 0.0
    %v1301 = vadd.f32 %v905, %v1237
    %v1302 = vadd.f32 %v906, %v1238
    %v1303 = vadd.f32 %v907, %v1239
    %v1304 = vadd.f32 %v908, %v1240
    %v1305 = vadd.f32 %v909, %v1241
    %v1306 = vadd.f32 %v910, %v1242
    %v1307 = vadd.f32 %v911, %v1243
    %v1308 = vadd.f32 %v912, %v1244
    %v1309 = vadd.f32 %v913, %v1245
    %v1310 = vadd.f32 %v914, %v1246
    %v1311 = vadd.f32 %v915, %v1247
    %v1312 = vadd.f32 %v916, %v1248
    %v1313 = vadd.f32 %v917, %v1249
    %v1314 = vadd.f32 %v918, %v1250
    %v1315 = vadd.f32 %v919, %v1251
    %v1316 = vadd.f32 %v920, %v1252
    %v1317 = vadd.f32 %v921, %v1253
    %v1318 = vadd.f32 %v922, %v1254
    %v1319 = vadd.f32 %v923, %v1255
    %v1320 = vadd.f32 %v924, %v1256
    %v1321 = vadd.f32 %v925, %v1257
    %v1322 = vadd.f32 %v926, %v1258
    %v1323 = vadd.f32 %v927, %v1259
    %v1324 = vadd.f32 %v928, %v1260
    %v1325 = vadd.f32 %v929, %v1261
    %v1326 = vadd.f32 %v930, %v1262
    %v1327 = vadd.f32 %v931, %v1263
    %v1328 = vadd.f32 %v932, %v1264
    %v1329 = vadd.f32 %v933, %v1265
    %v1330 = vadd.f32 %v934, %v1266
    %v1331 = vlaneseq
    %v1332 = vshrl.u32 %v1331, 7
    %v1333 = vsub.s32 6, %v1332
    %v1334 = vrot.slane %v171, %v1333
    %v1335 = vmul.f32 %v399, %v1334
    %v1336 = vmul.f32 %v243, %v1334
    %v1337 = vmul.f32 %v400, %v1334
    %v1338 = vmul.f32 %v246, %v1334
    %v1339 = vmul.f32 %v401, %v1334
    %v1340 = vmul.f32 %v249, %v1334
    %v1341 = vmul.f32 %v402, %v1334
    %v1342 = vmul.f32 %v252, %v1334
    %v1343 = vmul.f32 %v403, %v1334
    %v1344 = vmul.f32 %v255, %v1334
    %v1345 = vmul.f32 %v404, %v1334
    %v1346 = vmul.f32 %v258, %v1334
    %v1347 = vmul.f32 %v405, %v1334
    %v1348 = vmul.f32 %v261, %v1334
    %v1349 = vmul.f32 %v406, %v1334
    %v1350 = vmul.f32 %v264, %v1334
    %v1351 = vmul.f32 %v407, %v1334
    %v1352 = vmul.f32 %v267, %v1334
    %v1353 = vmul.f32 %v408, %v1334
    %v1354 = vmul.f32 %v270, %v1334
    %v1355 = vmul.f32 %v409, %v1334
    %v1356 = vmul.f32 %v273, %v1334
    %v1357 = vmul.f32 %v410, %v1334
    %v1358 = vmul.f32 %v276, %v1334
    %v1359 = vmul.f32 %v411, %v1334
    %v1360 = vmul.f32 %v279, %v1334
    %v1361 = vmul.f32 %v412, %v1334
    %v1362 = vmul.f32 %v282, %v1334
    %v1363 = vmul.f32 %v413, %v1334
    %v1364 = vmul.f32 %v285, %v1334
    %v1365 = vmul.f32 %v415, %v1334
    %v1366 = vmul.f32 %v291, %v1334
    %v1367 = vmul.f32 %v416, %v1334
    %v1368 = vmul.f32 %v294, %v1334
    %v1369 = vmul.f32 %v417, %v1334
    %v1370 = vmul.f32 %v297, %v1334
    %v1371 = vmul.f32 %v418, %v1334
    %v1372 = vmul.f32 %v300, %v1334
    %v1373 = vmul.f32 %v419, %v1334
    %v1374 = vmul.f32 %v303, %v1334
    %v1375 = vmul.f32 %v420, %v1334
    %v1376 = vmul.f32 %v306, %v1334
    %v1377 = vmul.f32 %v421, %v1334
    %v1378 = vmul.f32 %v309, %v1334
    %v1379 = vmul.f32 %v422, %v1334
    %v1380 = vmul.f32 %v312, %v1334
    %v1381 = vmul.f32 %v423, %v1334
    %v1382 = vmul.f32 %v315, %v1334
    %v1383 = vmul.f32 %v424, %v1334
    %v1384 = vmul.f32 %v318, %v1334
    %v1385 = vmul.f32 %v425, %v1334
    %v1386 = vmul.f32 %v321, %v1334
    %v1387 = vmul.f32 %v426, %v1334
    %v1388 = vmul.f32 %v324, %v1334
    %v1389 = vmul.f32 %v427, %v1334
    %v1390 = vmul.f32 %v327, %v1334
    %v1391 = vmul.f32 %v428, %v1334
    %v1392 = vmul.f32 %v330, %v1334
    %v1393 = vmul.f32 %v429, %v1334
    %v1394 = vmul.f32 %v333, %v1334
    %v1395 = vlaneseq
    %v1396 = vshrl.u32 %v1395, 7
    %v1397 = vsub.s32 7, %v1396
    %v1398 = vrot.slane %v171, %v1397
    %v1399 = vmul.f32 %v109, %v1398
    %v1400 = vmul.f32 %v110, %v1398
    %v1401 = vmul.f32 %v111, %v1398
    %v1402 = vmul.f32 %v112, %v1398
    %v1403 = vmul.f32 %v113, %v1398
    %v1404 = vmul.f32 %v114, %v1398
    %v1405 = vmul.f32 %v115, %v1398
    %v1406 = vmul.f32 %v116, %v1398
    %v1407 = vmul.f32 %v117, %v1398
    %v1408 = vmul.f32 %v118, %v1398
    %v1409 = vmul.f32 %v119, %v1398
    %v1410 = vmul.f32 %v120, %v1398
    %v1411 = vmul.f32 %v121, %v1398
    %v1412 = vmul.f32 %v122, %v1398
    %v1413 = vmul.f32 %v123, %v1398
    %v1414 = vmul.f32 %v124, %v1398
    %v1415 = vmul.f32 %v125, %v1398
    %v1416 = vmul.f32 %v126, %v1398
    %v1417 = vmul.f32 %v127, %v1398
    %v1418 = vmul.f32 %v128, %v1398
    %v1419 = vmul.f32 %v129, %v1398
    %v1420 = vmul.f32 %v130, %v1398
    %v1421 = vmul.f32 %v131, %v1398
    %v1422 = vmul.f32 %v132, %v1398
    %v1423 = vmul.f32 %v133, %v1398
    %v1424 = vmul.f32 %v134, %v1398
    %v1425 = vmul.f32 %v135, %v1398
    %v1426 = vmul.f32 %v136, %v1398
    %v1427 = vmul.f32 %v137, %v1398
    %v1428 = vmul.f32 %v138, %v1398
    %v1429 = vmul.f32 %v141, %v1398
    %v1430 = vmul.f32 %v142, %v1398
    %v1431 = vmul.f32 %v143, %v1398
    %v1432 = vmul.f32 %v144, %v1398
    %v1433 = vmul.f32 %v145, %v1398
    %v1434 = vmul.f32 %v146, %v1398
    %v1435 = vmul.f32 %v147, %v1398
    %v1436 = vmul.f32 %v148, %v1398
    %v1437 = vmul.f32 %v149, %v1398
    %v1438 = vmul.f32 %v150, %v1398
    %v1439 = vmul.f32 %v151, %v1398
    %v1440 = vmul.f32 %v152, %v1398
    %v1441 = vmul.f32 %v153, %v1398
    %v1442 = vmul.f32 %v154, %v1398
    %v1443 = vmul.f32 %v155, %v1398
    %v1444 = vmul.f32 %v156, %v1398
    %v1445 = vmul.f32 %v157, %v1398
    %v1446 = vmul.f32 %v158, %v1398
    %v1447 = vmul.f32 %v159, %v1398
    %v1448 = vmul.f32 %v160, %v1398
    %v1449 = vmul.f32 %v161, %v1398
    %v1450 = vmul.f32 %v162, %v1398
    %v1451 = vmul.f32 %v163, %v1398
    %v1452 = vmul.f32 %v164, %v1398
    %v1453 = vmul.f32 %v165, %v1398
    %v1454 = vmul.f32 %v166, %v1398
    %v1455 = vmul.f32 %v167, %v1398
    %v1456 = vmul.f32 %v168, %v1398
    %v1457 = vmul.f32 %v169, %v1398
    %v1458 = vmul.f32 %v170, %v1398
    %v1459 = vadd.f32 %v1335, %v1399
    %v1460 = vadd.f32 %v1336, %v1400
    %v1461 = vadd.f32 %v1337, %v1401
    %v1462 = vadd.f32 %v1338, %v1402
    %v1463 = vadd.f32 %v1339, %v1403
    %v1464 = vadd.f32 %v1340, %v1404
    %v1465 = vadd.f32 %v1341, %v1405
    %v1466 = vadd.f32 %v1342, %v1406
    %v1467 = vadd.f32 %v1343, %v1407
    %v1468 = vadd.f32 %v1344, %v1408
    %v1469 = vadd.f32 %v1345, %v1409
    %v1470 = vadd.f32 %v1346, %v1410
    %v1471 = vadd.f32 %v1347, %v1411
    %v1472 = vadd.f32 %v1348, %v1412
    %v1473 = vadd.f32 %v1349, %v1413
    %v1474 = vadd.f32 %v1350, %v1414
    %v1475 = vadd.f32 %v1351, %v1415
    %v1476 = vadd.f32 %v1352, %v1416
    %v1477 = vadd.f32 %v1353, %v1417
    %v1478 = vadd.f32 %v1354, %v1418
    %v1479 = vadd.f32 %v1355, %v1419
    %v1480 = vadd.f32 %v1356, %v1420
    %v1481 = vadd.f32 %v1357, %v1421
    %v1482 = vadd.f32 %v1358, %v1422
    %v1483 = vadd.f32 %v1359, %v1423
    %v1484 = vadd.f32 %v1360, %v1424
    %v1485 = vadd.f32 %v1361, %v1425
    %v1486 = vadd.f32 %v1362, %v1426
    %v1487 = vadd.f32 %v1363, %v1427
    %v1488 = vadd.f32 %v1364, %v1428
    %v1489 = vadd.f32 %v1365, %v1429
    %v1490 = vadd.f32 %v1366, %v1430
    %v1491 = vadd.f32 %v1367, %v1431
    %v1492 = vadd.f32 %v1368, %v1432
    %v1493 = vadd.f32 %v1369, %v1433
    %v1494 = vadd.f32 %v1370, %v1434
    %v1495 = vadd.f32 %v1371, %v1435
    %v1496 = vadd.f32 %v1372, %v1436
    %v1497 = vadd.f32 %v1373, %v1437
    %v1498 = vadd.f32 %v1374, %v1438
    %v1499 = vadd.f32 %v1375, %v1439
    %v1500 = vadd.f32 %v1376, %v1440
    %v1501 = vadd.f32 %v1377, %v1441
    %v1502 = vadd.f32 %v1378, %v1442
    %v1503 = vadd.f32 %v1379, %v1443
    %v1504 = vadd.f32 %v1380, %v1444
    %v1505 = vadd.f32 %v1381, %v1445
    %v1506 = vadd.f32 %v1382, %v1446
    %v1507 = vadd.f32 %v1383, %v1447
    %v1508 = vadd.f32 %v1384, %v1448
    %v1509 = vadd.f32 %v1385, %v1449
    %v1510 = vadd.f32 %v1386, %v1450
    %v1511 = vadd.f32 %v1387, %v1451
    %v1512 = vadd.f32 %v1388, %v1452
    %v1513 = vadd.f32 %v1389, %v1453
    %v1514 = vadd.f32 %v1390, %v1454
    %v1515 = vadd.f32 %v1391, %v1455
    %v1516 = vadd.f32 %v1392, %v1456
    %v1517 = vadd.f32 %v1393, %v1457
    %v1518 = vadd.f32 %v1394, %v1458
    %v1519 = vlaneseq
    %v1520 = vshrl.u32 %v1519, 7
    %v1521 = vsub.s32 0, %v1520
    %v1522 = vrot.slane %v172, %v1521
    %v1523 = vmul.f32 %v436, %v1522
    %v1524 = vmul.f32 %v592, %v1522
    %v1525 = vmul.f32 %v439, %v1522
    %v1526 = vmul.f32 %v593, %v1522
    %v1527 = vmul.f32 %v442, %v1522
    %v1528 = vmul.f32 %v594, %v1522
    %v1529 = vmul.f32 %v445, %v1522
    %v1530 = vmul.f32 %v595, %v1522
    %v1531 = vmul.f32 %v448, %v1522
    %v1532 = vmul.f32 %v596, %v1522
    %v1533 = vmul.f32 %v451, %v1522
    %v1534 = vmul.f32 %v597, %v1522
    %v1535 = vmul.f32 %v454, %v1522
    %v1536 = vmul.f32 %v598, %v1522
    %v1537 = vmul.f32 %v457, %v1522
    %v1538 = vmul.f32 %v599, %v1522
    %v1539 = vmul.f32 %v460, %v1522
    %v1540 = vmul.f32 %v600, %v1522
    %v1541 = vmul.f32 %v463, %v1522
    %v1542 = vmul.f32 %v601, %v1522
    %v1543 = vmul.f32 %v466, %v1522
    %v1544 = vmul.f32 %v602, %v1522
    %v1545 = vmul.f32 %v469, %v1522
    %v1546 = vmul.f32 %v603, %v1522
    %v1547 = vmul.f32 %v472, %v1522
    %v1548 = vmul.f32 %v604, %v1522
    %v1549 = vmul.f32 %v475, %v1522
    %v1550 = vmul.f32 %v605, %v1522
    %v1551 = vmul.f32 %v478, %v1522
    %v1552 = vmul.f32 %v606, %v1522
    %v1553 = vmul.f32 %v484, %v1522
    %v1554 = vmul.f32 %v608, %v1522
    %v1555 = vmul.f32 %v487, %v1522
    %v1556 = vmul.f32 %v609, %v1522
    %v1557 = vmul.f32 %v490, %v1522
    %v1558 = vmul.f32 %v610, %v1522
    %v1559 = vmul.f32 %v493, %v1522
    %v1560 = vmul.f32 %v611, %v1522
    %v1561 = vmul.f32 %v496, %v1522
    %v1562 = vmul.f32 %v612, %v1522
    %v1563 = vmul.f32 %v499, %v1522
    %v1564 = vmul.f32 %v613, %v1522
    %v1565 = vmul.f32 %v502, %v1522
    %v1566 = vmul.f32 %v614, %v1522
    %v1567 = vmul.f32 %v505, %v1522
    %v1568 = vmul.f32 %v615, %v1522
    %v1569 = vmul.f32 %v508, %v1522
    %v1570 = vmul.f32 %v616, %v1522
    %v1571 = vmul.f32 %v511, %v1522
    %v1572 = vmul.f32 %v617, %v1522
    %v1573 = vmul.f32 %v514, %v1522
    %v1574 = vmul.f32 %v618, %v1522
    %v1575 = vmul.f32 %v517, %v1522
    %v1576 = vmul.f32 %v619, %v1522
    %v1577 = vmul.f32 %v520, %v1522
    %v1578 = vmul.f32 %v620, %v1522
    %v1579 = vmul.f32 %v523, %v1522
    %v1580 = vmul.f32 %v621, %v1522
    %v1581 = vmul.f32 %v526, %v1522
    %v1582 = vmul.f32 %v622, %v1522
    %v1583 = vadd.f32 %v1459, %v1523
    %v1584 = vadd.f32 %v1460, %v1524
    %v1585 = vadd.f32 %v1461, %v1525
    %v1586 = vadd.f32 %v1462, %v1526
    %v1587 = vadd.f32 %v1463, %v1527
    %v1588 = vadd.f32 %v1464, %v1528
    %v1589 = vadd.f32 %v1465, %v1529
    %v1590 = vadd.f32 %v1466, %v1530
    %v1591 = vadd.f32 %v1467, %v1531
    %v1592 = vadd.f32 %v1468, %v1532
    %v1593 = vadd.f32 %v1469, %v1533
    %v1594 = vadd.f32 %v1470, %v1534
    %v1595 = vadd.f32 %v1471, %v1535
    %v1596 = vadd.f32 %v1472, %v1536
    %v1597 = vadd.f32 %v1473, %v1537
    %v1598 = vadd.f32 %v1474, %v1538
    %v1599 = vadd.f32 %v1475, %v1539
    %v1600 = vadd.f32 %v1476, %v1540
    %v1601 = vadd.f32 %v1477, %v1541
    %v1602 = vadd.f32 %v1478, %v1542
    %v1603 = vadd.f32 %v1479, %v1543
    %v1604 = vadd.f32 %v1480, %v1544
    %v1605 = vadd.f32 %v1481, %v1545
    %v1606 = vadd.f32 %v1482, %v1546
    %v1607 = vadd.f32 %v1483, %v1547
    %v1608 = vadd.f32 %v1484, %v1548
    %v1609 = vadd.f32 %v1485, %v1549
    %v1610 = vadd.f32 %v1486, %v1550
    %v1611 = vadd.f32 %v1487, %v1551
    %v1612 = vadd.f32 %v1488, %v1552
    %v1613 = vadd.f32 %v1489, %v1553
    %v1614 = vadd.f32 %v1490, %v1554
    %v1615 = vadd.f32 %v1491, %v1555
    %v1616 = vadd.f32 %v1492, %v1556
    %v1617 = vadd.f32 %v1493, %v1557
    %v1618 = vadd.f32 %v1494, %v1558
    %v1619 = vadd.f32 %v1495, %v1559
    %v1620 = vadd.f32 %v1496, %v1560
    %v1621 = vadd.f32 %v1497, %v1561
    %v1622 = vadd.f32 %v1498, %v1562
    %v1623 = vadd.f32 %v1499, %v1563
    %v1624 = vadd.f32 %v1500, %v1564
    %v1625 = vadd.f32 %v1501, %v1565
    %v1626 = vadd.f32 %v1502, %v1566
    %v1627 = vadd.f32 %v1503, %v1567
    %v1628 = vadd.f32 %v1504, %v1568
    %v1629 = vadd.f32 %v1505, %v1569
    %v1630 = vadd.f32 %v1506, %v1570
    %v1631 = vadd.f32 %v1507, %v1571
    %v1632 = vadd.f32 %v1508, %v1572
    %v1633 = vadd.f32 %v1509, %v1573
    %v1634 = vadd.f32 %v1510, %v1574
    %v1635 = vadd.f32 %v1511, %v1575
    %v1636 = vadd.f32 %v1512, %v1576
    %v1637 = vadd.f32 %v1513, %v1577
    %v1638 = vadd.f32 %v1514, %v1578
    %v1639 = vadd.f32 %v1515, %v1579
    %v1640 = vadd.f32 %v1516, %v1580
    %v1641 = vadd.f32 %v1517, %v1581
    %v1642 = vadd.f32 %v1518, %v1582
    %v1643 = vadd.f32 %v1267, %v1583
    %v1644 = vadd.f32 %v1268, %v1584
    %v1645 = vadd.f32 %v1269, %v1585
    %v1646 = vadd.f32 %v1270, %v1586
    %v1647 = vadd.f32 %v1271, %v1587
    %v1648 = vadd.f32 %v1272, %v1588
    %v1649 = vadd.f32 %v1273, %v1589
    %v1650 = vadd.f32 %v1274, %v1590
    %v1651 = vadd.f32 %v1275, %v1591
    %v1652 = vadd.f32 %v1276, %v1592
    %v1653 = vadd.f32 %v1277, %v1593
    %v1654 = vadd.f32 %v1278, %v1594
    %v1655 = vadd.f32 %v1279, %v1595
    %v1656 = vadd.f32 %v1280, %v1596
    %v1657 = vadd.f32 %v1281, %v1597
    %v1658 = vadd.f32 %v1282, %v1598
    %v1659 = vadd.f32 %v1283, %v1599
    %v1660 = vadd.f32 %v1284, %v1600
    %v1661 = vadd.f32 %v1285, %v1601
    %v1662 = vadd.f32 %v1286, %v1602
    %v1663 = vadd.f32 %v1287, %v1603
    %v1664 = vadd.f32 %v1288, %v1604
    %v1665 = vadd.f32 %v1289, %v1605
    %v1666 = vadd.f32 %v1290, %v1606
    %v1667 = vadd.f32 %v1291, %v1607
    %v1668 = vadd.f32 %v1292, %v1608
    %v1669 = vadd.f32 %v1293, %v1609
    %v1670 = vadd.f32 %v1294, %v1610
    %v1671 = vadd.f32 %v1295, %v1611
    %v1672 = vadd.f32 %v1296, %v1612
    %v1673 = vadd.f32 %v1297, 0.0
    %v1674 = vadd.f32 %v1298, 0.0
    %v1675 = vadd.f32 %v1299, %v1613
    %v1676 = vadd.f32 %v1300, %v1614
    %v1677 = vadd.f32 %v1301, %v1615
    %v1678 = vadd.f32 %v1302, %v1616
    %v1679 = vadd.f32 %v1303, %v1617
    %v1680 = vadd.f32 %v1304, %v1618
    %v1681 = vadd.f32 %v1305, %v1619
    %v1682 = vadd.f32 %v1306, %v1620
    %v1683 = vadd.f32 %v1307, %v1621
    %v1684 = vadd.f32 %v1308, %v1622
    %v1685 = vadd.f32 %v1309, %v1623
    %v1686 = vadd.f32 %v1310, %v1624
    %v1687 = vadd.f32 %v1311, %v1625
    %v1688 = vadd.f32 %v1312, %v1626
    %v1689 = vadd.f32 %v1313, %v1627
    %v1690 = vadd.f32 %v1314, %v1628
    %v1691 = vadd.f32 %v1315, %v1629
    %v1692 = vadd.f32 %v1316, %v1630
    %v1693 = vadd.f32 %v1317, %v1631
    %v1694 = vadd.f32 %v1318, %v1632
    %v1695 = vadd.f32 %v1319, %v1633
    %v1696 = vadd.f32 %v1320, %v1634
    %v1697 = vadd.f32 %v1321, %v1635
    %v1698 = vadd.f32 %v1322, %v1636
    %v1699 = vadd.f32 %v1323, %v1637
    %v1700 = vadd.f32 %v1324, %v1638
    %v1701 = vadd.f32 %v1325, %v1639
    %v1702 = vadd.f32 %v1326, %v1640
    %v1703 = vadd.f32 %v1327, %v1641
    %v1704 = vadd.f32 %v1328, %v1642
    %v1705 = vadd.f32 %v1329, 0.0
    %v1706 = vadd.f32 %v1330, 0.0
    %v1707 = vpack.c.bf16 %v1644, %v1643
    %v1708 = vpack.c.bf16 %v1646, %v1645
    %v1709 = vpack.c.bf16 %v1648, %v1647
    %v1710 = vpack.c.bf16 %v1650, %v1649
    %v1711 = vpack.c.bf16 %v1652, %v1651
    %v1712 = vpack.c.bf16 %v1654, %v1653
    %v1713 = vpack.c.bf16 %v1656, %v1655
    %v1714 = vpack.c.bf16 %v1658, %v1657
    %v1715 = vpack.c.bf16 %v1660, %v1659
    %v1716 = vpack.c.bf16 %v1662, %v1661
    %v1717 = vpack.c.bf16 %v1664, %v1663
    %v1718 = vpack.c.bf16 %v1666, %v1665
    %v1719 = vpack.c.bf16 %v1668, %v1667
    %v1720 = vpack.c.bf16 %v1670, %v1669
    %v1721 = vpack.c.bf16 %v1672, %v1671
    %v1722 = vpack.c.bf16 %v1674, %v1673
    %v1723 = vpack.c.bf16 %v1676, %v1675
    %v1724 = vpack.c.bf16 %v1678, %v1677
    %v1725 = vpack.c.bf16 %v1680, %v1679
    %v1726 = vpack.c.bf16 %v1682, %v1681
    %v1727 = vpack.c.bf16 %v1684, %v1683
    %v1728 = vpack.c.bf16 %v1686, %v1685
    %v1729 = vpack.c.bf16 %v1688, %v1687
    %v1730 = vpack.c.bf16 %v1690, %v1689
    %v1731 = vpack.c.bf16 %v1692, %v1691
    %v1732 = vpack.c.bf16 %v1694, %v1693
    %v1733 = vpack.c.bf16 %v1696, %v1695
    %v1734 = vpack.c.bf16 %v1698, %v1697
    %v1735 = vpack.c.bf16 %v1700, %v1699
    %v1736 = vpack.c.bf16 %v1702, %v1701
    %v1737 = vpack.c.bf16 %v1704, %v1703
    %v1738 = vpack.c.bf16 %v1706, %v1705
    %v1739 = vld [vmem:[%s2] sm:$0xf]
    %v1740 = vpack.c.bf16 %v1739, %v1739
    %vm1741 = vcmask 31744
    %v1743 = vsel %vm1741, %v1707, 0
    %v1746 = vsel %vm1741, %v1708, 0
    %v1749 = vsel %vm1741, %v1709, 0
    %v1752 = vsel %vm1741, %v1710, 0
    %v1755 = vsel %vm1741, %v1711, 0
    %v1758 = vsel %vm1741, %v1712, 0
    %v1761 = vsel %vm1741, %v1713, 0
    %v1764 = vsel %vm1741, %v1714, 0
    %v1767 = vsel %vm1741, %v1715, 0
    %v1770 = vsel %vm1741, %v1716, 0
    %v1773 = vsel %vm1741, %v1717, 0
    %v1776 = vsel %vm1741, %v1718, 0
    %v1779 = vsel %vm1741, %v1719, 0
    %v1782 = vsel %vm1741, %v1720, 0
    %v1785 = vsel %vm1741, %v1721, 0
    %v1788 = vsel %vm1741, %v1722, 0
    %v1791 = vsel %vm1741, %v1723, 0
    %v1794 = vsel %vm1741, %v1724, 0
    %v1797 = vsel %vm1741, %v1725, 0
    %v1800 = vsel %vm1741, %v1726, 0
    %v1803 = vsel %vm1741, %v1727, 0
    %v1806 = vsel %vm1741, %v1728, 0
    %v1809 = vsel %vm1741, %v1729, 0
    %v1812 = vsel %vm1741, %v1730, 0
    %v1815 = vsel %vm1741, %v1731, 0
    %v1818 = vsel %vm1741, %v1732, 0
    %v1821 = vsel %vm1741, %v1733, 0
    %v1824 = vsel %vm1741, %v1734, 0
    %v1827 = vsel %vm1741, %v1735, 0
    %v1830 = vsel %vm1741, %v1736, 0
    %v1833 = vsel %vm1741, %v1737, 0
    %v1836 = vsel %vm1741, %v1738, 0
    %vm1838 = vcmask 1041408
    %v1840 = vsel %vm1838, %v1740, 0
    %1842 = vmatprep.subr.bf16.mxu0 0
    %1843 = vmatpush1.bf16.msra.mxu0 0
    %1844 = vmatprep.subr.bf16.mxu0 0
    %1845 = vmatpush1.bf16.msra.mxu0 0
    %1846 = vmatprep.subr.bf16.mxu0 0
    %1847 = vmatpush1.bf16.msra.mxu0 0
    %1848 = vmatprep.subr.bf16.mxu0 0
    %1849 = vmatpush1.bf16.msra.mxu0 0
    %1850 = vmatprep.subr.bf16.mxu0 0
    %1851 = vmatpush1.bf16.msra.mxu0 0
    %1852 = vmatprep.subr.bf16.mxu0 0
    %1853 = vmatpush1.bf16.msra.mxu0 0
    %1854 = vmatprep.subr.bf16.mxu0 0
    %1855 = vmatpush1.bf16.msra.mxu0 0
    %1856 = vmatprep.subr.bf16.mxu0 0
    %1857 = vmatpush1.bf16.msra.mxu0 %v1840
    %1858 = vmatprep.subr.bf16.mxu0 0
    %1859 = vmatpush2.bf16.msra.mxu0 0
    %1860 = vmatprep.subr.bf16.mxu0 0
    %1861 = vmatpush2.bf16.msra.mxu0 0
    %1862 = vmatprep.subr.bf16.mxu0 0
    %1863 = vmatpush2.bf16.msra.mxu0 0
    %1864 = vmatprep.subr.bf16.mxu0 0
    %1865 = vmatpush2.bf16.msra.mxu0 0
    %1866 = vmatprep.subr.bf16.mxu0 0
    %1867 = vmatpush2.bf16.msra.mxu0 0
    %1868 = vmatprep.subr.bf16.mxu0 0
    %1869 = vmatpush2.bf16.msra.mxu0 0
    %1870 = vmatprep.subr.bf16.mxu0 0
    %1871 = vmatpush2.bf16.msra.mxu0 0
    %1872 = vmatprep.subr.bf16.mxu0 0
    %1873 = vmatpush2.bf16.msra.mxu0 0
    %1874 = vmatprep.mubr.bf16.mxu0 0
    %1875 = vmatmul.mubr.bf16.gmra.mxu0 %v1743
    %v1876 = vpop.f32.mrf.mxu0
    %v1877 = vadd.f32 0.0, %v1876
    %v1878 = vpop.f32.mrf.mxu0
    %v1879 = vpop.f32.mrf.mxu0
    %v1880 = vadd.f32 0.0, %v1879
    %v1881 = vpop.f32.mrf.mxu0
    %1882 = vmatprep.mubr.bf16.mxu0 0
    %1883 = vmatmul.mubr.bf16.gmra.mxu0 %v1746
    %v1884 = vpop.f32.mrf.mxu0
    %v1885 = vadd.f32 0.0, %v1884
    %v1886 = vpop.f32.mrf.mxu0
    %v1887 = vpop.f32.mrf.mxu0
    %v1888 = vadd.f32 0.0, %v1887
    %v1889 = vpop.f32.mrf.mxu0
    %1890 = vmatprep.mubr.bf16.mxu0 0
    %1891 = vmatmul.mubr.bf16.gmra.mxu0 %v1749
    %v1892 = vpop.f32.mrf.mxu0
    %v1893 = vadd.f32 0.0, %v1892
    %v1894 = vpop.f32.mrf.mxu0
    %v1895 = vpop.f32.mrf.mxu0
    %v1896 = vadd.f32 0.0, %v1895
    %v1897 = vpop.f32.mrf.mxu0
    %1898 = vmatprep.mubr.bf16.mxu0 0
    %1899 = vmatmul.mubr.bf16.gmra.mxu0 %v1752
    %v1900 = vpop.f32.mrf.mxu0
    %v1901 = vadd.f32 0.0, %v1900
    %v1902 = vpop.f32.mrf.mxu0
    %v1903 = vpop.f32.mrf.mxu0
    %v1904 = vadd.f32 0.0, %v1903
    %v1905 = vpop.f32.mrf.mxu0
    %1906 = vmatprep.mubr.bf16.mxu0 0
    %1907 = vmatmul.mubr.bf16.gmra.mxu0 %v1755
    %v1908 = vpop.f32.mrf.mxu0
    %v1909 = vadd.f32 0.0, %v1908
    %v1910 = vpop.f32.mrf.mxu0
    %v1911 = vpop.f32.mrf.mxu0
    %v1912 = vadd.f32 0.0, %v1911
    %v1913 = vpop.f32.mrf.mxu0
    %1914 = vmatprep.mubr.bf16.mxu0 0
    %1915 = vmatmul.mubr.bf16.gmra.mxu0 %v1758
    %v1916 = vpop.f32.mrf.mxu0
    %v1917 = vadd.f32 0.0, %v1916
    %v1918 = vpop.f32.mrf.mxu0
    %v1919 = vpop.f32.mrf.mxu0
    %v1920 = vadd.f32 0.0, %v1919
    %v1921 = vpop.f32.mrf.mxu0
    %1922 = vmatprep.mubr.bf16.mxu0 0
    %1923 = vmatmul.mubr.bf16.gmra.mxu0 %v1761
    %v1924 = vpop.f32.mrf.mxu0
    %v1925 = vadd.f32 0.0, %v1924
    %v1926 = vpop.f32.mrf.mxu0
    %v1927 = vpop.f32.mrf.mxu0
    %v1928 = vadd.f32 0.0, %v1927
    %v1929 = vpop.f32.mrf.mxu0
    %1930 = vmatprep.mubr.bf16.mxu0 0
    %1931 = vmatmul.mubr.bf16.gmra.mxu0 %v1764
    %v1932 = vpop.f32.mrf.mxu0
    %v1933 = vadd.f32 0.0, %v1932
    %v1934 = vpop.f32.mrf.mxu0
    %v1935 = vpop.f32.mrf.mxu0
    %v1936 = vadd.f32 0.0, %v1935
    %v1937 = vpop.f32.mrf.mxu0
    %1938 = vmatprep.mubr.bf16.mxu0 0
    %1939 = vmatmul.mubr.bf16.gmra.mxu0 %v1767
    %v1940 = vpop.f32.mrf.mxu0
    %v1941 = vadd.f32 0.0, %v1940
    %v1942 = vpop.f32.mrf.mxu0
    %v1943 = vpop.f32.mrf.mxu0
    %v1944 = vadd.f32 0.0, %v1943
    %v1945 = vpop.f32.mrf.mxu0
    %1946 = vmatprep.mubr.bf16.mxu0 0
    %1947 = vmatmul.mubr.bf16.gmra.mxu0 %v1770
    %v1948 = vpop.f32.mrf.mxu0
    %v1949 = vadd.f32 0.0, %v1948
    %v1950 = vpop.f32.mrf.mxu0
    %v1951 = vpop.f32.mrf.mxu0
    %v1952 = vadd.f32 0.0, %v1951
    %v1953 = vpop.f32.mrf.mxu0
    %1954 = vmatprep.mubr.bf16.mxu0 0
    %1955 = vmatmul.mubr.bf16.gmra.mxu0 %v1773
    %v1956 = vpop.f32.mrf.mxu0
    %v1957 = vadd.f32 0.0, %v1956
    %v1958 = vpop.f32.mrf.mxu0
    %v1959 = vpop.f32.mrf.mxu0
    %v1960 = vadd.f32 0.0, %v1959
    %v1961 = vpop.f32.mrf.mxu0
    %1962 = vmatprep.mubr.bf16.mxu0 0
    %1963 = vmatmul.mubr.bf16.gmra.mxu0 %v1776
    %v1964 = vpop.f32.mrf.mxu0
    %v1965 = vadd.f32 0.0, %v1964
    %v1966 = vpop.f32.mrf.mxu0
    %v1967 = vpop.f32.mrf.mxu0
    %v1968 = vadd.f32 0.0, %v1967
    %v1969 = vpop.f32.mrf.mxu0
    %1970 = vmatprep.mubr.bf16.mxu0 0
    %1971 = vmatmul.mubr.bf16.gmra.mxu0 %v1779
    %v1972 = vpop.f32.mrf.mxu0
    %v1973 = vadd.f32 0.0, %v1972
    %v1974 = vpop.f32.mrf.mxu0
    %v1975 = vpop.f32.mrf.mxu0
    %v1976 = vadd.f32 0.0, %v1975
    %v1977 = vpop.f32.mrf.mxu0
    %1978 = vmatprep.mubr.bf16.mxu0 0
    %1979 = vmatmul.mubr.bf16.gmra.mxu0 %v1782
    %v1980 = vpop.f32.mrf.mxu0
    %v1981 = vadd.f32 0.0, %v1980
    %v1982 = vpop.f32.mrf.mxu0
    %v1983 = vpop.f32.mrf.mxu0
    %v1984 = vadd.f32 0.0, %v1983
    %v1985 = vpop.f32.mrf.mxu0
    %1986 = vmatprep.mubr.bf16.mxu0 0
    %1987 = vmatmul.mubr.bf16.gmra.mxu0 %v1785
    %v1988 = vpop.f32.mrf.mxu0
    %v1989 = vadd.f32 0.0, %v1988
    %v1990 = vpop.f32.mrf.mxu0
    %v1991 = vpop.f32.mrf.mxu0
    %v1992 = vadd.f32 0.0, %v1991
    %v1993 = vpop.f32.mrf.mxu0
    %1994 = vmatprep.mubr.bf16.mxu0 0
    %1995 = vmatmul.mubr.bf16.gmra.mxu0 %v1788
    %v1996 = vpop.f32.mrf.mxu0
    %v1997 = vadd.f32 0.0, %v1996
    %v1998 = vpop.f32.mrf.mxu0
    %v1999 = vpop.f32.mrf.mxu0
    %v2000 = vadd.f32 0.0, %v1999
    %v2001 = vpop.f32.mrf.mxu0
    %2002 = vmatprep.mubr.bf16.mxu0 0
    %2003 = vmatmul.mubr.bf16.gmra.mxu0 %v1791
    %v2004 = vpop.f32.mrf.mxu0
    %v2005 = vadd.f32 0.0, %v2004
    %v2006 = vpop.f32.mrf.mxu0
    %v2007 = vpop.f32.mrf.mxu0
    %v2008 = vadd.f32 0.0, %v2007
    %v2009 = vpop.f32.mrf.mxu0
    %2010 = vmatprep.mubr.bf16.mxu0 0
    %2011 = vmatmul.mubr.bf16.gmra.mxu0 %v1794
    %v2012 = vpop.f32.mrf.mxu0
    %v2013 = vadd.f32 0.0, %v2012
    %v2014 = vpop.f32.mrf.mxu0
    %v2015 = vpop.f32.mrf.mxu0
    %v2016 = vadd.f32 0.0, %v2015
    %v2017 = vpop.f32.mrf.mxu0
    %2018 = vmatprep.mubr.bf16.mxu0 0
    %2019 = vmatmul.mubr.bf16.gmra.mxu0 %v1797
    %v2020 = vpop.f32.mrf.mxu0
    %v2021 = vadd.f32 0.0, %v2020
    %v2022 = vpop.f32.mrf.mxu0
    %v2023 = vpop.f32.mrf.mxu0
    %v2024 = vadd.f32 0.0, %v2023
    %v2025 = vpop.f32.mrf.mxu0
    %2026 = vmatprep.mubr.bf16.mxu0 0
    %2027 = vmatmul.mubr.bf16.gmra.mxu0 %v1800
    %v2028 = vpop.f32.mrf.mxu0
    %v2029 = vadd.f32 0.0, %v2028
    %v2030 = vpop.f32.mrf.mxu0
    %v2031 = vpop.f32.mrf.mxu0
    %v2032 = vadd.f32 0.0, %v2031
    %v2033 = vpop.f32.mrf.mxu0
    %2034 = vmatprep.mubr.bf16.mxu0 0
    %2035 = vmatmul.mubr.bf16.gmra.mxu0 %v1803
    %v2036 = vpop.f32.mrf.mxu0
    %v2037 = vadd.f32 0.0, %v2036
    %v2038 = vpop.f32.mrf.mxu0
    %v2039 = vpop.f32.mrf.mxu0
    %v2040 = vadd.f32 0.0, %v2039
    %v2041 = vpop.f32.mrf.mxu0
    %2042 = vmatprep.mubr.bf16.mxu0 0
    %2043 = vmatmul.mubr.bf16.gmra.mxu0 %v1806
    %v2044 = vpop.f32.mrf.mxu0
    %v2045 = vadd.f32 0.0, %v2044
    %v2046 = vpop.f32.mrf.mxu0
    %v2047 = vpop.f32.mrf.mxu0
    %v2048 = vadd.f32 0.0, %v2047
    %v2049 = vpop.f32.mrf.mxu0
    %2050 = vmatprep.mubr.bf16.mxu0 0
    %2051 = vmatmul.mubr.bf16.gmra.mxu0 %v1809
    %v2052 = vpop.f32.mrf.mxu0
    %v2053 = vadd.f32 0.0, %v2052
    %v2054 = vpop.f32.mrf.mxu0
    %v2055 = vpop.f32.mrf.mxu0
    %v2056 = vadd.f32 0.0, %v2055
    %v2057 = vpop.f32.mrf.mxu0
    %2058 = vmatprep.mubr.bf16.mxu0 0
    %2059 = vmatmul.mubr.bf16.gmra.mxu0 %v1812
    %v2060 = vpop.f32.mrf.mxu0
    %v2061 = vadd.f32 0.0, %v2060
    %v2062 = vpop.f32.mrf.mxu0
    %v2063 = vpop.f32.mrf.mxu0
    %v2064 = vadd.f32 0.0, %v2063
    %v2065 = vpop.f32.mrf.mxu0
    %2066 = vmatprep.mubr.bf16.mxu0 0
    %2067 = vmatmul.mubr.bf16.gmra.mxu0 %v1815
    %v2068 = vpop.f32.mrf.mxu0
    %v2069 = vadd.f32 0.0, %v2068
    %v2070 = vpop.f32.mrf.mxu0
    %v2071 = vpop.f32.mrf.mxu0
    %v2072 = vadd.f32 0.0, %v2071
    %v2073 = vpop.f32.mrf.mxu0
    %2074 = vmatprep.mubr.bf16.mxu0 0
    %2075 = vmatmul.mubr.bf16.gmra.mxu0 %v1818
    %v2076 = vpop.f32.mrf.mxu0
    %v2077 = vadd.f32 0.0, %v2076
    %v2078 = vpop.f32.mrf.mxu0
    %v2079 = vpop.f32.mrf.mxu0
    %v2080 = vadd.f32 0.0, %v2079
    %v2081 = vpop.f32.mrf.mxu0
    %2082 = vmatprep.mubr.bf16.mxu0 0
    %2083 = vmatmul.mubr.bf16.gmra.mxu0 %v1821
    %v2084 = vpop.f32.mrf.mxu0
    %v2085 = vadd.f32 0.0, %v2084
    %v2086 = vpop.f32.mrf.mxu0
    %v2087 = vpop.f32.mrf.mxu0
    %v2088 = vadd.f32 0.0, %v2087
    %v2089 = vpop.f32.mrf.mxu0
    %2090 = vmatprep.mubr.bf16.mxu0 0
    %2091 = vmatmul.mubr.bf16.gmra.mxu0 %v1824
    %v2092 = vpop.f32.mrf.mxu0
    %v2093 = vadd.f32 0.0, %v2092
    %v2094 = vpop.f32.mrf.mxu0
    %v2095 = vpop.f32.mrf.mxu0
    %v2096 = vadd.f32 0.0, %v2095
    %v2097 = vpop.f32.mrf.mxu0
    %2098 = vmatprep.mubr.bf16.mxu0 0
    %2099 = vmatmul.mubr.bf16.gmra.mxu0 %v1827
    %v2100 = vpop.f32.mrf.mxu0
    %v2101 = vadd.f32 0.0, %v2100
    %v2102 = vpop.f32.mrf.mxu0
    %v2103 = vpop.f32.mrf.mxu0
    %v2104 = vadd.f32 0.0, %v2103
    %v2105 = vpop.f32.mrf.mxu0
    %2106 = vmatprep.mubr.bf16.mxu0 0
    %2107 = vmatmul.mubr.bf16.gmra.mxu0 %v1830
    %v2108 = vpop.f32.mrf.mxu0
    %v2109 = vadd.f32 0.0, %v2108
    %v2110 = vpop.f32.mrf.mxu0
    %v2111 = vpop.f32.mrf.mxu0
    %v2112 = vadd.f32 0.0, %v2111
    %v2113 = vpop.f32.mrf.mxu0
    %2114 = vmatprep.mubr.bf16.mxu0 0
    %2115 = vmatmul.mubr.bf16.gmra.mxu0 %v1833
    %v2116 = vpop.f32.mrf.mxu0
    %v2117 = vadd.f32 0.0, %v2116
    %v2118 = vpop.f32.mrf.mxu0
    %v2119 = vpop.f32.mrf.mxu0
    %v2120 = vadd.f32 0.0, %v2119
    %v2121 = vpop.f32.mrf.mxu0
    %2122 = vmatprep.mubr.bf16.mxu0 0
    %2123 = vmatmul.mubr.bf16.gmra.mxu0 %v1836
    %v2124 = vpop.f32.mrf.mxu0
    %v2125 = vadd.f32 0.0, %v2124
    %v2126 = vpop.f32.mrf.mxu0
    %v2127 = vpop.f32.mrf.mxu0
    %v2128 = vadd.f32 0.0, %v2127
    %v2129 = vpop.f32.mrf.mxu0
    %2130 = vdwg.mxu0
    %v2131 = vld [vmem:[%s3] sm:$0x1]
    %v2132 = vld [vmem:[%s4] sm:$0x1]
    %vm2133 = vcmask 64512
    %v2134 = vsel %vm2133, %v1877, 0.0
    %v2135 = vsel %vm2133, %v1880, 0.0
    %v2136 = vadd.f32 %v2134, %v2135
    %v2137 = vsel %vm2133, %v1885, 0.0
    %v2138 = vadd.f32 %v2136, %v2137
    %v2139 = vsel %vm2133, %v1888, 0.0
    %v2140 = vadd.f32 %v2138, %v2139
    %v2141 = vsel %vm2133, %v1893, 0.0
    %v2142 = vadd.f32 %v2140, %v2141
    %v2143 = vsel %vm2133, %v1896, 0.0
    %v2144 = vadd.f32 %v2142, %v2143
    %v2145 = vsel %vm2133, %v1901, 0.0
    %v2146 = vadd.f32 %v2144, %v2145
    %v2147 = vsel %vm2133, %v1904, 0.0
    %v2148 = vadd.f32 %v2146, %v2147
    %v2149 = vsel %vm2133, %v1909, 0.0
    %v2150 = vadd.f32 %v2148, %v2149
    %v2151 = vsel %vm2133, %v1912, 0.0
    %v2152 = vadd.f32 %v2150, %v2151
    %v2153 = vsel %vm2133, %v1917, 0.0
    %v2154 = vadd.f32 %v2152, %v2153
    %v2155 = vsel %vm2133, %v1920, 0.0
    %v2156 = vadd.f32 %v2154, %v2155
    %v2157 = vsel %vm2133, %v1925, 0.0
    %v2158 = vadd.f32 %v2156, %v2157
    %v2159 = vsel %vm2133, %v1928, 0.0
    %v2160 = vadd.f32 %v2158, %v2159
    %v2161 = vsel %vm2133, %v1933, 0.0
    %v2162 = vadd.f32 %v2160, %v2161
    %v2163 = vsel %vm2133, %v1936, 0.0
    %v2164 = vadd.f32 %v2162, %v2163
    %v2165 = vsel %vm2133, %v1941, 0.0
    %v2166 = vadd.f32 %v2164, %v2165
    %v2167 = vsel %vm2133, %v1944, 0.0
    %v2168 = vadd.f32 %v2166, %v2167
    %v2169 = vsel %vm2133, %v1949, 0.0
    %v2170 = vadd.f32 %v2168, %v2169
    %v2171 = vsel %vm2133, %v1952, 0.0
    %v2172 = vadd.f32 %v2170, %v2171
    %v2173 = vsel %vm2133, %v1957, 0.0
    %v2174 = vadd.f32 %v2172, %v2173
    %v2175 = vsel %vm2133, %v1960, 0.0
    %v2176 = vadd.f32 %v2174, %v2175
    %v2177 = vsel %vm2133, %v1965, 0.0
    %v2178 = vadd.f32 %v2176, %v2177
    %v2179 = vsel %vm2133, %v1968, 0.0
    %v2180 = vadd.f32 %v2178, %v2179
    %v2181 = vsel %vm2133, %v1973, 0.0
    %v2182 = vadd.f32 %v2180, %v2181
    %v2183 = vsel %vm2133, %v1976, 0.0
    %v2184 = vadd.f32 %v2182, %v2183
    %v2185 = vsel %vm2133, %v1981, 0.0
    %v2186 = vadd.f32 %v2184, %v2185
    %v2187 = vsel %vm2133, %v1984, 0.0
    %v2188 = vadd.f32 %v2186, %v2187
    %v2189 = vsel %vm2133, %v1989, 0.0
    %v2190 = vadd.f32 %v2188, %v2189
    %v2191 = vsel %vm2133, %v1992, 0.0
    %v2192 = vadd.f32 %v2190, %v2191
    %v2193 = vsel %vm2133, %v1997, 0.0
    %v2194 = vadd.f32 %v2192, %v2193
    %v2195 = vsel %vm2133, %v2000, 0.0
    %v2196 = vadd.f32 %v2194, %v2195
    %v2197 = vsel %vm2133, %v2005, 0.0
    %v2198 = vadd.f32 %v2196, %v2197
    %v2199 = vsel %vm2133, %v2008, 0.0
    %v2200 = vadd.f32 %v2198, %v2199
    %v2201 = vsel %vm2133, %v2013, 0.0
    %v2202 = vadd.f32 %v2200, %v2201
    %v2203 = vsel %vm2133, %v2016, 0.0
    %v2204 = vadd.f32 %v2202, %v2203
    %v2205 = vsel %vm2133, %v2021, 0.0
    %v2206 = vadd.f32 %v2204, %v2205
    %v2207 = vsel %vm2133, %v2024, 0.0
    %v2208 = vadd.f32 %v2206, %v2207
    %v2209 = vsel %vm2133, %v2029, 0.0
    %v2210 = vadd.f32 %v2208, %v2209
    %v2211 = vsel %vm2133, %v2032, 0.0
    %v2212 = vadd.f32 %v2210, %v2211
    %v2213 = vsel %vm2133, %v2037, 0.0
    %v2214 = vadd.f32 %v2212, %v2213
    %v2215 = vsel %vm2133, %v2040, 0.0
    %v2216 = vadd.f32 %v2214, %v2215
    %v2217 = vsel %vm2133, %v2045, 0.0
    %v2218 = vadd.f32 %v2216, %v2217
    %v2219 = vsel %vm2133, %v2048, 0.0
    %v2220 = vadd.f32 %v2218, %v2219
    %v2221 = vsel %vm2133, %v2053, 0.0
    %v2222 = vadd.f32 %v2220, %v2221
    %v2223 = vsel %vm2133, %v2056, 0.0
    %v2224 = vadd.f32 %v2222, %v2223
    %v2225 = vsel %vm2133, %v2061, 0.0
    %v2226 = vadd.f32 %v2224, %v2225
    %v2227 = vsel %vm2133, %v2064, 0.0
    %v2228 = vadd.f32 %v2226, %v2227
    %v2229 = vsel %vm2133, %v2069, 0.0
    %v2230 = vadd.f32 %v2228, %v2229
    %v2231 = vsel %vm2133, %v2072, 0.0
    %v2232 = vadd.f32 %v2230, %v2231
    %v2233 = vsel %vm2133, %v2077, 0.0
    %v2234 = vadd.f32 %v2232, %v2233
    %v2235 = vsel %vm2133, %v2080, 0.0
    %v2236 = vadd.f32 %v2234, %v2235
    %v2237 = vsel %vm2133, %v2085, 0.0
    %v2238 = vadd.f32 %v2236, %v2237
    %v2239 = vsel %vm2133, %v2088, 0.0
    %v2240 = vadd.f32 %v2238, %v2239
    %v2241 = vsel %vm2133, %v2093, 0.0
    %v2242 = vadd.f32 %v2240, %v2241
    %v2243 = vsel %vm2133, %v2096, 0.0
    %v2244 = vadd.f32 %v2242, %v2243
    %v2245 = vsel %vm2133, %v2101, 0.0
    %v2246 = vadd.f32 %v2244, %v2245
    %v2247 = vsel %vm2133, %v2104, 0.0
    %v2248 = vadd.f32 %v2246, %v2247
    %v2249 = vsel %vm2133, %v2109, 0.0
    %v2250 = vadd.f32 %v2248, %v2249
    %v2251 = vsel %vm2133, %v2112, 0.0
    %v2252 = vadd.f32 %v2250, %v2251
    %v2253 = vsel %vm2133, %v2117, 0.0
    %v2254 = vadd.f32 %v2252, %v2253
    %v2255 = vsel %vm2133, %v2120, 0.0
    %v2256 = vadd.f32 %v2254, %v2255
    %v2257 = vsel %vm2133, %v2125, 0.0
    %v2258 = vadd.f32 %v2256, %v2257
    %v2259 = vsel %vm2133, %v2128, 0.0
    %v2260 = vadd.f32 %v2258, %v2259
    %v2261 = vrot.slane %v2260, 4
    %v2262 = vadd.f32 %v2260, %v2261
    %v2263 = vrot.slane %v2262, 2
    %v2264 = vadd.f32 %v2262, %v2263
    %v2265 = vrot.slane %v2264, 1
    %v2266 = vadd.f32 %v2264, %v2265
    %v2267 = vmul.f32 %v1877, %v1877
    %v2268 = vmul.f32 %v1880, %v1880
    %v2269 = vmul.f32 %v1885, %v1885
    %v2270 = vmul.f32 %v1888, %v1888
    %v2271 = vmul.f32 %v1893, %v1893
    %v2272 = vmul.f32 %v1896, %v1896
    %v2273 = vmul.f32 %v1901, %v1901
    %v2274 = vmul.f32 %v1904, %v1904
    %v2275 = vmul.f32 %v1909, %v1909
    %v2276 = vmul.f32 %v1912, %v1912
    %v2277 = vmul.f32 %v1917, %v1917
    %v2278 = vmul.f32 %v1920, %v1920
    %v2279 = vmul.f32 %v1925, %v1925
    %v2280 = vmul.f32 %v1928, %v1928
    %v2281 = vmul.f32 %v1933, %v1933
    %v2282 = vmul.f32 %v1936, %v1936
    %v2283 = vmul.f32 %v1941, %v1941
    %v2284 = vmul.f32 %v1944, %v1944
    %v2285 = vmul.f32 %v1949, %v1949
    %v2286 = vmul.f32 %v1952, %v1952
    %v2287 = vmul.f32 %v1957, %v1957
    %v2288 = vmul.f32 %v1960, %v1960
    %v2289 = vmul.f32 %v1965, %v1965
    %v2290 = vmul.f32 %v1968, %v1968
    %v2291 = vmul.f32 %v1973, %v1973
    %v2292 = vmul.f32 %v1976, %v1976
    %v2293 = vmul.f32 %v1981, %v1981
    %v2294 = vmul.f32 %v1984, %v1984
    %v2295 = vmul.f32 %v1989, %v1989
    %v2296 = vmul.f32 %v1992, %v1992
    %v2297 = vmul.f32 %v1997, %v1997
    %v2298 = vmul.f32 %v2000, %v2000
    %v2299 = vmul.f32 %v2005, %v2005
    %v2300 = vmul.f32 %v2008, %v2008
    %v2301 = vmul.f32 %v2013, %v2013
    %v2302 = vmul.f32 %v2016, %v2016
    %v2303 = vmul.f32 %v2021, %v2021
    %v2304 = vmul.f32 %v2024, %v2024
    %v2305 = vmul.f32 %v2029, %v2029
    %v2306 = vmul.f32 %v2032, %v2032
    %v2307 = vmul.f32 %v2037, %v2037
    %v2308 = vmul.f32 %v2040, %v2040
    %v2309 = vmul.f32 %v2045, %v2045
    %v2310 = vmul.f32 %v2048, %v2048
    %v2311 = vmul.f32 %v2053, %v2053
    %v2312 = vmul.f32 %v2056, %v2056
    %v2313 = vmul.f32 %v2061, %v2061
    %v2314 = vmul.f32 %v2064, %v2064
    %v2315 = vmul.f32 %v2069, %v2069
    %v2316 = vmul.f32 %v2072, %v2072
    %v2317 = vmul.f32 %v2077, %v2077
    %v2318 = vmul.f32 %v2080, %v2080
    %v2319 = vmul.f32 %v2085, %v2085
    %v2320 = vmul.f32 %v2088, %v2088
    %v2321 = vmul.f32 %v2093, %v2093
    %v2322 = vmul.f32 %v2096, %v2096
    %v2323 = vmul.f32 %v2101, %v2101
    %v2324 = vmul.f32 %v2104, %v2104
    %v2325 = vmul.f32 %v2109, %v2109
    %v2326 = vmul.f32 %v2112, %v2112
    %v2327 = vmul.f32 %v2117, %v2117
    %v2328 = vmul.f32 %v2120, %v2120
    %v2329 = vmul.f32 %v2125, %v2125
    %v2330 = vmul.f32 %v2128, %v2128
    %v2331 = vsel %vm2133, %v2267, 0.0
    %v2332 = vsel %vm2133, %v2268, 0.0
    %v2333 = vadd.f32 %v2331, %v2332
    %v2334 = vsel %vm2133, %v2269, 0.0
    %v2335 = vadd.f32 %v2333, %v2334
    %v2336 = vsel %vm2133, %v2270, 0.0
    %v2337 = vadd.f32 %v2335, %v2336
    %v2338 = vsel %vm2133, %v2271, 0.0
    %v2339 = vadd.f32 %v2337, %v2338
    %v2340 = vsel %vm2133, %v2272, 0.0
    %v2341 = vadd.f32 %v2339, %v2340
    %v2342 = vsel %vm2133, %v2273, 0.0
    %v2343 = vadd.f32 %v2341, %v2342
    %v2344 = vsel %vm2133, %v2274, 0.0
    %v2345 = vadd.f32 %v2343, %v2344
    %v2346 = vsel %vm2133, %v2275, 0.0
    %v2347 = vadd.f32 %v2345, %v2346
    %v2348 = vsel %vm2133, %v2276, 0.0
    %v2349 = vadd.f32 %v2347, %v2348
    %v2350 = vsel %vm2133, %v2277, 0.0
    %v2351 = vadd.f32 %v2349, %v2350
    %v2352 = vsel %vm2133, %v2278, 0.0
    %v2353 = vadd.f32 %v2351, %v2352
    %v2354 = vsel %vm2133, %v2279, 0.0
    %v2355 = vadd.f32 %v2353, %v2354
    %v2356 = vsel %vm2133, %v2280, 0.0
    %v2357 = vadd.f32 %v2355, %v2356
    %v2358 = vsel %vm2133, %v2281, 0.0
    %v2359 = vadd.f32 %v2357, %v2358
    %v2360 = vsel %vm2133, %v2282, 0.0
    %v2361 = vadd.f32 %v2359, %v2360
    %v2362 = vsel %vm2133, %v2283, 0.0
    %v2363 = vadd.f32 %v2361, %v2362
    %v2364 = vsel %vm2133, %v2284, 0.0
    %v2365 = vadd.f32 %v2363, %v2364
    %v2366 = vsel %vm2133, %v2285, 0.0
    %v2367 = vadd.f32 %v2365, %v2366
    %v2368 = vsel %vm2133, %v2286, 0.0
    %v2369 = vadd.f32 %v2367, %v2368
    %v2370 = vsel %vm2133, %v2287, 0.0
    %v2371 = vadd.f32 %v2369, %v2370
    %v2372 = vsel %vm2133, %v2288, 0.0
    %v2373 = vadd.f32 %v2371, %v2372
    %v2374 = vsel %vm2133, %v2289, 0.0
    %v2375 = vadd.f32 %v2373, %v2374
    %v2376 = vsel %vm2133, %v2290, 0.0
    %v2377 = vadd.f32 %v2375, %v2376
    %v2378 = vsel %vm2133, %v2291, 0.0
    %v2379 = vadd.f32 %v2377, %v2378
    %v2380 = vsel %vm2133, %v2292, 0.0
    %v2381 = vadd.f32 %v2379, %v2380
    %v2382 = vsel %vm2133, %v2293, 0.0
    %v2383 = vadd.f32 %v2381, %v2382
    %v2384 = vsel %vm2133, %v2294, 0.0
    %v2385 = vadd.f32 %v2383, %v2384
    %v2386 = vsel %vm2133, %v2295, 0.0
    %v2387 = vadd.f32 %v2385, %v2386
    %v2388 = vsel %vm2133, %v2296, 0.0
    %v2389 = vadd.f32 %v2387, %v2388
    %v2390 = vsel %vm2133, %v2297, 0.0
    %v2391 = vadd.f32 %v2389, %v2390
    %v2392 = vsel %vm2133, %v2298, 0.0
    %v2393 = vadd.f32 %v2391, %v2392
    %v2394 = vsel %vm2133, %v2299, 0.0
    %v2395 = vadd.f32 %v2393, %v2394
    %v2396 = vsel %vm2133, %v2300, 0.0
    %v2397 = vadd.f32 %v2395, %v2396
    %v2398 = vsel %vm2133, %v2301, 0.0
    %v2399 = vadd.f32 %v2397, %v2398
    %v2400 = vsel %vm2133, %v2302, 0.0
    %v2401 = vadd.f32 %v2399, %v2400
    %v2402 = vsel %vm2133, %v2303, 0.0
    %v2403 = vadd.f32 %v2401, %v2402
    %v2404 = vsel %vm2133, %v2304, 0.0
    %v2405 = vadd.f32 %v2403, %v2404
    %v2406 = vsel %vm2133, %v2305, 0.0
    %v2407 = vadd.f32 %v2405, %v2406
    %v2408 = vsel %vm2133, %v2306, 0.0
    %v2409 = vadd.f32 %v2407, %v2408
    %v2410 = vsel %vm2133, %v2307, 0.0
    %v2411 = vadd.f32 %v2409, %v2410
    %v2412 = vsel %vm2133, %v2308, 0.0
    %v2413 = vadd.f32 %v2411, %v2412
    %v2414 = vsel %vm2133, %v2309, 0.0
    %v2415 = vadd.f32 %v2413, %v2414
    %v2416 = vsel %vm2133, %v2310, 0.0
    %v2417 = vadd.f32 %v2415, %v2416
    %v2418 = vsel %vm2133, %v2311, 0.0
    %v2419 = vadd.f32 %v2417, %v2418
    %v2420 = vsel %vm2133, %v2312, 0.0
    %v2421 = vadd.f32 %v2419, %v2420
    %v2422 = vsel %vm2133, %v2313, 0.0
    %v2423 = vadd.f32 %v2421, %v2422
    %v2424 = vsel %vm2133, %v2314, 0.0
    %v2425 = vadd.f32 %v2423, %v2424
    %v2426 = vsel %vm2133, %v2315, 0.0
    %v2427 = vadd.f32 %v2425, %v2426
    %v2428 = vsel %vm2133, %v2316, 0.0
    %v2429 = vadd.f32 %v2427, %v2428
    %v2430 = vsel %vm2133, %v2317, 0.0
    %v2431 = vadd.f32 %v2429, %v2430
    %v2432 = vsel %vm2133, %v2318, 0.0
    %v2433 = vadd.f32 %v2431, %v2432
    %v2434 = vsel %vm2133, %v2319, 0.0
    %v2435 = vadd.f32 %v2433, %v2434
    %v2436 = vsel %vm2133, %v2320, 0.0
    %v2437 = vadd.f32 %v2435, %v2436
    %v2438 = vsel %vm2133, %v2321, 0.0
    %v2439 = vadd.f32 %v2437, %v2438
    %v2440 = vsel %vm2133, %v2322, 0.0
    %v2441 = vadd.f32 %v2439, %v2440
    %v2442 = vsel %vm2133, %v2323, 0.0
    %v2443 = vadd.f32 %v2441, %v2442
    %v2444 = vsel %vm2133, %v2324, 0.0
    %v2445 = vadd.f32 %v2443, %v2444
    %v2446 = vsel %vm2133, %v2325, 0.0
    %v2447 = vadd.f32 %v2445, %v2446
    %v2448 = vsel %vm2133, %v2326, 0.0
    %v2449 = vadd.f32 %v2447, %v2448
    %v2450 = vsel %vm2133, %v2327, 0.0
    %v2451 = vadd.f32 %v2449, %v2450
    %v2452 = vsel %vm2133, %v2328, 0.0
    %v2453 = vadd.f32 %v2451, %v2452
    %v2454 = vsel %vm2133, %v2329, 0.0
    %v2455 = vadd.f32 %v2453, %v2454
    %v2456 = vsel %vm2133, %v2330, 0.0
    %v2457 = vadd.f32 %v2455, %v2456
    %v2458 = vrot.slane %v2457, 4
    %v2459 = vadd.f32 %v2457, %v2458
    %v2460 = vrot.slane %v2459, 2
    %v2461 = vadd.f32 %v2459, %v2460
    %v2462 = vrot.slane %v2461, 1
    %v2463 = vadd.f32 %v2461, %v2462
    %v2464 = vmul.f32 %v2266, 0.001953125
    %v2465 = vmul.f32 %v2463, 0.001953125
    %v2466 = vmul.f32 %v2464, %v2464
    %v2467 = vsub.f32 %v2465, %v2466
    %v2468 = vmax.f32 %v2467, 0.0
    %v2469 = vadd.f32 %v2468, 1e-05
    %v2470 = vrsqrt.pop %v2469
    %v2471 = vmul.f32 %v2470, %v2131
    %v2472 = vmul.f32 %v2464, %v2471
    %v2473 = vsub.f32 %v2132, %v2472
    %v2474 = vlaneseq
    %v2475 = vshrl.u32 %v2474, 7
    %v2476 = vsub.s32 0, %v2475
    %v2477 = vrot.slane %v2471, %v2476
    %v2478 = vmul.f32 %v1877, %v2477
    %v2479 = vmul.f32 %v1880, %v2477
    %v2480 = vmul.f32 %v1885, %v2477
    %v2481 = vmul.f32 %v1888, %v2477
    %v2482 = vmul.f32 %v1893, %v2477
    %v2483 = vmul.f32 %v1896, %v2477
    %v2484 = vmul.f32 %v1901, %v2477
    %v2485 = vmul.f32 %v1904, %v2477
    %v2486 = vmul.f32 %v1909, %v2477
    %v2487 = vmul.f32 %v1912, %v2477
    %v2488 = vmul.f32 %v1917, %v2477
    %v2489 = vmul.f32 %v1920, %v2477
    %v2490 = vmul.f32 %v1925, %v2477
    %v2491 = vmul.f32 %v1928, %v2477
    %v2492 = vmul.f32 %v1933, %v2477
    %v2493 = vmul.f32 %v1936, %v2477
    %v2494 = vmul.f32 %v1941, %v2477
    %v2495 = vmul.f32 %v1944, %v2477
    %v2496 = vmul.f32 %v1949, %v2477
    %v2497 = vmul.f32 %v1952, %v2477
    %v2498 = vmul.f32 %v1957, %v2477
    %v2499 = vmul.f32 %v1960, %v2477
    %v2500 = vmul.f32 %v1965, %v2477
    %v2501 = vmul.f32 %v1968, %v2477
    %v2502 = vmul.f32 %v1973, %v2477
    %v2503 = vmul.f32 %v1976, %v2477
    %v2504 = vmul.f32 %v1981, %v2477
    %v2505 = vmul.f32 %v1984, %v2477
    %v2506 = vmul.f32 %v1989, %v2477
    %v2507 = vmul.f32 %v1992, %v2477
    %v2508 = vmul.f32 %v1997, %v2477
    %v2509 = vmul.f32 %v2000, %v2477
    %v2510 = vmul.f32 %v2005, %v2477
    %v2511 = vmul.f32 %v2008, %v2477
    %v2512 = vmul.f32 %v2013, %v2477
    %v2513 = vmul.f32 %v2016, %v2477
    %v2514 = vmul.f32 %v2021, %v2477
    %v2515 = vmul.f32 %v2024, %v2477
    %v2516 = vmul.f32 %v2029, %v2477
    %v2517 = vmul.f32 %v2032, %v2477
    %v2518 = vmul.f32 %v2037, %v2477
    %v2519 = vmul.f32 %v2040, %v2477
    %v2520 = vmul.f32 %v2045, %v2477
    %v2521 = vmul.f32 %v2048, %v2477
    %v2522 = vmul.f32 %v2053, %v2477
    %v2523 = vmul.f32 %v2056, %v2477
    %v2524 = vmul.f32 %v2061, %v2477
    %v2525 = vmul.f32 %v2064, %v2477
    %v2526 = vmul.f32 %v2069, %v2477
    %v2527 = vmul.f32 %v2072, %v2477
    %v2528 = vmul.f32 %v2077, %v2477
    %v2529 = vmul.f32 %v2080, %v2477
    %v2530 = vmul.f32 %v2085, %v2477
    %v2531 = vmul.f32 %v2088, %v2477
    %v2532 = vmul.f32 %v2093, %v2477
    %v2533 = vmul.f32 %v2096, %v2477
    %v2534 = vmul.f32 %v2101, %v2477
    %v2535 = vmul.f32 %v2104, %v2477
    %v2536 = vmul.f32 %v2109, %v2477
    %v2537 = vmul.f32 %v2112, %v2477
    %v2538 = vmul.f32 %v2117, %v2477
    %v2539 = vmul.f32 %v2120, %v2477
    %v2540 = vmul.f32 %v2125, %v2477
    %v2541 = vmul.f32 %v2128, %v2477
    %v2543 = vlaneseq
    %v2544 = vshrl.u32 %v2543, 7
    %v2545 = vsub.s32 0, %v2544
    %v2546 = vrot.slane %v2473, %v2545
    %v2548 = vadd.f32 %v2478, %v2546
    %v2549 = vadd.f32 %v2479, %v2546
    %v2550 = vadd.f32 %v2480, %v2546
    %v2551 = vadd.f32 %v2481, %v2546
    %v2552 = vadd.f32 %v2482, %v2546
    %v2553 = vadd.f32 %v2483, %v2546
    %v2554 = vadd.f32 %v2484, %v2546
    %v2555 = vadd.f32 %v2485, %v2546
    %v2556 = vadd.f32 %v2486, %v2546
    %v2557 = vadd.f32 %v2487, %v2546
    %v2558 = vadd.f32 %v2488, %v2546
    %v2559 = vadd.f32 %v2489, %v2546
    %v2560 = vadd.f32 %v2490, %v2546
    %v2561 = vadd.f32 %v2491, %v2546
    %v2562 = vadd.f32 %v2492, %v2546
    %v2563 = vadd.f32 %v2493, %v2546
    %v2564 = vadd.f32 %v2494, %v2546
    %v2565 = vadd.f32 %v2495, %v2546
    %v2566 = vadd.f32 %v2496, %v2546
    %v2567 = vadd.f32 %v2497, %v2546
    %v2568 = vadd.f32 %v2498, %v2546
    %v2569 = vadd.f32 %v2499, %v2546
    %v2570 = vadd.f32 %v2500, %v2546
    %v2571 = vadd.f32 %v2501, %v2546
    %v2572 = vadd.f32 %v2502, %v2546
    %v2573 = vadd.f32 %v2503, %v2546
    %v2574 = vadd.f32 %v2504, %v2546
    %v2575 = vadd.f32 %v2505, %v2546
    %v2576 = vadd.f32 %v2506, %v2546
    %v2577 = vadd.f32 %v2507, %v2546
    %v2578 = vadd.f32 %v2508, %v2546
    %v2579 = vadd.f32 %v2509, %v2546
    %v2580 = vadd.f32 %v2510, %v2546
    %v2581 = vadd.f32 %v2511, %v2546
    %v2582 = vadd.f32 %v2512, %v2546
    %v2583 = vadd.f32 %v2513, %v2546
    %v2584 = vadd.f32 %v2514, %v2546
    %v2585 = vadd.f32 %v2515, %v2546
    %v2586 = vadd.f32 %v2516, %v2546
    %v2587 = vadd.f32 %v2517, %v2546
    %v2588 = vadd.f32 %v2518, %v2546
    %v2589 = vadd.f32 %v2519, %v2546
    %v2590 = vadd.f32 %v2520, %v2546
    %v2591 = vadd.f32 %v2521, %v2546
    %v2592 = vadd.f32 %v2522, %v2546
    %v2593 = vadd.f32 %v2523, %v2546
    %v2594 = vadd.f32 %v2524, %v2546
    %v2595 = vadd.f32 %v2525, %v2546
    %v2596 = vadd.f32 %v2526, %v2546
    %v2597 = vadd.f32 %v2527, %v2546
    %v2598 = vadd.f32 %v2528, %v2546
    %v2599 = vadd.f32 %v2529, %v2546
    %v2600 = vadd.f32 %v2530, %v2546
    %v2601 = vadd.f32 %v2531, %v2546
    %v2602 = vadd.f32 %v2532, %v2546
    %v2603 = vadd.f32 %v2533, %v2546
    %v2604 = vadd.f32 %v2534, %v2546
    %v2605 = vadd.f32 %v2535, %v2546
    %v2606 = vadd.f32 %v2536, %v2546
    %v2607 = vadd.f32 %v2537, %v2546
    %v2608 = vadd.f32 %v2538, %v2546
    %v2609 = vadd.f32 %v2539, %v2546
    %v2610 = vadd.f32 %v2540, %v2546
    %v2611 = vadd.f32 %v2541, %v2546
    %v2612 = vmax.f32 %v2548, 0.0
    %v2613 = vmax.f32 %v2549, 0.0
    %v2614 = vmax.f32 %v2550, 0.0
    %v2615 = vmax.f32 %v2551, 0.0
    %v2616 = vmax.f32 %v2552, 0.0
    %v2617 = vmax.f32 %v2553, 0.0
    %v2618 = vmax.f32 %v2554, 0.0
    %v2619 = vmax.f32 %v2555, 0.0
    %v2620 = vmax.f32 %v2556, 0.0
    %v2621 = vmax.f32 %v2557, 0.0
    %v2622 = vmax.f32 %v2558, 0.0
    %v2623 = vmax.f32 %v2559, 0.0
    %v2624 = vmax.f32 %v2560, 0.0
    %v2625 = vmax.f32 %v2561, 0.0
    %v2626 = vmax.f32 %v2562, 0.0
    %v2627 = vmax.f32 %v2563, 0.0
    %v2628 = vmax.f32 %v2564, 0.0
    %v2629 = vmax.f32 %v2565, 0.0
    %v2630 = vmax.f32 %v2566, 0.0
    %v2631 = vmax.f32 %v2567, 0.0
    %v2632 = vmax.f32 %v2568, 0.0
    %v2633 = vmax.f32 %v2569, 0.0
    %v2634 = vmax.f32 %v2570, 0.0
    %v2635 = vmax.f32 %v2571, 0.0
    %v2636 = vmax.f32 %v2572, 0.0
    %v2637 = vmax.f32 %v2573, 0.0
    %v2638 = vmax.f32 %v2574, 0.0
    %v2639 = vmax.f32 %v2575, 0.0
    %v2640 = vmax.f32 %v2576, 0.0
    %v2641 = vmax.f32 %v2577, 0.0
    %v2642 = vmax.f32 %v2578, 0.0
    %v2643 = vmax.f32 %v2579, 0.0
    %v2644 = vmax.f32 %v2580, 0.0
    %v2645 = vmax.f32 %v2581, 0.0
    %v2646 = vmax.f32 %v2582, 0.0
    %v2647 = vmax.f32 %v2583, 0.0
    %v2648 = vmax.f32 %v2584, 0.0
    %v2649 = vmax.f32 %v2585, 0.0
    %v2650 = vmax.f32 %v2586, 0.0
    %v2651 = vmax.f32 %v2587, 0.0
    %v2652 = vmax.f32 %v2588, 0.0
    %v2653 = vmax.f32 %v2589, 0.0
    %v2654 = vmax.f32 %v2590, 0.0
    %v2655 = vmax.f32 %v2591, 0.0
    %v2656 = vmax.f32 %v2592, 0.0
    %v2657 = vmax.f32 %v2593, 0.0
    %v2658 = vmax.f32 %v2594, 0.0
    %v2659 = vmax.f32 %v2595, 0.0
    %v2660 = vmax.f32 %v2596, 0.0
    %v2661 = vmax.f32 %v2597, 0.0
    %v2662 = vmax.f32 %v2598, 0.0
    %v2663 = vmax.f32 %v2599, 0.0
    %v2664 = vmax.f32 %v2600, 0.0
    %v2665 = vmax.f32 %v2601, 0.0
    %v2666 = vmax.f32 %v2602, 0.0
    %v2667 = vmax.f32 %v2603, 0.0
    %v2668 = vmax.f32 %v2604, 0.0
    %v2669 = vmax.f32 %v2605, 0.0
    %v2670 = vmax.f32 %v2606, 0.0
    %v2671 = vmax.f32 %v2607, 0.0
    %v2672 = vmax.f32 %v2608, 0.0
    %v2673 = vmax.f32 %v2609, 0.0
    %v2674 = vmax.f32 %v2610, 0.0
    %v2675 = vmax.f32 %v2611, 0.0
    %v2676 = vld [vmem:[%s5] sm:$0xff]
    %v2677 = vld [vmem:[%s5 + $0x8] sm:$0x1]
    %v2742 = vrot.slane %v2612, 7
    %v2743 = vrot.slane %v2613, 7
    %v2744 = vsel %vm237, %v2742, %v2743
    %v2745 = vrot.slane %v2614, 7
    %v2746 = vrot.slane %v2615, 7
    %v2747 = vsel %vm237, %v2745, %v2746
    %v2748 = vrot.slane %v2616, 7
    %v2749 = vrot.slane %v2617, 7
    %v2750 = vsel %vm237, %v2748, %v2749
    %v2751 = vrot.slane %v2618, 7
    %v2752 = vrot.slane %v2619, 7
    %v2753 = vsel %vm237, %v2751, %v2752
    %v2754 = vrot.slane %v2620, 7
    %v2755 = vrot.slane %v2621, 7
    %v2756 = vsel %vm237, %v2754, %v2755
    %v2757 = vrot.slane %v2622, 7
    %v2758 = vrot.slane %v2623, 7
    %v2759 = vsel %vm237, %v2757, %v2758
    %v2760 = vrot.slane %v2624, 7
    %v2761 = vrot.slane %v2625, 7
    %v2762 = vsel %vm237, %v2760, %v2761
    %v2763 = vrot.slane %v2626, 7
    %v2764 = vrot.slane %v2627, 7
    %v2765 = vsel %vm237, %v2763, %v2764
    %v2766 = vrot.slane %v2628, 7
    %v2767 = vrot.slane %v2629, 7
    %v2768 = vsel %vm237, %v2766, %v2767
    %v2769 = vrot.slane %v2630, 7
    %v2770 = vrot.slane %v2631, 7
    %v2771 = vsel %vm237, %v2769, %v2770
    %v2772 = vrot.slane %v2632, 7
    %v2773 = vrot.slane %v2633, 7
    %v2774 = vsel %vm237, %v2772, %v2773
    %v2775 = vrot.slane %v2634, 7
    %v2776 = vrot.slane %v2635, 7
    %v2777 = vsel %vm237, %v2775, %v2776
    %v2778 = vrot.slane %v2636, 7
    %v2779 = vrot.slane %v2637, 7
    %v2780 = vsel %vm237, %v2778, %v2779
    %v2781 = vrot.slane %v2638, 7
    %v2782 = vrot.slane %v2639, 7
    %v2783 = vsel %vm237, %v2781, %v2782
    %v2784 = vrot.slane %v2640, 7
    %v2785 = vrot.slane %v2641, 7
    %v2786 = vsel %vm237, %v2784, %v2785
    %v2787 = vrot.slane %v2642, 7
    %v2788 = vrot.slane %v2643, 7
    %v2789 = vsel %vm237, %v2787, %v2788
    %v2790 = vrot.slane %v2644, 7
    %v2791 = vrot.slane %v2645, 7
    %v2792 = vsel %vm237, %v2790, %v2791
    %v2793 = vrot.slane %v2646, 7
    %v2794 = vrot.slane %v2647, 7
    %v2795 = vsel %vm237, %v2793, %v2794
    %v2796 = vrot.slane %v2648, 7
    %v2797 = vrot.slane %v2649, 7
    %v2798 = vsel %vm237, %v2796, %v2797
    %v2799 = vrot.slane %v2650, 7
    %v2800 = vrot.slane %v2651, 7
    %v2801 = vsel %vm237, %v2799, %v2800
    %v2802 = vrot.slane %v2652, 7
    %v2803 = vrot.slane %v2653, 7
    %v2804 = vsel %vm237, %v2802, %v2803
    %v2805 = vrot.slane %v2654, 7
    %v2806 = vrot.slane %v2655, 7
    %v2807 = vsel %vm237, %v2805, %v2806
    %v2808 = vrot.slane %v2656, 7
    %v2809 = vrot.slane %v2657, 7
    %v2810 = vsel %vm237, %v2808, %v2809
    %v2811 = vrot.slane %v2658, 7
    %v2812 = vrot.slane %v2659, 7
    %v2813 = vsel %vm237, %v2811, %v2812
    %v2814 = vrot.slane %v2660, 7
    %v2815 = vrot.slane %v2661, 7
    %v2816 = vsel %vm237, %v2814, %v2815
    %v2817 = vrot.slane %v2662, 7
    %v2818 = vrot.slane %v2663, 7
    %v2819 = vsel %vm237, %v2817, %v2818
    %v2820 = vrot.slane %v2664, 7
    %v2821 = vrot.slane %v2665, 7
    %v2822 = vsel %vm237, %v2820, %v2821
    %v2823 = vrot.slane %v2666, 7
    %v2824 = vrot.slane %v2667, 7
    %v2825 = vsel %vm237, %v2823, %v2824
    %v2826 = vrot.slane %v2668, 7
    %v2827 = vrot.slane %v2669, 7
    %v2828 = vsel %vm237, %v2826, %v2827
    %v2829 = vrot.slane %v2670, 7
    %v2830 = vrot.slane %v2671, 7
    %v2831 = vsel %vm237, %v2829, %v2830
    %v2832 = vrot.slane %v2672, 7
    %v2833 = vrot.slane %v2673, 7
    %v2834 = vsel %vm237, %v2832, %v2833
    %v2835 = vrot.slane %v2674, 7
    %v2836 = vrot.slane %v2675, 7
    %v2837 = vsel %vm237, %v2835, %v2836
    %v2902 = vsel %vm237, 0.0, %v2742
    %v2903 = vsel %vm237, 0.0, %v2745
    %v2904 = vsel %vm237, 0.0, %v2748
    %v2905 = vsel %vm237, 0.0, %v2751
    %v2906 = vsel %vm237, 0.0, %v2754
    %v2907 = vsel %vm237, 0.0, %v2757
    %v2908 = vsel %vm237, 0.0, %v2760
    %v2909 = vsel %vm237, 0.0, %v2763
    %v2910 = vsel %vm237, 0.0, %v2766
    %v2911 = vsel %vm237, 0.0, %v2769
    %v2912 = vsel %vm237, 0.0, %v2772
    %v2913 = vsel %vm237, 0.0, %v2775
    %v2914 = vsel %vm237, 0.0, %v2778
    %v2915 = vsel %vm237, 0.0, %v2781
    %v2916 = vsel %vm237, 0.0, %v2784
    %v2917 = vsel %vm237, 0.0, %v2787
    %v2918 = vsel %vm237, 0.0, %v2790
    %v2919 = vsel %vm237, 0.0, %v2793
    %v2920 = vsel %vm237, 0.0, %v2796
    %v2921 = vsel %vm237, 0.0, %v2799
    %v2922 = vsel %vm237, 0.0, %v2802
    %v2923 = vsel %vm237, 0.0, %v2805
    %v2924 = vsel %vm237, 0.0, %v2808
    %v2925 = vsel %vm237, 0.0, %v2811
    %v2926 = vsel %vm237, 0.0, %v2814
    %v2927 = vsel %vm237, 0.0, %v2817
    %v2928 = vsel %vm237, 0.0, %v2820
    %v2929 = vsel %vm237, 0.0, %v2823
    %v2930 = vsel %vm237, 0.0, %v2826
    %v2931 = vsel %vm237, 0.0, %v2829
    %v2932 = vsel %vm237, 0.0, %v2832
    %v2933 = vsel %vm237, 0.0, %v2835
    %v2934 = vrot.slane %v2612, 1
    %v2935 = vrot.slane %v2613, 1
    %v2936 = vsel %vm430, %v2934, %v2935
    %v2937 = vrot.slane %v2614, 1
    %v2938 = vrot.slane %v2615, 1
    %v2939 = vsel %vm430, %v2937, %v2938
    %v2940 = vrot.slane %v2616, 1
    %v2941 = vrot.slane %v2617, 1
    %v2942 = vsel %vm430, %v2940, %v2941
    %v2943 = vrot.slane %v2618, 1
    %v2944 = vrot.slane %v2619, 1
    %v2945 = vsel %vm430, %v2943, %v2944
    %v2946 = vrot.slane %v2620, 1
    %v2947 = vrot.slane %v2621, 1
    %v2948 = vsel %vm430, %v2946, %v2947
    %v2949 = vrot.slane %v2622, 1
    %v2950 = vrot.slane %v2623, 1
    %v2951 = vsel %vm430, %v2949, %v2950
    %v2952 = vrot.slane %v2624, 1
    %v2953 = vrot.slane %v2625, 1
    %v2954 = vsel %vm430, %v2952, %v2953
    %v2955 = vrot.slane %v2626, 1
    %v2956 = vrot.slane %v2627, 1
    %v2957 = vsel %vm430, %v2955, %v2956
    %v2958 = vrot.slane %v2628, 1
    %v2959 = vrot.slane %v2629, 1
    %v2960 = vsel %vm430, %v2958, %v2959
    %v2961 = vrot.slane %v2630, 1
    %v2962 = vrot.slane %v2631, 1
    %v2963 = vsel %vm430, %v2961, %v2962
    %v2964 = vrot.slane %v2632, 1
    %v2965 = vrot.slane %v2633, 1
    %v2966 = vsel %vm430, %v2964, %v2965
    %v2967 = vrot.slane %v2634, 1
    %v2968 = vrot.slane %v2635, 1
    %v2969 = vsel %vm430, %v2967, %v2968
    %v2970 = vrot.slane %v2636, 1
    %v2971 = vrot.slane %v2637, 1
    %v2972 = vsel %vm430, %v2970, %v2971
    %v2973 = vrot.slane %v2638, 1
    %v2974 = vrot.slane %v2639, 1
    %v2975 = vsel %vm430, %v2973, %v2974
    %v2976 = vrot.slane %v2640, 1
    %v2977 = vrot.slane %v2641, 1
    %v2978 = vsel %vm430, %v2976, %v2977
    %v2979 = vrot.slane %v2642, 1
    %v2980 = vrot.slane %v2643, 1
    %v2981 = vsel %vm430, %v2979, %v2980
    %v2982 = vrot.slane %v2644, 1
    %v2983 = vrot.slane %v2645, 1
    %v2984 = vsel %vm430, %v2982, %v2983
    %v2985 = vrot.slane %v2646, 1
    %v2986 = vrot.slane %v2647, 1
    %v2987 = vsel %vm430, %v2985, %v2986
    %v2988 = vrot.slane %v2648, 1
    %v2989 = vrot.slane %v2649, 1
    %v2990 = vsel %vm430, %v2988, %v2989
    %v2991 = vrot.slane %v2650, 1
    %v2992 = vrot.slane %v2651, 1
    %v2993 = vsel %vm430, %v2991, %v2992
    %v2994 = vrot.slane %v2652, 1
    %v2995 = vrot.slane %v2653, 1
    %v2996 = vsel %vm430, %v2994, %v2995
    %v2997 = vrot.slane %v2654, 1
    %v2998 = vrot.slane %v2655, 1
    %v2999 = vsel %vm430, %v2997, %v2998
    %v3000 = vrot.slane %v2656, 1
    %v3001 = vrot.slane %v2657, 1
    %v3002 = vsel %vm430, %v3000, %v3001
    %v3003 = vrot.slane %v2658, 1
    %v3004 = vrot.slane %v2659, 1
    %v3005 = vsel %vm430, %v3003, %v3004
    %v3006 = vrot.slane %v2660, 1
    %v3007 = vrot.slane %v2661, 1
    %v3008 = vsel %vm430, %v3006, %v3007
    %v3009 = vrot.slane %v2662, 1
    %v3010 = vrot.slane %v2663, 1
    %v3011 = vsel %vm430, %v3009, %v3010
    %v3012 = vrot.slane %v2664, 1
    %v3013 = vrot.slane %v2665, 1
    %v3014 = vsel %vm430, %v3012, %v3013
    %v3015 = vrot.slane %v2666, 1
    %v3016 = vrot.slane %v2667, 1
    %v3017 = vsel %vm430, %v3015, %v3016
    %v3018 = vrot.slane %v2668, 1
    %v3019 = vrot.slane %v2669, 1
    %v3020 = vsel %vm430, %v3018, %v3019
    %v3021 = vrot.slane %v2670, 1
    %v3022 = vrot.slane %v2671, 1
    %v3023 = vsel %vm430, %v3021, %v3022
    %v3024 = vrot.slane %v2672, 1
    %v3025 = vrot.slane %v2673, 1
    %v3026 = vsel %vm430, %v3024, %v3025
    %v3027 = vrot.slane %v2674, 1
    %v3028 = vrot.slane %v2675, 1
    %v3029 = vsel %vm430, %v3027, %v3028
    %v3094 = vsel %vm430, %v2935, 0.0
    %v3095 = vsel %vm430, %v2938, 0.0
    %v3096 = vsel %vm430, %v2941, 0.0
    %v3097 = vsel %vm430, %v2944, 0.0
    %v3098 = vsel %vm430, %v2947, 0.0
    %v3099 = vsel %vm430, %v2950, 0.0
    %v3100 = vsel %vm430, %v2953, 0.0
    %v3101 = vsel %vm430, %v2956, 0.0
    %v3102 = vsel %vm430, %v2959, 0.0
    %v3103 = vsel %vm430, %v2962, 0.0
    %v3104 = vsel %vm430, %v2965, 0.0
    %v3105 = vsel %vm430, %v2968, 0.0
    %v3106 = vsel %vm430, %v2971, 0.0
    %v3107 = vsel %vm430, %v2974, 0.0
    %v3108 = vsel %vm430, %v2977, 0.0
    %v3109 = vsel %vm430, %v2980, 0.0
    %v3110 = vsel %vm430, %v2983, 0.0
    %v3111 = vsel %vm430, %v2986, 0.0
    %v3112 = vsel %vm430, %v2989, 0.0
    %v3113 = vsel %vm430, %v2992, 0.0
    %v3114 = vsel %vm430, %v2995, 0.0
    %v3115 = vsel %vm430, %v2998, 0.0
    %v3116 = vsel %vm430, %v3001, 0.0
    %v3117 = vsel %vm430, %v3004, 0.0
    %v3118 = vsel %vm430, %v3007, 0.0
    %v3119 = vsel %vm430, %v3010, 0.0
    %v3120 = vsel %vm430, %v3013, 0.0
    %v3121 = vsel %vm430, %v3016, 0.0
    %v3122 = vsel %vm430, %v3019, 0.0
    %v3123 = vsel %vm430, %v3022, 0.0
    %v3124 = vsel %vm430, %v3025, 0.0
    %v3125 = vsel %vm430, %v3028, 0.0
    %v3126 = vlaneseq
    %v3127 = vshrl.u32 %v3126, 7
    %v3128 = vsub.s32 0, %v3127
    %v3129 = vrot.slane %v2676, %v3128
    %v3130 = vmul.f32 %v2902, %v3129
    %v3131 = vmul.f32 %v2744, %v3129
    %v3132 = vmul.f32 %v2903, %v3129
    %v3133 = vmul.f32 %v2747, %v3129
    %v3134 = vmul.f32 %v2904, %v3129
    %v3135 = vmul.f32 %v2750, %v3129
    %v3136 = vmul.f32 %v2905, %v3129
    %v3137 = vmul.f32 %v2753, %v3129
    %v3138 = vmul.f32 %v2906, %v3129
    %v3139 = vmul.f32 %v2756, %v3129
    %v3140 = vmul.f32 %v2907, %v3129
    %v3141 = vmul.f32 %v2759, %v3129
    %v3142 = vmul.f32 %v2908, %v3129
    %v3143 = vmul.f32 %v2762, %v3129
    %v3144 = vmul.f32 %v2909, %v3129
    %v3145 = vmul.f32 %v2765, %v3129
    %v3146 = vmul.f32 %v2910, %v3129
    %v3147 = vmul.f32 %v2768, %v3129
    %v3148 = vmul.f32 %v2911, %v3129
    %v3149 = vmul.f32 %v2771, %v3129
    %v3150 = vmul.f32 %v2912, %v3129
    %v3151 = vmul.f32 %v2774, %v3129
    %v3152 = vmul.f32 %v2913, %v3129
    %v3153 = vmul.f32 %v2777, %v3129
    %v3154 = vmul.f32 %v2914, %v3129
    %v3155 = vmul.f32 %v2780, %v3129
    %v3156 = vmul.f32 %v2915, %v3129
    %v3157 = vmul.f32 %v2783, %v3129
    %v3158 = vmul.f32 %v2916, %v3129
    %v3159 = vmul.f32 %v2786, %v3129
    %v3160 = vmul.f32 %v2918, %v3129
    %v3161 = vmul.f32 %v2792, %v3129
    %v3162 = vmul.f32 %v2919, %v3129
    %v3163 = vmul.f32 %v2795, %v3129
    %v3164 = vmul.f32 %v2920, %v3129
    %v3165 = vmul.f32 %v2798, %v3129
    %v3166 = vmul.f32 %v2921, %v3129
    %v3167 = vmul.f32 %v2801, %v3129
    %v3168 = vmul.f32 %v2922, %v3129
    %v3169 = vmul.f32 %v2804, %v3129
    %v3170 = vmul.f32 %v2923, %v3129
    %v3171 = vmul.f32 %v2807, %v3129
    %v3172 = vmul.f32 %v2924, %v3129
    %v3173 = vmul.f32 %v2810, %v3129
    %v3174 = vmul.f32 %v2925, %v3129
    %v3175 = vmul.f32 %v2813, %v3129
    %v3176 = vmul.f32 %v2926, %v3129
    %v3177 = vmul.f32 %v2816, %v3129
    %v3178 = vmul.f32 %v2927, %v3129
    %v3179 = vmul.f32 %v2819, %v3129
    %v3180 = vmul.f32 %v2928, %v3129
    %v3181 = vmul.f32 %v2822, %v3129
    %v3182 = vmul.f32 %v2929, %v3129
    %v3183 = vmul.f32 %v2825, %v3129
    %v3184 = vmul.f32 %v2930, %v3129
    %v3185 = vmul.f32 %v2828, %v3129
    %v3186 = vmul.f32 %v2931, %v3129
    %v3187 = vmul.f32 %v2831, %v3129
    %v3188 = vmul.f32 %v2932, %v3129
    %v3189 = vmul.f32 %v2834, %v3129
    %v3190 = vlaneseq
    %v3191 = vshrl.u32 %v3190, 7
    %v3192 = vsub.s32 1, %v3191
    %v3193 = vrot.slane %v2676, %v3192
    %v3194 = vmul.f32 %v2612, %v3193
    %v3195 = vmul.f32 %v2613, %v3193
    %v3196 = vmul.f32 %v2614, %v3193
    %v3197 = vmul.f32 %v2615, %v3193
    %v3198 = vmul.f32 %v2616, %v3193
    %v3199 = vmul.f32 %v2617, %v3193
    %v3200 = vmul.f32 %v2618, %v3193
    %v3201 = vmul.f32 %v2619, %v3193
    %v3202 = vmul.f32 %v2620, %v3193
    %v3203 = vmul.f32 %v2621, %v3193
    %v3204 = vmul.f32 %v2622, %v3193
    %v3205 = vmul.f32 %v2623, %v3193
    %v3206 = vmul.f32 %v2624, %v3193
    %v3207 = vmul.f32 %v2625, %v3193
    %v3208 = vmul.f32 %v2626, %v3193
    %v3209 = vmul.f32 %v2627, %v3193
    %v3210 = vmul.f32 %v2628, %v3193
    %v3211 = vmul.f32 %v2629, %v3193
    %v3212 = vmul.f32 %v2630, %v3193
    %v3213 = vmul.f32 %v2631, %v3193
    %v3214 = vmul.f32 %v2632, %v3193
    %v3215 = vmul.f32 %v2633, %v3193
    %v3216 = vmul.f32 %v2634, %v3193
    %v3217 = vmul.f32 %v2635, %v3193
    %v3218 = vmul.f32 %v2636, %v3193
    %v3219 = vmul.f32 %v2637, %v3193
    %v3220 = vmul.f32 %v2638, %v3193
    %v3221 = vmul.f32 %v2639, %v3193
    %v3222 = vmul.f32 %v2640, %v3193
    %v3223 = vmul.f32 %v2641, %v3193
    %v3224 = vmul.f32 %v2644, %v3193
    %v3225 = vmul.f32 %v2645, %v3193
    %v3226 = vmul.f32 %v2646, %v3193
    %v3227 = vmul.f32 %v2647, %v3193
    %v3228 = vmul.f32 %v2648, %v3193
    %v3229 = vmul.f32 %v2649, %v3193
    %v3230 = vmul.f32 %v2650, %v3193
    %v3231 = vmul.f32 %v2651, %v3193
    %v3232 = vmul.f32 %v2652, %v3193
    %v3233 = vmul.f32 %v2653, %v3193
    %v3234 = vmul.f32 %v2654, %v3193
    %v3235 = vmul.f32 %v2655, %v3193
    %v3236 = vmul.f32 %v2656, %v3193
    %v3237 = vmul.f32 %v2657, %v3193
    %v3238 = vmul.f32 %v2658, %v3193
    %v3239 = vmul.f32 %v2659, %v3193
    %v3240 = vmul.f32 %v2660, %v3193
    %v3241 = vmul.f32 %v2661, %v3193
    %v3242 = vmul.f32 %v2662, %v3193
    %v3243 = vmul.f32 %v2663, %v3193
    %v3244 = vmul.f32 %v2664, %v3193
    %v3245 = vmul.f32 %v2665, %v3193
    %v3246 = vmul.f32 %v2666, %v3193
    %v3247 = vmul.f32 %v2667, %v3193
    %v3248 = vmul.f32 %v2668, %v3193
    %v3249 = vmul.f32 %v2669, %v3193
    %v3250 = vmul.f32 %v2670, %v3193
    %v3251 = vmul.f32 %v2671, %v3193
    %v3252 = vmul.f32 %v2672, %v3193
    %v3253 = vmul.f32 %v2673, %v3193
    %v3254 = vadd.f32 %v3130, %v3194
    %v3255 = vadd.f32 %v3131, %v3195
    %v3256 = vadd.f32 %v3132, %v3196
    %v3257 = vadd.f32 %v3133, %v3197
    %v3258 = vadd.f32 %v3134, %v3198
    %v3259 = vadd.f32 %v3135, %v3199
    %v3260 = vadd.f32 %v3136, %v3200
    %v3261 = vadd.f32 %v3137, %v3201
    %v3262 = vadd.f32 %v3138, %v3202
    %v3263 = vadd.f32 %v3139, %v3203
    %v3264 = vadd.f32 %v3140, %v3204
    %v3265 = vadd.f32 %v3141, %v3205
    %v3266 = vadd.f32 %v3142, %v3206
    %v3267 = vadd.f32 %v3143, %v3207
    %v3268 = vadd.f32 %v3144, %v3208
    %v3269 = vadd.f32 %v3145, %v3209
    %v3270 = vadd.f32 %v3146, %v3210
    %v3271 = vadd.f32 %v3147, %v3211
    %v3272 = vadd.f32 %v3148, %v3212
    %v3273 = vadd.f32 %v3149, %v3213
    %v3274 = vadd.f32 %v3150, %v3214
    %v3275 = vadd.f32 %v3151, %v3215
    %v3276 = vadd.f32 %v3152, %v3216
    %v3277 = vadd.f32 %v3153, %v3217
    %v3278 = vadd.f32 %v3154, %v3218
    %v3279 = vadd.f32 %v3155, %v3219
    %v3280 = vadd.f32 %v3156, %v3220
    %v3281 = vadd.f32 %v3157, %v3221
    %v3282 = vadd.f32 %v3158, %v3222
    %v3283 = vadd.f32 %v3159, %v3223
    %v3284 = vadd.f32 %v3160, %v3224
    %v3285 = vadd.f32 %v3161, %v3225
    %v3286 = vadd.f32 %v3162, %v3226
    %v3287 = vadd.f32 %v3163, %v3227
    %v3288 = vadd.f32 %v3164, %v3228
    %v3289 = vadd.f32 %v3165, %v3229
    %v3290 = vadd.f32 %v3166, %v3230
    %v3291 = vadd.f32 %v3167, %v3231
    %v3292 = vadd.f32 %v3168, %v3232
    %v3293 = vadd.f32 %v3169, %v3233
    %v3294 = vadd.f32 %v3170, %v3234
    %v3295 = vadd.f32 %v3171, %v3235
    %v3296 = vadd.f32 %v3172, %v3236
    %v3297 = vadd.f32 %v3173, %v3237
    %v3298 = vadd.f32 %v3174, %v3238
    %v3299 = vadd.f32 %v3175, %v3239
    %v3300 = vadd.f32 %v3176, %v3240
    %v3301 = vadd.f32 %v3177, %v3241
    %v3302 = vadd.f32 %v3178, %v3242
    %v3303 = vadd.f32 %v3179, %v3243
    %v3304 = vadd.f32 %v3180, %v3244
    %v3305 = vadd.f32 %v3181, %v3245
    %v3306 = vadd.f32 %v3182, %v3246
    %v3307 = vadd.f32 %v3183, %v3247
    %v3308 = vadd.f32 %v3184, %v3248
    %v3309 = vadd.f32 %v3185, %v3249
    %v3310 = vadd.f32 %v3186, %v3250
    %v3311 = vadd.f32 %v3187, %v3251
    %v3312 = vadd.f32 %v3188, %v3252
    %v3313 = vadd.f32 %v3189, %v3253
    %v3314 = vlaneseq
    %v3315 = vshrl.u32 %v3314, 7
    %v3316 = vsub.s32 2, %v3315
    %v3317 = vrot.slane %v2676, %v3316
    %v3318 = vmul.f32 %v2936, %v3317
    %v3319 = vmul.f32 %v3094, %v3317
    %v3320 = vmul.f32 %v2939, %v3317
    %v3321 = vmul.f32 %v3095, %v3317
    %v3322 = vmul.f32 %v2942, %v3317
    %v3323 = vmul.f32 %v3096, %v3317
    %v3324 = vmul.f32 %v2945, %v3317
    %v3325 = vmul.f32 %v3097, %v3317
    %v3326 = vmul.f32 %v2948, %v3317
    %v3327 = vmul.f32 %v3098, %v3317
    %v3328 = vmul.f32 %v2951, %v3317
    %v3329 = vmul.f32 %v3099, %v3317
    %v3330 = vmul.f32 %v2954, %v3317
    %v3331 = vmul.f32 %v3100, %v3317
    %v3332 = vmul.f32 %v2957, %v3317
    %v3333 = vmul.f32 %v3101, %v3317
    %v3334 = vmul.f32 %v2960, %v3317
    %v3335 = vmul.f32 %v3102, %v3317
    %v3336 = vmul.f32 %v2963, %v3317
    %v3337 = vmul.f32 %v3103, %v3317
    %v3338 = vmul.f32 %v2966, %v3317
    %v3339 = vmul.f32 %v3104, %v3317
    %v3340 = vmul.f32 %v2969, %v3317
    %v3341 = vmul.f32 %v3105, %v3317
    %v3342 = vmul.f32 %v2972, %v3317
    %v3343 = vmul.f32 %v3106, %v3317
    %v3344 = vmul.f32 %v2975, %v3317
    %v3345 = vmul.f32 %v3107, %v3317
    %v3346 = vmul.f32 %v2978, %v3317
    %v3347 = vmul.f32 %v3108, %v3317
    %v3348 = vmul.f32 %v2984, %v3317
    %v3349 = vmul.f32 %v3110, %v3317
    %v3350 = vmul.f32 %v2987, %v3317
    %v3351 = vmul.f32 %v3111, %v3317
    %v3352 = vmul.f32 %v2990, %v3317
    %v3353 = vmul.f32 %v3112, %v3317
    %v3354 = vmul.f32 %v2993, %v3317
    %v3355 = vmul.f32 %v3113, %v3317
    %v3356 = vmul.f32 %v2996, %v3317
    %v3357 = vmul.f32 %v3114, %v3317
    %v3358 = vmul.f32 %v2999, %v3317
    %v3359 = vmul.f32 %v3115, %v3317
    %v3360 = vmul.f32 %v3002, %v3317
    %v3361 = vmul.f32 %v3116, %v3317
    %v3362 = vmul.f32 %v3005, %v3317
    %v3363 = vmul.f32 %v3117, %v3317
    %v3364 = vmul.f32 %v3008, %v3317
    %v3365 = vmul.f32 %v3118, %v3317
    %v3366 = vmul.f32 %v3011, %v3317
    %v3367 = vmul.f32 %v3119, %v3317
    %v3368 = vmul.f32 %v3014, %v3317
    %v3369 = vmul.f32 %v3120, %v3317
    %v3370 = vmul.f32 %v3017, %v3317
    %v3371 = vmul.f32 %v3121, %v3317
    %v3372 = vmul.f32 %v3020, %v3317
    %v3373 = vmul.f32 %v3122, %v3317
    %v3374 = vmul.f32 %v3023, %v3317
    %v3375 = vmul.f32 %v3123, %v3317
    %v3376 = vmul.f32 %v3026, %v3317
    %v3377 = vmul.f32 %v3124, %v3317
    %v3378 = vadd.f32 %v3254, %v3318
    %v3379 = vadd.f32 %v3255, %v3319
    %v3380 = vadd.f32 %v3256, %v3320
    %v3381 = vadd.f32 %v3257, %v3321
    %v3382 = vadd.f32 %v3258, %v3322
    %v3383 = vadd.f32 %v3259, %v3323
    %v3384 = vadd.f32 %v3260, %v3324
    %v3385 = vadd.f32 %v3261, %v3325
    %v3386 = vadd.f32 %v3262, %v3326
    %v3387 = vadd.f32 %v3263, %v3327
    %v3388 = vadd.f32 %v3264, %v3328
    %v3389 = vadd.f32 %v3265, %v3329
    %v3390 = vadd.f32 %v3266, %v3330
    %v3391 = vadd.f32 %v3267, %v3331
    %v3392 = vadd.f32 %v3268, %v3332
    %v3393 = vadd.f32 %v3269, %v3333
    %v3394 = vadd.f32 %v3270, %v3334
    %v3395 = vadd.f32 %v3271, %v3335
    %v3396 = vadd.f32 %v3272, %v3336
    %v3397 = vadd.f32 %v3273, %v3337
    %v3398 = vadd.f32 %v3274, %v3338
    %v3399 = vadd.f32 %v3275, %v3339
    %v3400 = vadd.f32 %v3276, %v3340
    %v3401 = vadd.f32 %v3277, %v3341
    %v3402 = vadd.f32 %v3278, %v3342
    %v3403 = vadd.f32 %v3279, %v3343
    %v3404 = vadd.f32 %v3280, %v3344
    %v3405 = vadd.f32 %v3281, %v3345
    %v3406 = vadd.f32 %v3282, %v3346
    %v3407 = vadd.f32 %v3283, %v3347
    %v3408 = vadd.f32 %v3284, %v3348
    %v3409 = vadd.f32 %v3285, %v3349
    %v3410 = vadd.f32 %v3286, %v3350
    %v3411 = vadd.f32 %v3287, %v3351
    %v3412 = vadd.f32 %v3288, %v3352
    %v3413 = vadd.f32 %v3289, %v3353
    %v3414 = vadd.f32 %v3290, %v3354
    %v3415 = vadd.f32 %v3291, %v3355
    %v3416 = vadd.f32 %v3292, %v3356
    %v3417 = vadd.f32 %v3293, %v3357
    %v3418 = vadd.f32 %v3294, %v3358
    %v3419 = vadd.f32 %v3295, %v3359
    %v3420 = vadd.f32 %v3296, %v3360
    %v3421 = vadd.f32 %v3297, %v3361
    %v3422 = vadd.f32 %v3298, %v3362
    %v3423 = vadd.f32 %v3299, %v3363
    %v3424 = vadd.f32 %v3300, %v3364
    %v3425 = vadd.f32 %v3301, %v3365
    %v3426 = vadd.f32 %v3302, %v3366
    %v3427 = vadd.f32 %v3303, %v3367
    %v3428 = vadd.f32 %v3304, %v3368
    %v3429 = vadd.f32 %v3305, %v3369
    %v3430 = vadd.f32 %v3306, %v3370
    %v3431 = vadd.f32 %v3307, %v3371
    %v3432 = vadd.f32 %v3308, %v3372
    %v3433 = vadd.f32 %v3309, %v3373
    %v3434 = vadd.f32 %v3310, %v3374
    %v3435 = vadd.f32 %v3311, %v3375
    %v3436 = vadd.f32 %v3312, %v3376
    %v3437 = vadd.f32 %v3313, %v3377
    %v3438 = vlaneseq
    %v3439 = vshrl.u32 %v3438, 7
    %v3440 = vsub.s32 3, %v3439
    %v3441 = vrot.slane %v2676, %v3440
    %v3442 = vmul.f32 %v2902, %v3441
    %v3443 = vmul.f32 %v2744, %v3441
    %v3444 = vmul.f32 %v2903, %v3441
    %v3445 = vmul.f32 %v2747, %v3441
    %v3446 = vmul.f32 %v2904, %v3441
    %v3447 = vmul.f32 %v2750, %v3441
    %v3448 = vmul.f32 %v2905, %v3441
    %v3449 = vmul.f32 %v2753, %v3441
    %v3450 = vmul.f32 %v2906, %v3441
    %v3451 = vmul.f32 %v2756, %v3441
    %v3452 = vmul.f32 %v2907, %v3441
    %v3453 = vmul.f32 %v2759, %v3441
    %v3454 = vmul.f32 %v2908, %v3441
    %v3455 = vmul.f32 %v2762, %v3441
    %v3456 = vmul.f32 %v2909, %v3441
    %v3457 = vmul.f32 %v2765, %v3441
    %v3458 = vmul.f32 %v2910, %v3441
    %v3459 = vmul.f32 %v2768, %v3441
    %v3460 = vmul.f32 %v2911, %v3441
    %v3461 = vmul.f32 %v2771, %v3441
    %v3462 = vmul.f32 %v2912, %v3441
    %v3463 = vmul.f32 %v2774, %v3441
    %v3464 = vmul.f32 %v2913, %v3441
    %v3465 = vmul.f32 %v2777, %v3441
    %v3466 = vmul.f32 %v2914, %v3441
    %v3467 = vmul.f32 %v2780, %v3441
    %v3468 = vmul.f32 %v2915, %v3441
    %v3469 = vmul.f32 %v2783, %v3441
    %v3470 = vmul.f32 %v2916, %v3441
    %v3471 = vmul.f32 %v2786, %v3441
    %v3472 = vmul.f32 %v2917, %v3441
    %v3473 = vmul.f32 %v2789, %v3441
    %v3474 = vmul.f32 %v2918, %v3441
    %v3475 = vmul.f32 %v2792, %v3441
    %v3476 = vmul.f32 %v2919, %v3441
    %v3477 = vmul.f32 %v2795, %v3441
    %v3478 = vmul.f32 %v2920, %v3441
    %v3479 = vmul.f32 %v2798, %v3441
    %v3480 = vmul.f32 %v2921, %v3441
    %v3481 = vmul.f32 %v2801, %v3441
    %v3482 = vmul.f32 %v2922, %v3441
    %v3483 = vmul.f32 %v2804, %v3441
    %v3484 = vmul.f32 %v2923, %v3441
    %v3485 = vmul.f32 %v2807, %v3441
    %v3486 = vmul.f32 %v2924, %v3441
    %v3487 = vmul.f32 %v2810, %v3441
    %v3488 = vmul.f32 %v2925, %v3441
    %v3489 = vmul.f32 %v2813, %v3441
    %v3490 = vmul.f32 %v2926, %v3441
    %v3491 = vmul.f32 %v2816, %v3441
    %v3492 = vmul.f32 %v2927, %v3441
    %v3493 = vmul.f32 %v2819, %v3441
    %v3494 = vmul.f32 %v2928, %v3441
    %v3495 = vmul.f32 %v2822, %v3441
    %v3496 = vmul.f32 %v2929, %v3441
    %v3497 = vmul.f32 %v2825, %v3441
    %v3498 = vmul.f32 %v2930, %v3441
    %v3499 = vmul.f32 %v2828, %v3441
    %v3500 = vmul.f32 %v2931, %v3441
    %v3501 = vmul.f32 %v2831, %v3441
    %v3502 = vmul.f32 %v2932, %v3441
    %v3503 = vmul.f32 %v2834, %v3441
    %v3504 = vmul.f32 %v2933, %v3441
    %v3505 = vmul.f32 %v2837, %v3441
    %v3506 = vlaneseq
    %v3507 = vshrl.u32 %v3506, 7
    %v3508 = vsub.s32 4, %v3507
    %v3509 = vrot.slane %v2676, %v3508
    %v3510 = vmul.f32 %v2612, %v3509
    %v3511 = vmul.f32 %v2613, %v3509
    %v3512 = vmul.f32 %v2614, %v3509
    %v3513 = vmul.f32 %v2615, %v3509
    %v3514 = vmul.f32 %v2616, %v3509
    %v3515 = vmul.f32 %v2617, %v3509
    %v3516 = vmul.f32 %v2618, %v3509
    %v3517 = vmul.f32 %v2619, %v3509
    %v3518 = vmul.f32 %v2620, %v3509
    %v3519 = vmul.f32 %v2621, %v3509
    %v3520 = vmul.f32 %v2622, %v3509
    %v3521 = vmul.f32 %v2623, %v3509
    %v3522 = vmul.f32 %v2624, %v3509
    %v3523 = vmul.f32 %v2625, %v3509
    %v3524 = vmul.f32 %v2626, %v3509
    %v3525 = vmul.f32 %v2627, %v3509
    %v3526 = vmul.f32 %v2628, %v3509
    %v3527 = vmul.f32 %v2629, %v3509
    %v3528 = vmul.f32 %v2630, %v3509
    %v3529 = vmul.f32 %v2631, %v3509
    %v3530 = vmul.f32 %v2632, %v3509
    %v3531 = vmul.f32 %v2633, %v3509
    %v3532 = vmul.f32 %v2634, %v3509
    %v3533 = vmul.f32 %v2635, %v3509
    %v3534 = vmul.f32 %v2636, %v3509
    %v3535 = vmul.f32 %v2637, %v3509
    %v3536 = vmul.f32 %v2638, %v3509
    %v3537 = vmul.f32 %v2639, %v3509
    %v3538 = vmul.f32 %v2640, %v3509
    %v3539 = vmul.f32 %v2641, %v3509
    %v3540 = vmul.f32 %v2642, %v3509
    %v3541 = vmul.f32 %v2643, %v3509
    %v3542 = vmul.f32 %v2644, %v3509
    %v3543 = vmul.f32 %v2645, %v3509
    %v3544 = vmul.f32 %v2646, %v3509
    %v3545 = vmul.f32 %v2647, %v3509
    %v3546 = vmul.f32 %v2648, %v3509
    %v3547 = vmul.f32 %v2649, %v3509
    %v3548 = vmul.f32 %v2650, %v3509
    %v3549 = vmul.f32 %v2651, %v3509
    %v3550 = vmul.f32 %v2652, %v3509
    %v3551 = vmul.f32 %v2653, %v3509
    %v3552 = vmul.f32 %v2654, %v3509
    %v3553 = vmul.f32 %v2655, %v3509
    %v3554 = vmul.f32 %v2656, %v3509
    %v3555 = vmul.f32 %v2657, %v3509
    %v3556 = vmul.f32 %v2658, %v3509
    %v3557 = vmul.f32 %v2659, %v3509
    %v3558 = vmul.f32 %v2660, %v3509
    %v3559 = vmul.f32 %v2661, %v3509
    %v3560 = vmul.f32 %v2662, %v3509
    %v3561 = vmul.f32 %v2663, %v3509
    %v3562 = vmul.f32 %v2664, %v3509
    %v3563 = vmul.f32 %v2665, %v3509
    %v3564 = vmul.f32 %v2666, %v3509
    %v3565 = vmul.f32 %v2667, %v3509
    %v3566 = vmul.f32 %v2668, %v3509
    %v3567 = vmul.f32 %v2669, %v3509
    %v3568 = vmul.f32 %v2670, %v3509
    %v3569 = vmul.f32 %v2671, %v3509
    %v3570 = vmul.f32 %v2672, %v3509
    %v3571 = vmul.f32 %v2673, %v3509
    %v3572 = vmul.f32 %v2674, %v3509
    %v3573 = vmul.f32 %v2675, %v3509
    %v3574 = vadd.f32 %v3442, %v3510
    %v3575 = vadd.f32 %v3443, %v3511
    %v3576 = vadd.f32 %v3444, %v3512
    %v3577 = vadd.f32 %v3445, %v3513
    %v3578 = vadd.f32 %v3446, %v3514
    %v3579 = vadd.f32 %v3447, %v3515
    %v3580 = vadd.f32 %v3448, %v3516
    %v3581 = vadd.f32 %v3449, %v3517
    %v3582 = vadd.f32 %v3450, %v3518
    %v3583 = vadd.f32 %v3451, %v3519
    %v3584 = vadd.f32 %v3452, %v3520
    %v3585 = vadd.f32 %v3453, %v3521
    %v3586 = vadd.f32 %v3454, %v3522
    %v3587 = vadd.f32 %v3455, %v3523
    %v3588 = vadd.f32 %v3456, %v3524
    %v3589 = vadd.f32 %v3457, %v3525
    %v3590 = vadd.f32 %v3458, %v3526
    %v3591 = vadd.f32 %v3459, %v3527
    %v3592 = vadd.f32 %v3460, %v3528
    %v3593 = vadd.f32 %v3461, %v3529
    %v3594 = vadd.f32 %v3462, %v3530
    %v3595 = vadd.f32 %v3463, %v3531
    %v3596 = vadd.f32 %v3464, %v3532
    %v3597 = vadd.f32 %v3465, %v3533
    %v3598 = vadd.f32 %v3466, %v3534
    %v3599 = vadd.f32 %v3467, %v3535
    %v3600 = vadd.f32 %v3468, %v3536
    %v3601 = vadd.f32 %v3469, %v3537
    %v3602 = vadd.f32 %v3470, %v3538
    %v3603 = vadd.f32 %v3471, %v3539
    %v3604 = vadd.f32 %v3472, %v3540
    %v3605 = vadd.f32 %v3473, %v3541
    %v3606 = vadd.f32 %v3474, %v3542
    %v3607 = vadd.f32 %v3475, %v3543
    %v3608 = vadd.f32 %v3476, %v3544
    %v3609 = vadd.f32 %v3477, %v3545
    %v3610 = vadd.f32 %v3478, %v3546
    %v3611 = vadd.f32 %v3479, %v3547
    %v3612 = vadd.f32 %v3480, %v3548
    %v3613 = vadd.f32 %v3481, %v3549
    %v3614 = vadd.f32 %v3482, %v3550
    %v3615 = vadd.f32 %v3483, %v3551
    %v3616 = vadd.f32 %v3484, %v3552
    %v3617 = vadd.f32 %v3485, %v3553
    %v3618 = vadd.f32 %v3486, %v3554
    %v3619 = vadd.f32 %v3487, %v3555
    %v3620 = vadd.f32 %v3488, %v3556
    %v3621 = vadd.f32 %v3489, %v3557
    %v3622 = vadd.f32 %v3490, %v3558
    %v3623 = vadd.f32 %v3491, %v3559
    %v3624 = vadd.f32 %v3492, %v3560
    %v3625 = vadd.f32 %v3493, %v3561
    %v3626 = vadd.f32 %v3494, %v3562
    %v3627 = vadd.f32 %v3495, %v3563
    %v3628 = vadd.f32 %v3496, %v3564
    %v3629 = vadd.f32 %v3497, %v3565
    %v3630 = vadd.f32 %v3498, %v3566
    %v3631 = vadd.f32 %v3499, %v3567
    %v3632 = vadd.f32 %v3500, %v3568
    %v3633 = vadd.f32 %v3501, %v3569
    %v3634 = vadd.f32 %v3502, %v3570
    %v3635 = vadd.f32 %v3503, %v3571
    %v3636 = vadd.f32 %v3504, %v3572
    %v3637 = vadd.f32 %v3505, %v3573
    %v3638 = vlaneseq
    %v3639 = vshrl.u32 %v3638, 7
    %v3640 = vsub.s32 5, %v3639
    %v3641 = vrot.slane %v2676, %v3640
    %v3642 = vmul.f32 %v2936, %v3641
    %v3643 = vmul.f32 %v3094, %v3641
    %v3644 = vmul.f32 %v2939, %v3641
    %v3645 = vmul.f32 %v3095, %v3641
    %v3646 = vmul.f32 %v2942, %v3641
    %v3647 = vmul.f32 %v3096, %v3641
    %v3648 = vmul.f32 %v2945, %v3641
    %v3649 = vmul.f32 %v3097, %v3641
    %v3650 = vmul.f32 %v2948, %v3641
    %v3651 = vmul.f32 %v3098, %v3641
    %v3652 = vmul.f32 %v2951, %v3641
    %v3653 = vmul.f32 %v3099, %v3641
    %v3654 = vmul.f32 %v2954, %v3641
    %v3655 = vmul.f32 %v3100, %v3641
    %v3656 = vmul.f32 %v2957, %v3641
    %v3657 = vmul.f32 %v3101, %v3641
    %v3658 = vmul.f32 %v2960, %v3641
    %v3659 = vmul.f32 %v3102, %v3641
    %v3660 = vmul.f32 %v2963, %v3641
    %v3661 = vmul.f32 %v3103, %v3641
    %v3662 = vmul.f32 %v2966, %v3641
    %v3663 = vmul.f32 %v3104, %v3641
    %v3664 = vmul.f32 %v2969, %v3641
    %v3665 = vmul.f32 %v3105, %v3641
    %v3666 = vmul.f32 %v2972, %v3641
    %v3667 = vmul.f32 %v3106, %v3641
    %v3668 = vmul.f32 %v2975, %v3641
    %v3669 = vmul.f32 %v3107, %v3641
    %v3670 = vmul.f32 %v2978, %v3641
    %v3671 = vmul.f32 %v3108, %v3641
    %v3672 = vmul.f32 %v2981, %v3641
    %v3673 = vmul.f32 %v3109, %v3641
    %v3674 = vmul.f32 %v2984, %v3641
    %v3675 = vmul.f32 %v3110, %v3641
    %v3676 = vmul.f32 %v2987, %v3641
    %v3677 = vmul.f32 %v3111, %v3641
    %v3678 = vmul.f32 %v2990, %v3641
    %v3679 = vmul.f32 %v3112, %v3641
    %v3680 = vmul.f32 %v2993, %v3641
    %v3681 = vmul.f32 %v3113, %v3641
    %v3682 = vmul.f32 %v2996, %v3641
    %v3683 = vmul.f32 %v3114, %v3641
    %v3684 = vmul.f32 %v2999, %v3641
    %v3685 = vmul.f32 %v3115, %v3641
    %v3686 = vmul.f32 %v3002, %v3641
    %v3687 = vmul.f32 %v3116, %v3641
    %v3688 = vmul.f32 %v3005, %v3641
    %v3689 = vmul.f32 %v3117, %v3641
    %v3690 = vmul.f32 %v3008, %v3641
    %v3691 = vmul.f32 %v3118, %v3641
    %v3692 = vmul.f32 %v3011, %v3641
    %v3693 = vmul.f32 %v3119, %v3641
    %v3694 = vmul.f32 %v3014, %v3641
    %v3695 = vmul.f32 %v3120, %v3641
    %v3696 = vmul.f32 %v3017, %v3641
    %v3697 = vmul.f32 %v3121, %v3641
    %v3698 = vmul.f32 %v3020, %v3641
    %v3699 = vmul.f32 %v3122, %v3641
    %v3700 = vmul.f32 %v3023, %v3641
    %v3701 = vmul.f32 %v3123, %v3641
    %v3702 = vmul.f32 %v3026, %v3641
    %v3703 = vmul.f32 %v3124, %v3641
    %v3704 = vmul.f32 %v3029, %v3641
    %v3705 = vmul.f32 %v3125, %v3641
    %v3706 = vadd.f32 %v3574, %v3642
    %v3707 = vadd.f32 %v3575, %v3643
    %v3708 = vadd.f32 %v3576, %v3644
    %v3709 = vadd.f32 %v3577, %v3645
    %v3710 = vadd.f32 %v3578, %v3646
    %v3711 = vadd.f32 %v3579, %v3647
    %v3712 = vadd.f32 %v3580, %v3648
    %v3713 = vadd.f32 %v3581, %v3649
    %v3714 = vadd.f32 %v3582, %v3650
    %v3715 = vadd.f32 %v3583, %v3651
    %v3716 = vadd.f32 %v3584, %v3652
    %v3717 = vadd.f32 %v3585, %v3653
    %v3718 = vadd.f32 %v3586, %v3654
    %v3719 = vadd.f32 %v3587, %v3655
    %v3720 = vadd.f32 %v3588, %v3656
    %v3721 = vadd.f32 %v3589, %v3657
    %v3722 = vadd.f32 %v3590, %v3658
    %v3723 = vadd.f32 %v3591, %v3659
    %v3724 = vadd.f32 %v3592, %v3660
    %v3725 = vadd.f32 %v3593, %v3661
    %v3726 = vadd.f32 %v3594, %v3662
    %v3727 = vadd.f32 %v3595, %v3663
    %v3728 = vadd.f32 %v3596, %v3664
    %v3729 = vadd.f32 %v3597, %v3665
    %v3730 = vadd.f32 %v3598, %v3666
    %v3731 = vadd.f32 %v3599, %v3667
    %v3732 = vadd.f32 %v3600, %v3668
    %v3733 = vadd.f32 %v3601, %v3669
    %v3734 = vadd.f32 %v3602, %v3670
    %v3735 = vadd.f32 %v3603, %v3671
    %v3736 = vadd.f32 %v3604, %v3672
    %v3737 = vadd.f32 %v3605, %v3673
    %v3738 = vadd.f32 %v3606, %v3674
    %v3739 = vadd.f32 %v3607, %v3675
    %v3740 = vadd.f32 %v3608, %v3676
    %v3741 = vadd.f32 %v3609, %v3677
    %v3742 = vadd.f32 %v3610, %v3678
    %v3743 = vadd.f32 %v3611, %v3679
    %v3744 = vadd.f32 %v3612, %v3680
    %v3745 = vadd.f32 %v3613, %v3681
    %v3746 = vadd.f32 %v3614, %v3682
    %v3747 = vadd.f32 %v3615, %v3683
    %v3748 = vadd.f32 %v3616, %v3684
    %v3749 = vadd.f32 %v3617, %v3685
    %v3750 = vadd.f32 %v3618, %v3686
    %v3751 = vadd.f32 %v3619, %v3687
    %v3752 = vadd.f32 %v3620, %v3688
    %v3753 = vadd.f32 %v3621, %v3689
    %v3754 = vadd.f32 %v3622, %v3690
    %v3755 = vadd.f32 %v3623, %v3691
    %v3756 = vadd.f32 %v3624, %v3692
    %v3757 = vadd.f32 %v3625, %v3693
    %v3758 = vadd.f32 %v3626, %v3694
    %v3759 = vadd.f32 %v3627, %v3695
    %v3760 = vadd.f32 %v3628, %v3696
    %v3761 = vadd.f32 %v3629, %v3697
    %v3762 = vadd.f32 %v3630, %v3698
    %v3763 = vadd.f32 %v3631, %v3699
    %v3764 = vadd.f32 %v3632, %v3700
    %v3765 = vadd.f32 %v3633, %v3701
    %v3766 = vadd.f32 %v3634, %v3702
    %v3767 = vadd.f32 %v3635, %v3703
    %v3768 = vadd.f32 %v3636, %v3704
    %v3769 = vadd.f32 %v3637, %v3705
    %v3770 = vadd.f32 %v3706, 0.0
    %v3771 = vadd.f32 %v3707, 0.0
    %v3772 = vadd.f32 %v3378, %v3708
    %v3773 = vadd.f32 %v3379, %v3709
    %v3774 = vadd.f32 %v3380, %v3710
    %v3775 = vadd.f32 %v3381, %v3711
    %v3776 = vadd.f32 %v3382, %v3712
    %v3777 = vadd.f32 %v3383, %v3713
    %v3778 = vadd.f32 %v3384, %v3714
    %v3779 = vadd.f32 %v3385, %v3715
    %v3780 = vadd.f32 %v3386, %v3716
    %v3781 = vadd.f32 %v3387, %v3717
    %v3782 = vadd.f32 %v3388, %v3718
    %v3783 = vadd.f32 %v3389, %v3719
    %v3784 = vadd.f32 %v3390, %v3720
    %v3785 = vadd.f32 %v3391, %v3721
    %v3786 = vadd.f32 %v3392, %v3722
    %v3787 = vadd.f32 %v3393, %v3723
    %v3788 = vadd.f32 %v3394, %v3724
    %v3789 = vadd.f32 %v3395, %v3725
    %v3790 = vadd.f32 %v3396, %v3726
    %v3791 = vadd.f32 %v3397, %v3727
    %v3792 = vadd.f32 %v3398, %v3728
    %v3793 = vadd.f32 %v3399, %v3729
    %v3794 = vadd.f32 %v3400, %v3730
    %v3795 = vadd.f32 %v3401, %v3731
    %v3796 = vadd.f32 %v3402, %v3732
    %v3797 = vadd.f32 %v3403, %v3733
    %v3798 = vadd.f32 %v3404, %v3734
    %v3799 = vadd.f32 %v3405, %v3735
    %v3800 = vadd.f32 %v3406, %v3736
    %v3801 = vadd.f32 %v3407, %v3737
    %v3802 = vadd.f32 %v3738, 0.0
    %v3803 = vadd.f32 %v3739, 0.0
    %v3804 = vadd.f32 %v3408, %v3740
    %v3805 = vadd.f32 %v3409, %v3741
    %v3806 = vadd.f32 %v3410, %v3742
    %v3807 = vadd.f32 %v3411, %v3743
    %v3808 = vadd.f32 %v3412, %v3744
    %v3809 = vadd.f32 %v3413, %v3745
    %v3810 = vadd.f32 %v3414, %v3746
    %v3811 = vadd.f32 %v3415, %v3747
    %v3812 = vadd.f32 %v3416, %v3748
    %v3813 = vadd.f32 %v3417, %v3749
    %v3814 = vadd.f32 %v3418, %v3750
    %v3815 = vadd.f32 %v3419, %v3751
    %v3816 = vadd.f32 %v3420, %v3752
    %v3817 = vadd.f32 %v3421, %v3753
    %v3818 = vadd.f32 %v3422, %v3754
    %v3819 = vadd.f32 %v3423, %v3755
    %v3820 = vadd.f32 %v3424, %v3756
    %v3821 = vadd.f32 %v3425, %v3757
    %v3822 = vadd.f32 %v3426, %v3758
    %v3823 = vadd.f32 %v3427, %v3759
    %v3824 = vadd.f32 %v3428, %v3760
    %v3825 = vadd.f32 %v3429, %v3761
    %v3826 = vadd.f32 %v3430, %v3762
    %v3827 = vadd.f32 %v3431, %v3763
    %v3828 = vadd.f32 %v3432, %v3764
    %v3829 = vadd.f32 %v3433, %v3765
    %v3830 = vadd.f32 %v3434, %v3766
    %v3831 = vadd.f32 %v3435, %v3767
    %v3832 = vadd.f32 %v3436, %v3768
    %v3833 = vadd.f32 %v3437, %v3769
    %v3834 = vlaneseq
    %v3835 = vshrl.u32 %v3834, 7
    %v3836 = vsub.s32 6, %v3835
    %v3837 = vrot.slane %v2676, %v3836
    %v3838 = vmul.f32 %v2903, %v3837
    %v3839 = vmul.f32 %v2747, %v3837
    %v3840 = vmul.f32 %v2904, %v3837
    %v3841 = vmul.f32 %v2750, %v3837
    %v3842 = vmul.f32 %v2905, %v3837
    %v3843 = vmul.f32 %v2753, %v3837
    %v3844 = vmul.f32 %v2906, %v3837
    %v3845 = vmul.f32 %v2756, %v3837
    %v3846 = vmul.f32 %v2907, %v3837
    %v3847 = vmul.f32 %v2759, %v3837
    %v3848 = vmul.f32 %v2908, %v3837
    %v3849 = vmul.f32 %v2762, %v3837
    %v3850 = vmul.f32 %v2909, %v3837
    %v3851 = vmul.f32 %v2765, %v3837
    %v3852 = vmul.f32 %v2910, %v3837
    %v3853 = vmul.f32 %v2768, %v3837
    %v3854 = vmul.f32 %v2911, %v3837
    %v3855 = vmul.f32 %v2771, %v3837
    %v3856 = vmul.f32 %v2912, %v3837
    %v3857 = vmul.f32 %v2774, %v3837
    %v3858 = vmul.f32 %v2913, %v3837
    %v3859 = vmul.f32 %v2777, %v3837
    %v3860 = vmul.f32 %v2914, %v3837
    %v3861 = vmul.f32 %v2780, %v3837
    %v3862 = vmul.f32 %v2915, %v3837
    %v3863 = vmul.f32 %v2783, %v3837
    %v3864 = vmul.f32 %v2916, %v3837
    %v3865 = vmul.f32 %v2786, %v3837
    %v3866 = vmul.f32 %v2917, %v3837
    %v3867 = vmul.f32 %v2789, %v3837
    %v3868 = vmul.f32 %v2919, %v3837
    %v3869 = vmul.f32 %v2795, %v3837
    %v3870 = vmul.f32 %v2920, %v3837
    %v3871 = vmul.f32 %v2798, %v3837
    %v3872 = vmul.f32 %v2921, %v3837
    %v3873 = vmul.f32 %v2801, %v3837
    %v3874 = vmul.f32 %v2922, %v3837
    %v3875 = vmul.f32 %v2804, %v3837
    %v3876 = vmul.f32 %v2923, %v3837
    %v3877 = vmul.f32 %v2807, %v3837
    %v3878 = vmul.f32 %v2924, %v3837
    %v3879 = vmul.f32 %v2810, %v3837
    %v3880 = vmul.f32 %v2925, %v3837
    %v3881 = vmul.f32 %v2813, %v3837
    %v3882 = vmul.f32 %v2926, %v3837
    %v3883 = vmul.f32 %v2816, %v3837
    %v3884 = vmul.f32 %v2927, %v3837
    %v3885 = vmul.f32 %v2819, %v3837
    %v3886 = vmul.f32 %v2928, %v3837
    %v3887 = vmul.f32 %v2822, %v3837
    %v3888 = vmul.f32 %v2929, %v3837
    %v3889 = vmul.f32 %v2825, %v3837
    %v3890 = vmul.f32 %v2930, %v3837
    %v3891 = vmul.f32 %v2828, %v3837
    %v3892 = vmul.f32 %v2931, %v3837
    %v3893 = vmul.f32 %v2831, %v3837
    %v3894 = vmul.f32 %v2932, %v3837
    %v3895 = vmul.f32 %v2834, %v3837
    %v3896 = vmul.f32 %v2933, %v3837
    %v3897 = vmul.f32 %v2837, %v3837
    %v3898 = vlaneseq
    %v3899 = vshrl.u32 %v3898, 7
    %v3900 = vsub.s32 7, %v3899
    %v3901 = vrot.slane %v2676, %v3900
    %v3902 = vmul.f32 %v2614, %v3901
    %v3903 = vmul.f32 %v2615, %v3901
    %v3904 = vmul.f32 %v2616, %v3901
    %v3905 = vmul.f32 %v2617, %v3901
    %v3906 = vmul.f32 %v2618, %v3901
    %v3907 = vmul.f32 %v2619, %v3901
    %v3908 = vmul.f32 %v2620, %v3901
    %v3909 = vmul.f32 %v2621, %v3901
    %v3910 = vmul.f32 %v2622, %v3901
    %v3911 = vmul.f32 %v2623, %v3901
    %v3912 = vmul.f32 %v2624, %v3901
    %v3913 = vmul.f32 %v2625, %v3901
    %v3914 = vmul.f32 %v2626, %v3901
    %v3915 = vmul.f32 %v2627, %v3901
    %v3916 = vmul.f32 %v2628, %v3901
    %v3917 = vmul.f32 %v2629, %v3901
    %v3918 = vmul.f32 %v2630, %v3901
    %v3919 = vmul.f32 %v2631, %v3901
    %v3920 = vmul.f32 %v2632, %v3901
    %v3921 = vmul.f32 %v2633, %v3901
    %v3922 = vmul.f32 %v2634, %v3901
    %v3923 = vmul.f32 %v2635, %v3901
    %v3924 = vmul.f32 %v2636, %v3901
    %v3925 = vmul.f32 %v2637, %v3901
    %v3926 = vmul.f32 %v2638, %v3901
    %v3927 = vmul.f32 %v2639, %v3901
    %v3928 = vmul.f32 %v2640, %v3901
    %v3929 = vmul.f32 %v2641, %v3901
    %v3930 = vmul.f32 %v2642, %v3901
    %v3931 = vmul.f32 %v2643, %v3901
    %v3932 = vmul.f32 %v2646, %v3901
    %v3933 = vmul.f32 %v2647, %v3901
    %v3934 = vmul.f32 %v2648, %v3901
    %v3935 = vmul.f32 %v2649, %v3901
    %v3936 = vmul.f32 %v2650, %v3901
    %v3937 = vmul.f32 %v2651, %v3901
    %v3938 = vmul.f32 %v2652, %v3901
    %v3939 = vmul.f32 %v2653, %v3901
    %v3940 = vmul.f32 %v2654, %v3901
    %v3941 = vmul.f32 %v2655, %v3901
    %v3942 = vmul.f32 %v2656, %v3901
    %v3943 = vmul.f32 %v2657, %v3901
    %v3944 = vmul.f32 %v2658, %v3901
    %v3945 = vmul.f32 %v2659, %v3901
    %v3946 = vmul.f32 %v2660, %v3901
    %v3947 = vmul.f32 %v2661, %v3901
    %v3948 = vmul.f32 %v2662, %v3901
    %v3949 = vmul.f32 %v2663, %v3901
    %v3950 = vmul.f32 %v2664, %v3901
    %v3951 = vmul.f32 %v2665, %v3901
    %v3952 = vmul.f32 %v2666, %v3901
    %v3953 = vmul.f32 %v2667, %v3901
    %v3954 = vmul.f32 %v2668, %v3901
    %v3955 = vmul.f32 %v2669, %v3901
    %v3956 = vmul.f32 %v2670, %v3901
    %v3957 = vmul.f32 %v2671, %v3901
    %v3958 = vmul.f32 %v2672, %v3901
    %v3959 = vmul.f32 %v2673, %v3901
    %v3960 = vmul.f32 %v2674, %v3901
    %v3961 = vmul.f32 %v2675, %v3901
    %v3962 = vadd.f32 %v3838, %v3902
    %v3963 = vadd.f32 %v3839, %v3903
    %v3964 = vadd.f32 %v3840, %v3904
    %v3965 = vadd.f32 %v3841, %v3905
    %v3966 = vadd.f32 %v3842, %v3906
    %v3967 = vadd.f32 %v3843, %v3907
    %v3968 = vadd.f32 %v3844, %v3908
    %v3969 = vadd.f32 %v3845, %v3909
    %v3970 = vadd.f32 %v3846, %v3910
    %v3971 = vadd.f32 %v3847, %v3911
    %v3972 = vadd.f32 %v3848, %v3912
    %v3973 = vadd.f32 %v3849, %v3913
    %v3974 = vadd.f32 %v3850, %v3914
    %v3975 = vadd.f32 %v3851, %v3915
    %v3976 = vadd.f32 %v3852, %v3916
    %v3977 = vadd.f32 %v3853, %v3917
    %v3978 = vadd.f32 %v3854, %v3918
    %v3979 = vadd.f32 %v3855, %v3919
    %v3980 = vadd.f32 %v3856, %v3920
    %v3981 = vadd.f32 %v3857, %v3921
    %v3982 = vadd.f32 %v3858, %v3922
    %v3983 = vadd.f32 %v3859, %v3923
    %v3984 = vadd.f32 %v3860, %v3924
    %v3985 = vadd.f32 %v3861, %v3925
    %v3986 = vadd.f32 %v3862, %v3926
    %v3987 = vadd.f32 %v3863, %v3927
    %v3988 = vadd.f32 %v3864, %v3928
    %v3989 = vadd.f32 %v3865, %v3929
    %v3990 = vadd.f32 %v3866, %v3930
    %v3991 = vadd.f32 %v3867, %v3931
    %v3992 = vadd.f32 %v3868, %v3932
    %v3993 = vadd.f32 %v3869, %v3933
    %v3994 = vadd.f32 %v3870, %v3934
    %v3995 = vadd.f32 %v3871, %v3935
    %v3996 = vadd.f32 %v3872, %v3936
    %v3997 = vadd.f32 %v3873, %v3937
    %v3998 = vadd.f32 %v3874, %v3938
    %v3999 = vadd.f32 %v3875, %v3939
    %v4000 = vadd.f32 %v3876, %v3940
    %v4001 = vadd.f32 %v3877, %v3941
    %v4002 = vadd.f32 %v3878, %v3942
    %v4003 = vadd.f32 %v3879, %v3943
    %v4004 = vadd.f32 %v3880, %v3944
    %v4005 = vadd.f32 %v3881, %v3945
    %v4006 = vadd.f32 %v3882, %v3946
    %v4007 = vadd.f32 %v3883, %v3947
    %v4008 = vadd.f32 %v3884, %v3948
    %v4009 = vadd.f32 %v3885, %v3949
    %v4010 = vadd.f32 %v3886, %v3950
    %v4011 = vadd.f32 %v3887, %v3951
    %v4012 = vadd.f32 %v3888, %v3952
    %v4013 = vadd.f32 %v3889, %v3953
    %v4014 = vadd.f32 %v3890, %v3954
    %v4015 = vadd.f32 %v3891, %v3955
    %v4016 = vadd.f32 %v3892, %v3956
    %v4017 = vadd.f32 %v3893, %v3957
    %v4018 = vadd.f32 %v3894, %v3958
    %v4019 = vadd.f32 %v3895, %v3959
    %v4020 = vadd.f32 %v3896, %v3960
    %v4021 = vadd.f32 %v3897, %v3961
    %v4022 = vlaneseq
    %v4023 = vshrl.u32 %v4022, 7
    %v4024 = vsub.s32 0, %v4023
    %v4025 = vrot.slane %v2677, %v4024
    %v4026 = vmul.f32 %v2939, %v4025
    %v4027 = vmul.f32 %v3095, %v4025
    %v4028 = vmul.f32 %v2942, %v4025
    %v4029 = vmul.f32 %v3096, %v4025
    %v4030 = vmul.f32 %v2945, %v4025
    %v4031 = vmul.f32 %v3097, %v4025
    %v4032 = vmul.f32 %v2948, %v4025
    %v4033 = vmul.f32 %v3098, %v4025
    %v4034 = vmul.f32 %v2951, %v4025
    %v4035 = vmul.f32 %v3099, %v4025
    %v4036 = vmul.f32 %v2954, %v4025
    %v4037 = vmul.f32 %v3100, %v4025
    %v4038 = vmul.f32 %v2957, %v4025
    %v4039 = vmul.f32 %v3101, %v4025
    %v4040 = vmul.f32 %v2960, %v4025
    %v4041 = vmul.f32 %v3102, %v4025
    %v4042 = vmul.f32 %v2963, %v4025
    %v4043 = vmul.f32 %v3103, %v4025
    %v4044 = vmul.f32 %v2966, %v4025
    %v4045 = vmul.f32 %v3104, %v4025
    %v4046 = vmul.f32 %v2969, %v4025
    %v4047 = vmul.f32 %v3105, %v4025
    %v4048 = vmul.f32 %v2972, %v4025
    %v4049 = vmul.f32 %v3106, %v4025
    %v4050 = vmul.f32 %v2975, %v4025
    %v4051 = vmul.f32 %v3107, %v4025
    %v4052 = vmul.f32 %v2978, %v4025
    %v4053 = vmul.f32 %v3108, %v4025
    %v4054 = vmul.f32 %v2981, %v4025
    %v4055 = vmul.f32 %v3109, %v4025
    %v4056 = vmul.f32 %v2987, %v4025
    %v4057 = vmul.f32 %v3111, %v4025
    %v4058 = vmul.f32 %v2990, %v4025
    %v4059 = vmul.f32 %v3112, %v4025
    %v4060 = vmul.f32 %v2993, %v4025
    %v4061 = vmul.f32 %v3113, %v4025
    %v4062 = vmul.f32 %v2996, %v4025
    %v4063 = vmul.f32 %v3114, %v4025
    %v4064 = vmul.f32 %v2999, %v4025
    %v4065 = vmul.f32 %v3115, %v4025
    %v4066 = vmul.f32 %v3002, %v4025
    %v4067 = vmul.f32 %v3116, %v4025
    %v4068 = vmul.f32 %v3005, %v4025
    %v4069 = vmul.f32 %v3117, %v4025
    %v4070 = vmul.f32 %v3008, %v4025
    %v4071 = vmul.f32 %v3118, %v4025
    %v4072 = vmul.f32 %v3011, %v4025
    %v4073 = vmul.f32 %v3119, %v4025
    %v4074 = vmul.f32 %v3014, %v4025
    %v4075 = vmul.f32 %v3120, %v4025
    %v4076 = vmul.f32 %v3017, %v4025
    %v4077 = vmul.f32 %v3121, %v4025
    %v4078 = vmul.f32 %v3020, %v4025
    %v4079 = vmul.f32 %v3122, %v4025
    %v4080 = vmul.f32 %v3023, %v4025
    %v4081 = vmul.f32 %v3123, %v4025
    %v4082 = vmul.f32 %v3026, %v4025
    %v4083 = vmul.f32 %v3124, %v4025
    %v4084 = vmul.f32 %v3029, %v4025
    %v4085 = vmul.f32 %v3125, %v4025
    %v4086 = vadd.f32 %v3962, %v4026
    %v4087 = vadd.f32 %v3963, %v4027
    %v4088 = vadd.f32 %v3964, %v4028
    %v4089 = vadd.f32 %v3965, %v4029
    %v4090 = vadd.f32 %v3966, %v4030
    %v4091 = vadd.f32 %v3967, %v4031
    %v4092 = vadd.f32 %v3968, %v4032
    %v4093 = vadd.f32 %v3969, %v4033
    %v4094 = vadd.f32 %v3970, %v4034
    %v4095 = vadd.f32 %v3971, %v4035
    %v4096 = vadd.f32 %v3972, %v4036
    %v4097 = vadd.f32 %v3973, %v4037
    %v4098 = vadd.f32 %v3974, %v4038
    %v4099 = vadd.f32 %v3975, %v4039
    %v4100 = vadd.f32 %v3976, %v4040
    %v4101 = vadd.f32 %v3977, %v4041
    %v4102 = vadd.f32 %v3978, %v4042
    %v4103 = vadd.f32 %v3979, %v4043
    %v4104 = vadd.f32 %v3980, %v4044
    %v4105 = vadd.f32 %v3981, %v4045
    %v4106 = vadd.f32 %v3982, %v4046
    %v4107 = vadd.f32 %v3983, %v4047
    %v4108 = vadd.f32 %v3984, %v4048
    %v4109 = vadd.f32 %v3985, %v4049
    %v4110 = vadd.f32 %v3986, %v4050
    %v4111 = vadd.f32 %v3987, %v4051
    %v4112 = vadd.f32 %v3988, %v4052
    %v4113 = vadd.f32 %v3989, %v4053
    %v4114 = vadd.f32 %v3990, %v4054
    %v4115 = vadd.f32 %v3991, %v4055
    %v4116 = vadd.f32 %v3992, %v4056
    %v4117 = vadd.f32 %v3993, %v4057
    %v4118 = vadd.f32 %v3994, %v4058
    %v4119 = vadd.f32 %v3995, %v4059
    %v4120 = vadd.f32 %v3996, %v4060
    %v4121 = vadd.f32 %v3997, %v4061
    %v4122 = vadd.f32 %v3998, %v4062
    %v4123 = vadd.f32 %v3999, %v4063
    %v4124 = vadd.f32 %v4000, %v4064
    %v4125 = vadd.f32 %v4001, %v4065
    %v4126 = vadd.f32 %v4002, %v4066
    %v4127 = vadd.f32 %v4003, %v4067
    %v4128 = vadd.f32 %v4004, %v4068
    %v4129 = vadd.f32 %v4005, %v4069
    %v4130 = vadd.f32 %v4006, %v4070
    %v4131 = vadd.f32 %v4007, %v4071
    %v4132 = vadd.f32 %v4008, %v4072
    %v4133 = vadd.f32 %v4009, %v4073
    %v4134 = vadd.f32 %v4010, %v4074
    %v4135 = vadd.f32 %v4011, %v4075
    %v4136 = vadd.f32 %v4012, %v4076
    %v4137 = vadd.f32 %v4013, %v4077
    %v4138 = vadd.f32 %v4014, %v4078
    %v4139 = vadd.f32 %v4015, %v4079
    %v4140 = vadd.f32 %v4016, %v4080
    %v4141 = vadd.f32 %v4017, %v4081
    %v4142 = vadd.f32 %v4018, %v4082
    %v4143 = vadd.f32 %v4019, %v4083
    %v4144 = vadd.f32 %v4020, %v4084
    %v4145 = vadd.f32 %v4021, %v4085
    %v4146 = vadd.f32 %v3770, %v4086
    %v4147 = vadd.f32 %v3771, %v4087
    %v4148 = vadd.f32 %v3772, %v4088
    %v4149 = vadd.f32 %v3773, %v4089
    %v4150 = vadd.f32 %v3774, %v4090
    %v4151 = vadd.f32 %v3775, %v4091
    %v4152 = vadd.f32 %v3776, %v4092
    %v4153 = vadd.f32 %v3777, %v4093
    %v4154 = vadd.f32 %v3778, %v4094
    %v4155 = vadd.f32 %v3779, %v4095
    %v4156 = vadd.f32 %v3780, %v4096
    %v4157 = vadd.f32 %v3781, %v4097
    %v4158 = vadd.f32 %v3782, %v4098
    %v4159 = vadd.f32 %v3783, %v4099
    %v4160 = vadd.f32 %v3784, %v4100
    %v4161 = vadd.f32 %v3785, %v4101
    %v4162 = vadd.f32 %v3786, %v4102
    %v4163 = vadd.f32 %v3787, %v4103
    %v4164 = vadd.f32 %v3788, %v4104
    %v4165 = vadd.f32 %v3789, %v4105
    %v4166 = vadd.f32 %v3790, %v4106
    %v4167 = vadd.f32 %v3791, %v4107
    %v4168 = vadd.f32 %v3792, %v4108
    %v4169 = vadd.f32 %v3793, %v4109
    %v4170 = vadd.f32 %v3794, %v4110
    %v4171 = vadd.f32 %v3795, %v4111
    %v4172 = vadd.f32 %v3796, %v4112
    %v4173 = vadd.f32 %v3797, %v4113
    %v4174 = vadd.f32 %v3798, %v4114
    %v4175 = vadd.f32 %v3799, %v4115
    %v4176 = vadd.f32 %v3800, 0.0
    %v4177 = vadd.f32 %v3801, 0.0
    %v4178 = vadd.f32 %v3802, %v4116
    %v4179 = vadd.f32 %v3803, %v4117
    %v4180 = vadd.f32 %v3804, %v4118
    %v4181 = vadd.f32 %v3805, %v4119
    %v4182 = vadd.f32 %v3806, %v4120
    %v4183 = vadd.f32 %v3807, %v4121
    %v4184 = vadd.f32 %v3808, %v4122
    %v4185 = vadd.f32 %v3809, %v4123
    %v4186 = vadd.f32 %v3810, %v4124
    %v4187 = vadd.f32 %v3811, %v4125
    %v4188 = vadd.f32 %v3812, %v4126
    %v4189 = vadd.f32 %v3813, %v4127
    %v4190 = vadd.f32 %v3814, %v4128
    %v4191 = vadd.f32 %v3815, %v4129
    %v4192 = vadd.f32 %v3816, %v4130
    %v4193 = vadd.f32 %v3817, %v4131
    %v4194 = vadd.f32 %v3818, %v4132
    %v4195 = vadd.f32 %v3819, %v4133
    %v4196 = vadd.f32 %v3820, %v4134
    %v4197 = vadd.f32 %v3821, %v4135
    %v4198 = vadd.f32 %v3822, %v4136
    %v4199 = vadd.f32 %v3823, %v4137
    %v4200 = vadd.f32 %v3824, %v4138
    %v4201 = vadd.f32 %v3825, %v4139
    %v4202 = vadd.f32 %v3826, %v4140
    %v4203 = vadd.f32 %v3827, %v4141
    %v4204 = vadd.f32 %v3828, %v4142
    %v4205 = vadd.f32 %v3829, %v4143
    %v4206 = vadd.f32 %v3830, %v4144
    %v4207 = vadd.f32 %v3831, %v4145
    %v4208 = vadd.f32 %v3832, 0.0
    %v4209 = vadd.f32 %v3833, 0.0
    %v4210 = vpack.c.bf16 %v4147, %v4146
    %v4211 = vpack.c.bf16 %v4149, %v4148
    %v4212 = vpack.c.bf16 %v4151, %v4150
    %v4213 = vpack.c.bf16 %v4153, %v4152
    %v4214 = vpack.c.bf16 %v4155, %v4154
    %v4215 = vpack.c.bf16 %v4157, %v4156
    %v4216 = vpack.c.bf16 %v4159, %v4158
    %v4217 = vpack.c.bf16 %v4161, %v4160
    %v4218 = vpack.c.bf16 %v4163, %v4162
    %v4219 = vpack.c.bf16 %v4165, %v4164
    %v4220 = vpack.c.bf16 %v4167, %v4166
    %v4221 = vpack.c.bf16 %v4169, %v4168
    %v4222 = vpack.c.bf16 %v4171, %v4170
    %v4223 = vpack.c.bf16 %v4173, %v4172
    %v4224 = vpack.c.bf16 %v4175, %v4174
    %v4225 = vpack.c.bf16 %v4177, %v4176
    %v4226 = vpack.c.bf16 %v4179, %v4178
    %v4227 = vpack.c.bf16 %v4181, %v4180
    %v4228 = vpack.c.bf16 %v4183, %v4182
    %v4229 = vpack.c.bf16 %v4185, %v4184
    %v4230 = vpack.c.bf16 %v4187, %v4186
    %v4231 = vpack.c.bf16 %v4189, %v4188
    %v4232 = vpack.c.bf16 %v4191, %v4190
    %v4233 = vpack.c.bf16 %v4193, %v4192
    %v4234 = vpack.c.bf16 %v4195, %v4194
    %v4235 = vpack.c.bf16 %v4197, %v4196
    %v4236 = vpack.c.bf16 %v4199, %v4198
    %v4237 = vpack.c.bf16 %v4201, %v4200
    %v4238 = vpack.c.bf16 %v4203, %v4202
    %v4239 = vpack.c.bf16 %v4205, %v4204
    %v4240 = vpack.c.bf16 %v4207, %v4206
    %v4241 = vpack.c.bf16 %v4209, %v4208
    %v4242 = vld [vmem:[%s6] sm:$0xff]
    %v4243 = vpack.c.bf16 %v4242, %v4242
    %v4245 = vsel %vm2133, %v4210, 0
    %v4248 = vsel %vm2133, %v4211, 0
    %v4251 = vsel %vm2133, %v4212, 0
    %v4254 = vsel %vm2133, %v4213, 0
    %v4257 = vsel %vm2133, %v4214, 0
    %v4260 = vsel %vm2133, %v4215, 0
    %v4263 = vsel %vm2133, %v4216, 0
    %v4266 = vsel %vm2133, %v4217, 0
    %v4269 = vsel %vm2133, %v4218, 0
    %v4272 = vsel %vm2133, %v4219, 0
    %v4275 = vsel %vm2133, %v4220, 0
    %v4278 = vsel %vm2133, %v4221, 0
    %v4281 = vsel %vm2133, %v4222, 0
    %v4284 = vsel %vm2133, %v4223, 0
    %v4287 = vsel %vm2133, %v4224, 0
    %v4290 = vsel %vm2133, %v4225, 0
    %v4293 = vsel %vm2133, %v4226, 0
    %v4296 = vsel %vm2133, %v4227, 0
    %v4299 = vsel %vm2133, %v4228, 0
    %v4302 = vsel %vm2133, %v4229, 0
    %v4305 = vsel %vm2133, %v4230, 0
    %v4308 = vsel %vm2133, %v4231, 0
    %v4311 = vsel %vm2133, %v4232, 0
    %v4314 = vsel %vm2133, %v4233, 0
    %v4317 = vsel %vm2133, %v4234, 0
    %v4320 = vsel %vm2133, %v4235, 0
    %v4323 = vsel %vm2133, %v4236, 0
    %v4326 = vsel %vm2133, %v4237, 0
    %v4329 = vsel %vm2133, %v4238, 0
    %v4332 = vsel %vm2133, %v4239, 0
    %v4335 = vsel %vm2133, %v4240, 0
    %v4338 = vsel %vm2133, %v4241, 0
    %vm4340 = vcmask 1043456
    %v4342 = vsel %vm4340, %v4243, 0
    %4344 = vmatprep.subr.bf16.mxu0 0
    %4345 = vmatpush1.bf16.msra.mxu0 0
    %4346 = vmatprep.subr.bf16.mxu0 0
    %4347 = vmatpush1.bf16.msra.mxu0 0
    %4348 = vmatprep.subr.bf16.mxu0 0
    %4349 = vmatpush1.bf16.msra.mxu0 0
    %4350 = vmatprep.subr.bf16.mxu0 0
    %4351 = vmatpush1.bf16.msra.mxu0 0
    %4352 = vmatprep.subr.bf16.mxu0 0
    %4353 = vmatpush1.bf16.msra.mxu0 0
    %4354 = vmatprep.subr.bf16.mxu0 0
    %4355 = vmatpush1.bf16.msra.mxu0 0
    %4356 = vmatprep.subr.bf16.mxu0 0
    %4357 = vmatpush1.bf16.msra.mxu0 0
    %4358 = vmatprep.subr.bf16.mxu0 0
    %4359 = vmatpush1.bf16.msra.mxu0 %v4342
    %4360 = vmatprep.subr.bf16.mxu0 0
    %4361 = vmatpush2.bf16.msra.mxu0 0
    %4362 = vmatprep.subr.bf16.mxu0 0
    %4363 = vmatpush2.bf16.msra.mxu0 0
    %4364 = vmatprep.subr.bf16.mxu0 0
    %4365 = vmatpush2.bf16.msra.mxu0 0
    %4366 = vmatprep.subr.bf16.mxu0 0
    %4367 = vmatpush2.bf16.msra.mxu0 0
    %4368 = vmatprep.subr.bf16.mxu0 0
    %4369 = vmatpush2.bf16.msra.mxu0 0
    %4370 = vmatprep.subr.bf16.mxu0 0
    %4371 = vmatpush2.bf16.msra.mxu0 0
    %4372 = vmatprep.subr.bf16.mxu0 0
    %4373 = vmatpush2.bf16.msra.mxu0 0
    %4374 = vmatprep.subr.bf16.mxu0 0
    %4375 = vmatpush2.bf16.msra.mxu0 0
    %4376 = vmatprep.mubr.bf16.mxu0 0
    %4377 = vmatmul.mubr.bf16.gmra.mxu0 %v4245
    %v4378 = vpop.f32.mrf.mxu0
    %v4379 = vadd.f32 0.0, %v4378
    %v4380 = vpop.f32.mrf.mxu0
    %v4381 = vpop.f32.mrf.mxu0
    %v4382 = vadd.f32 0.0, %v4381
    %v4383 = vpop.f32.mrf.mxu0
    %4384 = vmatprep.mubr.bf16.mxu0 0
    %4385 = vmatmul.mubr.bf16.gmra.mxu0 %v4248
    %v4386 = vpop.f32.mrf.mxu0
    %v4387 = vadd.f32 0.0, %v4386
    %v4388 = vpop.f32.mrf.mxu0
    %v4389 = vpop.f32.mrf.mxu0
    %v4390 = vadd.f32 0.0, %v4389
    %v4391 = vpop.f32.mrf.mxu0
    %4392 = vmatprep.mubr.bf16.mxu0 0
    %4393 = vmatmul.mubr.bf16.gmra.mxu0 %v4251
    %v4394 = vpop.f32.mrf.mxu0
    %v4395 = vadd.f32 0.0, %v4394
    %v4396 = vpop.f32.mrf.mxu0
    %v4397 = vpop.f32.mrf.mxu0
    %v4398 = vadd.f32 0.0, %v4397
    %v4399 = vpop.f32.mrf.mxu0
    %4400 = vmatprep.mubr.bf16.mxu0 0
    %4401 = vmatmul.mubr.bf16.gmra.mxu0 %v4254
    %v4402 = vpop.f32.mrf.mxu0
    %v4403 = vadd.f32 0.0, %v4402
    %v4404 = vpop.f32.mrf.mxu0
    %v4405 = vpop.f32.mrf.mxu0
    %v4406 = vadd.f32 0.0, %v4405
    %v4407 = vpop.f32.mrf.mxu0
    %4408 = vmatprep.mubr.bf16.mxu0 0
    %4409 = vmatmul.mubr.bf16.gmra.mxu0 %v4257
    %v4410 = vpop.f32.mrf.mxu0
    %v4411 = vadd.f32 0.0, %v4410
    %v4412 = vpop.f32.mrf.mxu0
    %v4413 = vpop.f32.mrf.mxu0
    %v4414 = vadd.f32 0.0, %v4413
    %v4415 = vpop.f32.mrf.mxu0
    %4416 = vmatprep.mubr.bf16.mxu0 0
    %4417 = vmatmul.mubr.bf16.gmra.mxu0 %v4260
    %v4418 = vpop.f32.mrf.mxu0
    %v4419 = vadd.f32 0.0, %v4418
    %v4420 = vpop.f32.mrf.mxu0
    %v4421 = vpop.f32.mrf.mxu0
    %v4422 = vadd.f32 0.0, %v4421
    %v4423 = vpop.f32.mrf.mxu0
    %4424 = vmatprep.mubr.bf16.mxu0 0
    %4425 = vmatmul.mubr.bf16.gmra.mxu0 %v4263
    %v4426 = vpop.f32.mrf.mxu0
    %v4427 = vadd.f32 0.0, %v4426
    %v4428 = vpop.f32.mrf.mxu0
    %v4429 = vpop.f32.mrf.mxu0
    %v4430 = vadd.f32 0.0, %v4429
    %v4431 = vpop.f32.mrf.mxu0
    %4432 = vmatprep.mubr.bf16.mxu0 0
    %4433 = vmatmul.mubr.bf16.gmra.mxu0 %v4266
    %v4434 = vpop.f32.mrf.mxu0
    %v4435 = vadd.f32 0.0, %v4434
    %v4436 = vpop.f32.mrf.mxu0
    %v4437 = vpop.f32.mrf.mxu0
    %v4438 = vadd.f32 0.0, %v4437
    %v4439 = vpop.f32.mrf.mxu0
    %4440 = vmatprep.mubr.bf16.mxu0 0
    %4441 = vmatmul.mubr.bf16.gmra.mxu0 %v4269
    %v4442 = vpop.f32.mrf.mxu0
    %v4443 = vadd.f32 0.0, %v4442
    %v4444 = vpop.f32.mrf.mxu0
    %v4445 = vpop.f32.mrf.mxu0
    %v4446 = vadd.f32 0.0, %v4445
    %v4447 = vpop.f32.mrf.mxu0
    %4448 = vmatprep.mubr.bf16.mxu0 0
    %4449 = vmatmul.mubr.bf16.gmra.mxu0 %v4272
    %v4450 = vpop.f32.mrf.mxu0
    %v4451 = vadd.f32 0.0, %v4450
    %v4452 = vpop.f32.mrf.mxu0
    %v4453 = vpop.f32.mrf.mxu0
    %v4454 = vadd.f32 0.0, %v4453
    %v4455 = vpop.f32.mrf.mxu0
    %4456 = vmatprep.mubr.bf16.mxu0 0
    %4457 = vmatmul.mubr.bf16.gmra.mxu0 %v4275
    %v4458 = vpop.f32.mrf.mxu0
    %v4459 = vadd.f32 0.0, %v4458
    %v4460 = vpop.f32.mrf.mxu0
    %v4461 = vpop.f32.mrf.mxu0
    %v4462 = vadd.f32 0.0, %v4461
    %v4463 = vpop.f32.mrf.mxu0
    %4464 = vmatprep.mubr.bf16.mxu0 0
    %4465 = vmatmul.mubr.bf16.gmra.mxu0 %v4278
    %v4466 = vpop.f32.mrf.mxu0
    %v4467 = vadd.f32 0.0, %v4466
    %v4468 = vpop.f32.mrf.mxu0
    %v4469 = vpop.f32.mrf.mxu0
    %v4470 = vadd.f32 0.0, %v4469
    %v4471 = vpop.f32.mrf.mxu0
    %4472 = vmatprep.mubr.bf16.mxu0 0
    %4473 = vmatmul.mubr.bf16.gmra.mxu0 %v4281
    %v4474 = vpop.f32.mrf.mxu0
    %v4475 = vadd.f32 0.0, %v4474
    %v4476 = vpop.f32.mrf.mxu0
    %v4477 = vpop.f32.mrf.mxu0
    %v4478 = vadd.f32 0.0, %v4477
    %v4479 = vpop.f32.mrf.mxu0
    %4480 = vmatprep.mubr.bf16.mxu0 0
    %4481 = vmatmul.mubr.bf16.gmra.mxu0 %v4284
    %v4482 = vpop.f32.mrf.mxu0
    %v4483 = vadd.f32 0.0, %v4482
    %v4484 = vpop.f32.mrf.mxu0
    %v4485 = vpop.f32.mrf.mxu0
    %v4486 = vadd.f32 0.0, %v4485
    %v4487 = vpop.f32.mrf.mxu0
    %4488 = vmatprep.mubr.bf16.mxu0 0
    %4489 = vmatmul.mubr.bf16.gmra.mxu0 %v4287
    %v4490 = vpop.f32.mrf.mxu0
    %v4491 = vadd.f32 0.0, %v4490
    %v4492 = vpop.f32.mrf.mxu0
    %v4493 = vpop.f32.mrf.mxu0
    %v4494 = vadd.f32 0.0, %v4493
    %v4495 = vpop.f32.mrf.mxu0
    %4496 = vmatprep.mubr.bf16.mxu0 0
    %4497 = vmatmul.mubr.bf16.gmra.mxu0 %v4290
    %v4498 = vpop.f32.mrf.mxu0
    %v4499 = vadd.f32 0.0, %v4498
    %v4500 = vpop.f32.mrf.mxu0
    %v4501 = vpop.f32.mrf.mxu0
    %v4502 = vadd.f32 0.0, %v4501
    %v4503 = vpop.f32.mrf.mxu0
    %4504 = vmatprep.mubr.bf16.mxu0 0
    %4505 = vmatmul.mubr.bf16.gmra.mxu0 %v4293
    %v4506 = vpop.f32.mrf.mxu0
    %v4507 = vadd.f32 0.0, %v4506
    %v4508 = vpop.f32.mrf.mxu0
    %v4509 = vpop.f32.mrf.mxu0
    %v4510 = vadd.f32 0.0, %v4509
    %v4511 = vpop.f32.mrf.mxu0
    %4512 = vmatprep.mubr.bf16.mxu0 0
    %4513 = vmatmul.mubr.bf16.gmra.mxu0 %v4296
    %v4514 = vpop.f32.mrf.mxu0
    %v4515 = vadd.f32 0.0, %v4514
    %v4516 = vpop.f32.mrf.mxu0
    %v4517 = vpop.f32.mrf.mxu0
    %v4518 = vadd.f32 0.0, %v4517
    %v4519 = vpop.f32.mrf.mxu0
    %4520 = vmatprep.mubr.bf16.mxu0 0
    %4521 = vmatmul.mubr.bf16.gmra.mxu0 %v4299
    %v4522 = vpop.f32.mrf.mxu0
    %v4523 = vadd.f32 0.0, %v4522
    %v4524 = vpop.f32.mrf.mxu0
    %v4525 = vpop.f32.mrf.mxu0
    %v4526 = vadd.f32 0.0, %v4525
    %v4527 = vpop.f32.mrf.mxu0
    %4528 = vmatprep.mubr.bf16.mxu0 0
    %4529 = vmatmul.mubr.bf16.gmra.mxu0 %v4302
    %v4530 = vpop.f32.mrf.mxu0
    %v4531 = vadd.f32 0.0, %v4530
    %v4532 = vpop.f32.mrf.mxu0
    %v4533 = vpop.f32.mrf.mxu0
    %v4534 = vadd.f32 0.0, %v4533
    %v4535 = vpop.f32.mrf.mxu0
    %4536 = vmatprep.mubr.bf16.mxu0 0
    %4537 = vmatmul.mubr.bf16.gmra.mxu0 %v4305
    %v4538 = vpop.f32.mrf.mxu0
    %v4539 = vadd.f32 0.0, %v4538
    %v4540 = vpop.f32.mrf.mxu0
    %v4541 = vpop.f32.mrf.mxu0
    %v4542 = vadd.f32 0.0, %v4541
    %v4543 = vpop.f32.mrf.mxu0
    %4544 = vmatprep.mubr.bf16.mxu0 0
    %4545 = vmatmul.mubr.bf16.gmra.mxu0 %v4308
    %v4546 = vpop.f32.mrf.mxu0
    %v4547 = vadd.f32 0.0, %v4546
    %v4548 = vpop.f32.mrf.mxu0
    %v4549 = vpop.f32.mrf.mxu0
    %v4550 = vadd.f32 0.0, %v4549
    %v4551 = vpop.f32.mrf.mxu0
    %4552 = vmatprep.mubr.bf16.mxu0 0
    %4553 = vmatmul.mubr.bf16.gmra.mxu0 %v4311
    %v4554 = vpop.f32.mrf.mxu0
    %v4555 = vadd.f32 0.0, %v4554
    %v4556 = vpop.f32.mrf.mxu0
    %v4557 = vpop.f32.mrf.mxu0
    %v4558 = vadd.f32 0.0, %v4557
    %v4559 = vpop.f32.mrf.mxu0
    %4560 = vmatprep.mubr.bf16.mxu0 0
    %4561 = vmatmul.mubr.bf16.gmra.mxu0 %v4314
    %v4562 = vpop.f32.mrf.mxu0
    %v4563 = vadd.f32 0.0, %v4562
    %v4564 = vpop.f32.mrf.mxu0
    %v4565 = vpop.f32.mrf.mxu0
    %v4566 = vadd.f32 0.0, %v4565
    %v4567 = vpop.f32.mrf.mxu0
    %4568 = vmatprep.mubr.bf16.mxu0 0
    %4569 = vmatmul.mubr.bf16.gmra.mxu0 %v4317
    %v4570 = vpop.f32.mrf.mxu0
    %v4571 = vadd.f32 0.0, %v4570
    %v4572 = vpop.f32.mrf.mxu0
    %v4573 = vpop.f32.mrf.mxu0
    %v4574 = vadd.f32 0.0, %v4573
    %v4575 = vpop.f32.mrf.mxu0
    %4576 = vmatprep.mubr.bf16.mxu0 0
    %4577 = vmatmul.mubr.bf16.gmra.mxu0 %v4320
    %v4578 = vpop.f32.mrf.mxu0
    %v4579 = vadd.f32 0.0, %v4578
    %v4580 = vpop.f32.mrf.mxu0
    %v4581 = vpop.f32.mrf.mxu0
    %v4582 = vadd.f32 0.0, %v4581
    %v4583 = vpop.f32.mrf.mxu0
    %4584 = vmatprep.mubr.bf16.mxu0 0
    %4585 = vmatmul.mubr.bf16.gmra.mxu0 %v4323
    %v4586 = vpop.f32.mrf.mxu0
    %v4587 = vadd.f32 0.0, %v4586
    %v4588 = vpop.f32.mrf.mxu0
    %v4589 = vpop.f32.mrf.mxu0
    %v4590 = vadd.f32 0.0, %v4589
    %v4591 = vpop.f32.mrf.mxu0
    %4592 = vmatprep.mubr.bf16.mxu0 0
    %4593 = vmatmul.mubr.bf16.gmra.mxu0 %v4326
    %v4594 = vpop.f32.mrf.mxu0
    %v4595 = vadd.f32 0.0, %v4594
    %v4596 = vpop.f32.mrf.mxu0
    %v4597 = vpop.f32.mrf.mxu0
    %v4598 = vadd.f32 0.0, %v4597
    %v4599 = vpop.f32.mrf.mxu0
    %4600 = vmatprep.mubr.bf16.mxu0 0
    %4601 = vmatmul.mubr.bf16.gmra.mxu0 %v4329
    %v4602 = vpop.f32.mrf.mxu0
    %v4603 = vadd.f32 0.0, %v4602
    %v4604 = vpop.f32.mrf.mxu0
    %v4605 = vpop.f32.mrf.mxu0
    %v4606 = vadd.f32 0.0, %v4605
    %v4607 = vpop.f32.mrf.mxu0
    %4608 = vmatprep.mubr.bf16.mxu0 0
    %4609 = vmatmul.mubr.bf16.gmra.mxu0 %v4332
    %v4610 = vpop.f32.mrf.mxu0
    %v4611 = vadd.f32 0.0, %v4610
    %v4612 = vpop.f32.mrf.mxu0
    %v4613 = vpop.f32.mrf.mxu0
    %v4614 = vadd.f32 0.0, %v4613
    %v4615 = vpop.f32.mrf.mxu0
    %4616 = vmatprep.mubr.bf16.mxu0 0
    %4617 = vmatmul.mubr.bf16.gmra.mxu0 %v4335
    %v4618 = vpop.f32.mrf.mxu0
    %v4619 = vadd.f32 0.0, %v4618
    %v4620 = vpop.f32.mrf.mxu0
    %v4621 = vpop.f32.mrf.mxu0
    %v4622 = vadd.f32 0.0, %v4621
    %v4623 = vpop.f32.mrf.mxu0
    %4624 = vmatprep.mubr.bf16.mxu0 0
    %4625 = vmatmul.mubr.bf16.gmra.mxu0 %v4338
    %v4626 = vpop.f32.mrf.mxu0
    %v4627 = vadd.f32 0.0, %v4626
    %v4628 = vpop.f32.mrf.mxu0
    %v4629 = vpop.f32.mrf.mxu0
    %v4630 = vadd.f32 0.0, %v4629
    %v4631 = vpop.f32.mrf.mxu0
    %4632 = vdwg.mxu0
    %v4633 = vld [vmem:[%s7] sm:$0x1]
    %v4634 = vld [vmem:[%s8] sm:$0x1]
    %v4635 = vsel %vm2133, %v4379, 0.0
    %v4636 = vsel %vm2133, %v4382, 0.0
    %v4637 = vadd.f32 %v4635, %v4636
    %v4638 = vsel %vm2133, %v4387, 0.0
    %v4639 = vadd.f32 %v4637, %v4638
    %v4640 = vsel %vm2133, %v4390, 0.0
    %v4641 = vadd.f32 %v4639, %v4640
    %v4642 = vsel %vm2133, %v4395, 0.0
    %v4643 = vadd.f32 %v4641, %v4642
    %v4644 = vsel %vm2133, %v4398, 0.0
    %v4645 = vadd.f32 %v4643, %v4644
    %v4646 = vsel %vm2133, %v4403, 0.0
    %v4647 = vadd.f32 %v4645, %v4646
    %v4648 = vsel %vm2133, %v4406, 0.0
    %v4649 = vadd.f32 %v4647, %v4648
    %v4650 = vsel %vm2133, %v4411, 0.0
    %v4651 = vadd.f32 %v4649, %v4650
    %v4652 = vsel %vm2133, %v4414, 0.0
    %v4653 = vadd.f32 %v4651, %v4652
    %v4654 = vsel %vm2133, %v4419, 0.0
    %v4655 = vadd.f32 %v4653, %v4654
    %v4656 = vsel %vm2133, %v4422, 0.0
    %v4657 = vadd.f32 %v4655, %v4656
    %v4658 = vsel %vm2133, %v4427, 0.0
    %v4659 = vadd.f32 %v4657, %v4658
    %v4660 = vsel %vm2133, %v4430, 0.0
    %v4661 = vadd.f32 %v4659, %v4660
    %v4662 = vsel %vm2133, %v4435, 0.0
    %v4663 = vadd.f32 %v4661, %v4662
    %v4664 = vsel %vm2133, %v4438, 0.0
    %v4665 = vadd.f32 %v4663, %v4664
    %v4666 = vsel %vm2133, %v4443, 0.0
    %v4667 = vadd.f32 %v4665, %v4666
    %v4668 = vsel %vm2133, %v4446, 0.0
    %v4669 = vadd.f32 %v4667, %v4668
    %v4670 = vsel %vm2133, %v4451, 0.0
    %v4671 = vadd.f32 %v4669, %v4670
    %v4672 = vsel %vm2133, %v4454, 0.0
    %v4673 = vadd.f32 %v4671, %v4672
    %v4674 = vsel %vm2133, %v4459, 0.0
    %v4675 = vadd.f32 %v4673, %v4674
    %v4676 = vsel %vm2133, %v4462, 0.0
    %v4677 = vadd.f32 %v4675, %v4676
    %v4678 = vsel %vm2133, %v4467, 0.0
    %v4679 = vadd.f32 %v4677, %v4678
    %v4680 = vsel %vm2133, %v4470, 0.0
    %v4681 = vadd.f32 %v4679, %v4680
    %v4682 = vsel %vm2133, %v4475, 0.0
    %v4683 = vadd.f32 %v4681, %v4682
    %v4684 = vsel %vm2133, %v4478, 0.0
    %v4685 = vadd.f32 %v4683, %v4684
    %v4686 = vsel %vm2133, %v4483, 0.0
    %v4687 = vadd.f32 %v4685, %v4686
    %v4688 = vsel %vm2133, %v4486, 0.0
    %v4689 = vadd.f32 %v4687, %v4688
    %v4690 = vsel %vm2133, %v4491, 0.0
    %v4691 = vadd.f32 %v4689, %v4690
    %v4692 = vsel %vm2133, %v4494, 0.0
    %v4693 = vadd.f32 %v4691, %v4692
    %v4694 = vsel %vm2133, %v4499, 0.0
    %v4695 = vadd.f32 %v4693, %v4694
    %v4696 = vsel %vm2133, %v4502, 0.0
    %v4697 = vadd.f32 %v4695, %v4696
    %v4698 = vsel %vm2133, %v4507, 0.0
    %v4699 = vadd.f32 %v4697, %v4698
    %v4700 = vsel %vm2133, %v4510, 0.0
    %v4701 = vadd.f32 %v4699, %v4700
    %v4702 = vsel %vm2133, %v4515, 0.0
    %v4703 = vadd.f32 %v4701, %v4702
    %v4704 = vsel %vm2133, %v4518, 0.0
    %v4705 = vadd.f32 %v4703, %v4704
    %v4706 = vsel %vm2133, %v4523, 0.0
    %v4707 = vadd.f32 %v4705, %v4706
    %v4708 = vsel %vm2133, %v4526, 0.0
    %v4709 = vadd.f32 %v4707, %v4708
    %v4710 = vsel %vm2133, %v4531, 0.0
    %v4711 = vadd.f32 %v4709, %v4710
    %v4712 = vsel %vm2133, %v4534, 0.0
    %v4713 = vadd.f32 %v4711, %v4712
    %v4714 = vsel %vm2133, %v4539, 0.0
    %v4715 = vadd.f32 %v4713, %v4714
    %v4716 = vsel %vm2133, %v4542, 0.0
    %v4717 = vadd.f32 %v4715, %v4716
    %v4718 = vsel %vm2133, %v4547, 0.0
    %v4719 = vadd.f32 %v4717, %v4718
    %v4720 = vsel %vm2133, %v4550, 0.0
    %v4721 = vadd.f32 %v4719, %v4720
    %v4722 = vsel %vm2133, %v4555, 0.0
    %v4723 = vadd.f32 %v4721, %v4722
    %v4724 = vsel %vm2133, %v4558, 0.0
    %v4725 = vadd.f32 %v4723, %v4724
    %v4726 = vsel %vm2133, %v4563, 0.0
    %v4727 = vadd.f32 %v4725, %v4726
    %v4728 = vsel %vm2133, %v4566, 0.0
    %v4729 = vadd.f32 %v4727, %v4728
    %v4730 = vsel %vm2133, %v4571, 0.0
    %v4731 = vadd.f32 %v4729, %v4730
    %v4732 = vsel %vm2133, %v4574, 0.0
    %v4733 = vadd.f32 %v4731, %v4732
    %v4734 = vsel %vm2133, %v4579, 0.0
    %v4735 = vadd.f32 %v4733, %v4734
    %v4736 = vsel %vm2133, %v4582, 0.0
    %v4737 = vadd.f32 %v4735, %v4736
    %v4738 = vsel %vm2133, %v4587, 0.0
    %v4739 = vadd.f32 %v4737, %v4738
    %v4740 = vsel %vm2133, %v4590, 0.0
    %v4741 = vadd.f32 %v4739, %v4740
    %v4742 = vsel %vm2133, %v4595, 0.0
    %v4743 = vadd.f32 %v4741, %v4742
    %v4744 = vsel %vm2133, %v4598, 0.0
    %v4745 = vadd.f32 %v4743, %v4744
    %v4746 = vsel %vm2133, %v4603, 0.0
    %v4747 = vadd.f32 %v4745, %v4746
    %v4748 = vsel %vm2133, %v4606, 0.0
    %v4749 = vadd.f32 %v4747, %v4748
    %v4750 = vsel %vm2133, %v4611, 0.0
    %v4751 = vadd.f32 %v4749, %v4750
    %v4752 = vsel %vm2133, %v4614, 0.0
    %v4753 = vadd.f32 %v4751, %v4752
    %v4754 = vsel %vm2133, %v4619, 0.0
    %v4755 = vadd.f32 %v4753, %v4754
    %v4756 = vsel %vm2133, %v4622, 0.0
    %v4757 = vadd.f32 %v4755, %v4756
    %v4758 = vsel %vm2133, %v4627, 0.0
    %v4759 = vadd.f32 %v4757, %v4758
    %v4760 = vsel %vm2133, %v4630, 0.0
    %v4761 = vadd.f32 %v4759, %v4760
    %v4762 = vrot.slane %v4761, 4
    %v4763 = vadd.f32 %v4761, %v4762
    %v4764 = vrot.slane %v4763, 2
    %v4765 = vadd.f32 %v4763, %v4764
    %v4766 = vrot.slane %v4765, 1
    %v4767 = vadd.f32 %v4765, %v4766
    %v4768 = vmul.f32 %v4379, %v4379
    %v4769 = vmul.f32 %v4382, %v4382
    %v4770 = vmul.f32 %v4387, %v4387
    %v4771 = vmul.f32 %v4390, %v4390
    %v4772 = vmul.f32 %v4395, %v4395
    %v4773 = vmul.f32 %v4398, %v4398
    %v4774 = vmul.f32 %v4403, %v4403
    %v4775 = vmul.f32 %v4406, %v4406
    %v4776 = vmul.f32 %v4411, %v4411
    %v4777 = vmul.f32 %v4414, %v4414
    %v4778 = vmul.f32 %v4419, %v4419
    %v4779 = vmul.f32 %v4422, %v4422
    %v4780 = vmul.f32 %v4427, %v4427
    %v4781 = vmul.f32 %v4430, %v4430
    %v4782 = vmul.f32 %v4435, %v4435
    %v4783 = vmul.f32 %v4438, %v4438
    %v4784 = vmul.f32 %v4443, %v4443
    %v4785 = vmul.f32 %v4446, %v4446
    %v4786 = vmul.f32 %v4451, %v4451
    %v4787 = vmul.f32 %v4454, %v4454
    %v4788 = vmul.f32 %v4459, %v4459
    %v4789 = vmul.f32 %v4462, %v4462
    %v4790 = vmul.f32 %v4467, %v4467
    %v4791 = vmul.f32 %v4470, %v4470
    %v4792 = vmul.f32 %v4475, %v4475
    %v4793 = vmul.f32 %v4478, %v4478
    %v4794 = vmul.f32 %v4483, %v4483
    %v4795 = vmul.f32 %v4486, %v4486
    %v4796 = vmul.f32 %v4491, %v4491
    %v4797 = vmul.f32 %v4494, %v4494
    %v4798 = vmul.f32 %v4499, %v4499
    %v4799 = vmul.f32 %v4502, %v4502
    %v4800 = vmul.f32 %v4507, %v4507
    %v4801 = vmul.f32 %v4510, %v4510
    %v4802 = vmul.f32 %v4515, %v4515
    %v4803 = vmul.f32 %v4518, %v4518
    %v4804 = vmul.f32 %v4523, %v4523
    %v4805 = vmul.f32 %v4526, %v4526
    %v4806 = vmul.f32 %v4531, %v4531
    %v4807 = vmul.f32 %v4534, %v4534
    %v4808 = vmul.f32 %v4539, %v4539
    %v4809 = vmul.f32 %v4542, %v4542
    %v4810 = vmul.f32 %v4547, %v4547
    %v4811 = vmul.f32 %v4550, %v4550
    %v4812 = vmul.f32 %v4555, %v4555
    %v4813 = vmul.f32 %v4558, %v4558
    %v4814 = vmul.f32 %v4563, %v4563
    %v4815 = vmul.f32 %v4566, %v4566
    %v4816 = vmul.f32 %v4571, %v4571
    %v4817 = vmul.f32 %v4574, %v4574
    %v4818 = vmul.f32 %v4579, %v4579
    %v4819 = vmul.f32 %v4582, %v4582
    %v4820 = vmul.f32 %v4587, %v4587
    %v4821 = vmul.f32 %v4590, %v4590
    %v4822 = vmul.f32 %v4595, %v4595
    %v4823 = vmul.f32 %v4598, %v4598
    %v4824 = vmul.f32 %v4603, %v4603
    %v4825 = vmul.f32 %v4606, %v4606
    %v4826 = vmul.f32 %v4611, %v4611
    %v4827 = vmul.f32 %v4614, %v4614
    %v4828 = vmul.f32 %v4619, %v4619
    %v4829 = vmul.f32 %v4622, %v4622
    %v4830 = vmul.f32 %v4627, %v4627
    %v4831 = vmul.f32 %v4630, %v4630
    %v4832 = vsel %vm2133, %v4768, 0.0
    %v4833 = vsel %vm2133, %v4769, 0.0
    %v4834 = vadd.f32 %v4832, %v4833
    %v4835 = vsel %vm2133, %v4770, 0.0
    %v4836 = vadd.f32 %v4834, %v4835
    %v4837 = vsel %vm2133, %v4771, 0.0
    %v4838 = vadd.f32 %v4836, %v4837
    %v4839 = vsel %vm2133, %v4772, 0.0
    %v4840 = vadd.f32 %v4838, %v4839
    %v4841 = vsel %vm2133, %v4773, 0.0
    %v4842 = vadd.f32 %v4840, %v4841
    %v4843 = vsel %vm2133, %v4774, 0.0
    %v4844 = vadd.f32 %v4842, %v4843
    %v4845 = vsel %vm2133, %v4775, 0.0
    %v4846 = vadd.f32 %v4844, %v4845
    %v4847 = vsel %vm2133, %v4776, 0.0
    %v4848 = vadd.f32 %v4846, %v4847
    %v4849 = vsel %vm2133, %v4777, 0.0
    %v4850 = vadd.f32 %v4848, %v4849
    %v4851 = vsel %vm2133, %v4778, 0.0
    %v4852 = vadd.f32 %v4850, %v4851
    %v4853 = vsel %vm2133, %v4779, 0.0
    %v4854 = vadd.f32 %v4852, %v4853
    %v4855 = vsel %vm2133, %v4780, 0.0
    %v4856 = vadd.f32 %v4854, %v4855
    %v4857 = vsel %vm2133, %v4781, 0.0
    %v4858 = vadd.f32 %v4856, %v4857
    %v4859 = vsel %vm2133, %v4782, 0.0
    %v4860 = vadd.f32 %v4858, %v4859
    %v4861 = vsel %vm2133, %v4783, 0.0
    %v4862 = vadd.f32 %v4860, %v4861
    %v4863 = vsel %vm2133, %v4784, 0.0
    %v4864 = vadd.f32 %v4862, %v4863
    %v4865 = vsel %vm2133, %v4785, 0.0
    %v4866 = vadd.f32 %v4864, %v4865
    %v4867 = vsel %vm2133, %v4786, 0.0
    %v4868 = vadd.f32 %v4866, %v4867
    %v4869 = vsel %vm2133, %v4787, 0.0
    %v4870 = vadd.f32 %v4868, %v4869
    %v4871 = vsel %vm2133, %v4788, 0.0
    %v4872 = vadd.f32 %v4870, %v4871
    %v4873 = vsel %vm2133, %v4789, 0.0
    %v4874 = vadd.f32 %v4872, %v4873
    %v4875 = vsel %vm2133, %v4790, 0.0
    %v4876 = vadd.f32 %v4874, %v4875
    %v4877 = vsel %vm2133, %v4791, 0.0
    %v4878 = vadd.f32 %v4876, %v4877
    %v4879 = vsel %vm2133, %v4792, 0.0
    %v4880 = vadd.f32 %v4878, %v4879
    %v4881 = vsel %vm2133, %v4793, 0.0
    %v4882 = vadd.f32 %v4880, %v4881
    %v4883 = vsel %vm2133, %v4794, 0.0
    %v4884 = vadd.f32 %v4882, %v4883
    %v4885 = vsel %vm2133, %v4795, 0.0
    %v4886 = vadd.f32 %v4884, %v4885
    %v4887 = vsel %vm2133, %v4796, 0.0
    %v4888 = vadd.f32 %v4886, %v4887
    %v4889 = vsel %vm2133, %v4797, 0.0
    %v4890 = vadd.f32 %v4888, %v4889
    %v4891 = vsel %vm2133, %v4798, 0.0
    %v4892 = vadd.f32 %v4890, %v4891
    %v4893 = vsel %vm2133, %v4799, 0.0
    %v4894 = vadd.f32 %v4892, %v4893
    %v4895 = vsel %vm2133, %v4800, 0.0
    %v4896 = vadd.f32 %v4894, %v4895
    %v4897 = vsel %vm2133, %v4801, 0.0
    %v4898 = vadd.f32 %v4896, %v4897
    %v4899 = vsel %vm2133, %v4802, 0.0
    %v4900 = vadd.f32 %v4898, %v4899
    %v4901 = vsel %vm2133, %v4803, 0.0
    %v4902 = vadd.f32 %v4900, %v4901
    %v4903 = vsel %vm2133, %v4804, 0.0
    %v4904 = vadd.f32 %v4902, %v4903
    %v4905 = vsel %vm2133, %v4805, 0.0
    %v4906 = vadd.f32 %v4904, %v4905
    %v4907 = vsel %vm2133, %v4806, 0.0
    %v4908 = vadd.f32 %v4906, %v4907
    %v4909 = vsel %vm2133, %v4807, 0.0
    %v4910 = vadd.f32 %v4908, %v4909
    %v4911 = vsel %vm2133, %v4808, 0.0
    %v4912 = vadd.f32 %v4910, %v4911
    %v4913 = vsel %vm2133, %v4809, 0.0
    %v4914 = vadd.f32 %v4912, %v4913
    %v4915 = vsel %vm2133, %v4810, 0.0
    %v4916 = vadd.f32 %v4914, %v4915
    %v4917 = vsel %vm2133, %v4811, 0.0
    %v4918 = vadd.f32 %v4916, %v4917
    %v4919 = vsel %vm2133, %v4812, 0.0
    %v4920 = vadd.f32 %v4918, %v4919
    %v4921 = vsel %vm2133, %v4813, 0.0
    %v4922 = vadd.f32 %v4920, %v4921
    %v4923 = vsel %vm2133, %v4814, 0.0
    %v4924 = vadd.f32 %v4922, %v4923
    %v4925 = vsel %vm2133, %v4815, 0.0
    %v4926 = vadd.f32 %v4924, %v4925
    %v4927 = vsel %vm2133, %v4816, 0.0
    %v4928 = vadd.f32 %v4926, %v4927
    %v4929 = vsel %vm2133, %v4817, 0.0
    %v4930 = vadd.f32 %v4928, %v4929
    %v4931 = vsel %vm2133, %v4818, 0.0
    %v4932 = vadd.f32 %v4930, %v4931
    %v4933 = vsel %vm2133, %v4819, 0.0
    %v4934 = vadd.f32 %v4932, %v4933
    %v4935 = vsel %vm2133, %v4820, 0.0
    %v4936 = vadd.f32 %v4934, %v4935
    %v4937 = vsel %vm2133, %v4821, 0.0
    %v4938 = vadd.f32 %v4936, %v4937
    %v4939 = vsel %vm2133, %v4822, 0.0
    %v4940 = vadd.f32 %v4938, %v4939
    %v4941 = vsel %vm2133, %v4823, 0.0
    %v4942 = vadd.f32 %v4940, %v4941
    %v4943 = vsel %vm2133, %v4824, 0.0
    %v4944 = vadd.f32 %v4942, %v4943
    %v4945 = vsel %vm2133, %v4825, 0.0
    %v4946 = vadd.f32 %v4944, %v4945
    %v4947 = vsel %vm2133, %v4826, 0.0
    %v4948 = vadd.f32 %v4946, %v4947
    %v4949 = vsel %vm2133, %v4827, 0.0
    %v4950 = vadd.f32 %v4948, %v4949
    %v4951 = vsel %vm2133, %v4828, 0.0
    %v4952 = vadd.f32 %v4950, %v4951
    %v4953 = vsel %vm2133, %v4829, 0.0
    %v4954 = vadd.f32 %v4952, %v4953
    %v4955 = vsel %vm2133, %v4830, 0.0
    %v4956 = vadd.f32 %v4954, %v4955
    %v4957 = vsel %vm2133, %v4831, 0.0
    %v4958 = vadd.f32 %v4956, %v4957
    %v4959 = vrot.slane %v4958, 4
    %v4960 = vadd.f32 %v4958, %v4959
    %v4961 = vrot.slane %v4960, 2
    %v4962 = vadd.f32 %v4960, %v4961
    %v4963 = vrot.slane %v4962, 1
    %v4964 = vadd.f32 %v4962, %v4963
    %v4965 = vmul.f32 %v4767, 0.001953125
    %v4966 = vmul.f32 %v4964, 0.001953125
    %v4967 = vmul.f32 %v4965, %v4965
    %v4968 = vsub.f32 %v4966, %v4967
    %v4969 = vmax.f32 %v4968, 0.0
    %v4970 = vadd.f32 %v4969, 1e-05
    %v4971 = vrsqrt.pop %v4970
    %v4972 = vmul.f32 %v4971, %v4633
    %v4973 = vmul.f32 %v4965, %v4972
    %v4974 = vsub.f32 %v4634, %v4973
    %v4975 = vlaneseq
    %v4976 = vshrl.u32 %v4975, 7
    %v4977 = vsub.s32 0, %v4976
    %v4978 = vrot.slane %v4972, %v4977
    %v4979 = vmul.f32 %v4379, %v4978
    %v4980 = vmul.f32 %v4382, %v4978
    %v4981 = vmul.f32 %v4387, %v4978
    %v4982 = vmul.f32 %v4390, %v4978
    %v4983 = vmul.f32 %v4395, %v4978
    %v4984 = vmul.f32 %v4398, %v4978
    %v4985 = vmul.f32 %v4403, %v4978
    %v4986 = vmul.f32 %v4406, %v4978
    %v4987 = vmul.f32 %v4411, %v4978
    %v4988 = vmul.f32 %v4414, %v4978
    %v4989 = vmul.f32 %v4419, %v4978
    %v4990 = vmul.f32 %v4422, %v4978
    %v4991 = vmul.f32 %v4427, %v4978
    %v4992 = vmul.f32 %v4430, %v4978
    %v4993 = vmul.f32 %v4435, %v4978
    %v4994 = vmul.f32 %v4438, %v4978
    %v4995 = vmul.f32 %v4443, %v4978
    %v4996 = vmul.f32 %v4446, %v4978
    %v4997 = vmul.f32 %v4451, %v4978
    %v4998 = vmul.f32 %v4454, %v4978
    %v4999 = vmul.f32 %v4459, %v4978
    %v5000 = vmul.f32 %v4462, %v4978
    %v5001 = vmul.f32 %v4467, %v4978
    %v5002 = vmul.f32 %v4470, %v4978
    %v5003 = vmul.f32 %v4475, %v4978
    %v5004 = vmul.f32 %v4478, %v4978
    %v5005 = vmul.f32 %v4483, %v4978
    %v5006 = vmul.f32 %v4486, %v4978
    %v5007 = vmul.f32 %v4491, %v4978
    %v5008 = vmul.f32 %v4494, %v4978
    %v5009 = vmul.f32 %v4499, %v4978
    %v5010 = vmul.f32 %v4502, %v4978
    %v5011 = vmul.f32 %v4507, %v4978
    %v5012 = vmul.f32 %v4510, %v4978
    %v5013 = vmul.f32 %v4515, %v4978
    %v5014 = vmul.f32 %v4518, %v4978
    %v5015 = vmul.f32 %v4523, %v4978
    %v5016 = vmul.f32 %v4526, %v4978
    %v5017 = vmul.f32 %v4531, %v4978
    %v5018 = vmul.f32 %v4534, %v4978
    %v5019 = vmul.f32 %v4539, %v4978
    %v5020 = vmul.f32 %v4542, %v4978
    %v5021 = vmul.f32 %v4547, %v4978
    %v5022 = vmul.f32 %v4550, %v4978
    %v5023 = vmul.f32 %v4555, %v4978
    %v5024 = vmul.f32 %v4558, %v4978
    %v5025 = vmul.f32 %v4563, %v4978
    %v5026 = vmul.f32 %v4566, %v4978
    %v5027 = vmul.f32 %v4571, %v4978
    %v5028 = vmul.f32 %v4574, %v4978
    %v5029 = vmul.f32 %v4579, %v4978
    %v5030 = vmul.f32 %v4582, %v4978
    %v5031 = vmul.f32 %v4587, %v4978
    %v5032 = vmul.f32 %v4590, %v4978
    %v5033 = vmul.f32 %v4595, %v4978
    %v5034 = vmul.f32 %v4598, %v4978
    %v5035 = vmul.f32 %v4603, %v4978
    %v5036 = vmul.f32 %v4606, %v4978
    %v5037 = vmul.f32 %v4611, %v4978
    %v5038 = vmul.f32 %v4614, %v4978
    %v5039 = vmul.f32 %v4619, %v4978
    %v5040 = vmul.f32 %v4622, %v4978
    %v5041 = vmul.f32 %v4627, %v4978
    %v5042 = vmul.f32 %v4630, %v4978
    %v5044 = vlaneseq
    %v5045 = vshrl.u32 %v5044, 7
    %v5046 = vsub.s32 0, %v5045
    %v5047 = vrot.slane %v4974, %v5046
    %v5049 = vadd.f32 %v4979, %v5047
    %v5050 = vadd.f32 %v4980, %v5047
    %v5051 = vadd.f32 %v4981, %v5047
    %v5052 = vadd.f32 %v4982, %v5047
    %v5053 = vadd.f32 %v4983, %v5047
    %v5054 = vadd.f32 %v4984, %v5047
    %v5055 = vadd.f32 %v4985, %v5047
    %v5056 = vadd.f32 %v4986, %v5047
    %v5057 = vadd.f32 %v4987, %v5047
    %v5058 = vadd.f32 %v4988, %v5047
    %v5059 = vadd.f32 %v4989, %v5047
    %v5060 = vadd.f32 %v4990, %v5047
    %v5061 = vadd.f32 %v4991, %v5047
    %v5062 = vadd.f32 %v4992, %v5047
    %v5063 = vadd.f32 %v4993, %v5047
    %v5064 = vadd.f32 %v4994, %v5047
    %v5065 = vadd.f32 %v4995, %v5047
    %v5066 = vadd.f32 %v4996, %v5047
    %v5067 = vadd.f32 %v4997, %v5047
    %v5068 = vadd.f32 %v4998, %v5047
    %v5069 = vadd.f32 %v4999, %v5047
    %v5070 = vadd.f32 %v5000, %v5047
    %v5071 = vadd.f32 %v5001, %v5047
    %v5072 = vadd.f32 %v5002, %v5047
    %v5073 = vadd.f32 %v5003, %v5047
    %v5074 = vadd.f32 %v5004, %v5047
    %v5075 = vadd.f32 %v5005, %v5047
    %v5076 = vadd.f32 %v5006, %v5047
    %v5077 = vadd.f32 %v5007, %v5047
    %v5078 = vadd.f32 %v5008, %v5047
    %v5079 = vadd.f32 %v5009, %v5047
    %v5080 = vadd.f32 %v5010, %v5047
    %v5081 = vadd.f32 %v5011, %v5047
    %v5082 = vadd.f32 %v5012, %v5047
    %v5083 = vadd.f32 %v5013, %v5047
    %v5084 = vadd.f32 %v5014, %v5047
    %v5085 = vadd.f32 %v5015, %v5047
    %v5086 = vadd.f32 %v5016, %v5047
    %v5087 = vadd.f32 %v5017, %v5047
    %v5088 = vadd.f32 %v5018, %v5047
    %v5089 = vadd.f32 %v5019, %v5047
    %v5090 = vadd.f32 %v5020, %v5047
    %v5091 = vadd.f32 %v5021, %v5047
    %v5092 = vadd.f32 %v5022, %v5047
    %v5093 = vadd.f32 %v5023, %v5047
    %v5094 = vadd.f32 %v5024, %v5047
    %v5095 = vadd.f32 %v5025, %v5047
    %v5096 = vadd.f32 %v5026, %v5047
    %v5097 = vadd.f32 %v5027, %v5047
    %v5098 = vadd.f32 %v5028, %v5047
    %v5099 = vadd.f32 %v5029, %v5047
    %v5100 = vadd.f32 %v5030, %v5047
    %v5101 = vadd.f32 %v5031, %v5047
    %v5102 = vadd.f32 %v5032, %v5047
    %v5103 = vadd.f32 %v5033, %v5047
    %v5104 = vadd.f32 %v5034, %v5047
    %v5105 = vadd.f32 %v5035, %v5047
    %v5106 = vadd.f32 %v5036, %v5047
    %v5107 = vadd.f32 %v5037, %v5047
    %v5108 = vadd.f32 %v5038, %v5047
    %v5109 = vadd.f32 %v5039, %v5047
    %v5110 = vadd.f32 %v5040, %v5047
    %v5111 = vadd.f32 %v5041, %v5047
    %v5112 = vadd.f32 %v5042, %v5047
    %v5177 = vrot.slane %v5049, 7
    %v5178 = vrot.slane %v5050, 7
    %v5179 = vsel %vm237, %v5177, %v5178
    %v5180 = vrot.slane %v5051, 7
    %v5181 = vrot.slane %v5052, 7
    %v5182 = vsel %vm237, %v5180, %v5181
    %v5183 = vrot.slane %v5053, 7
    %v5184 = vrot.slane %v5054, 7
    %v5185 = vsel %vm237, %v5183, %v5184
    %v5186 = vrot.slane %v5055, 7
    %v5187 = vrot.slane %v5056, 7
    %v5188 = vsel %vm237, %v5186, %v5187
    %v5189 = vrot.slane %v5057, 7
    %v5190 = vrot.slane %v5058, 7
    %v5191 = vsel %vm237, %v5189, %v5190
    %v5192 = vrot.slane %v5059, 7
    %v5193 = vrot.slane %v5060, 7
    %v5194 = vsel %vm237, %v5192, %v5193
    %v5195 = vrot.slane %v5061, 7
    %v5196 = vrot.slane %v5062, 7
    %v5197 = vsel %vm237, %v5195, %v5196
    %v5198 = vrot.slane %v5063, 7
    %v5199 = vrot.slane %v5064, 7
    %v5200 = vsel %vm237, %v5198, %v5199
    %v5201 = vrot.slane %v5065, 7
    %v5202 = vrot.slane %v5066, 7
    %v5203 = vsel %vm237, %v5201, %v5202
    %v5204 = vrot.slane %v5067, 7
    %v5205 = vrot.slane %v5068, 7
    %v5206 = vsel %vm237, %v5204, %v5205
    %v5207 = vrot.slane %v5069, 7
    %v5208 = vrot.slane %v5070, 7
    %v5209 = vsel %vm237, %v5207, %v5208
    %v5210 = vrot.slane %v5071, 7
    %v5211 = vrot.slane %v5072, 7
    %v5212 = vsel %vm237, %v5210, %v5211
    %v5213 = vrot.slane %v5073, 7
    %v5214 = vrot.slane %v5074, 7
    %v5215 = vsel %vm237, %v5213, %v5214
    %v5216 = vrot.slane %v5075, 7
    %v5217 = vrot.slane %v5076, 7
    %v5218 = vsel %vm237, %v5216, %v5217
    %v5219 = vrot.slane %v5077, 7
    %v5220 = vrot.slane %v5078, 7
    %v5221 = vsel %vm237, %v5219, %v5220
    %v5222 = vrot.slane %v5079, 7
    %v5223 = vrot.slane %v5080, 7
    %v5224 = vsel %vm237, %v5222, %v5223
    %v5225 = vrot.slane %v5081, 7
    %v5226 = vrot.slane %v5082, 7
    %v5227 = vsel %vm237, %v5225, %v5226
    %v5228 = vrot.slane %v5083, 7
    %v5229 = vrot.slane %v5084, 7
    %v5230 = vsel %vm237, %v5228, %v5229
    %v5231 = vrot.slane %v5085, 7
    %v5232 = vrot.slane %v5086, 7
    %v5233 = vsel %vm237, %v5231, %v5232
    %v5234 = vrot.slane %v5087, 7
    %v5235 = vrot.slane %v5088, 7
    %v5236 = vsel %vm237, %v5234, %v5235
    %v5237 = vrot.slane %v5089, 7
    %v5238 = vrot.slane %v5090, 7
    %v5239 = vsel %vm237, %v5237, %v5238
    %v5240 = vrot.slane %v5091, 7
    %v5241 = vrot.slane %v5092, 7
    %v5242 = vsel %vm237, %v5240, %v5241
    %v5243 = vrot.slane %v5093, 7
    %v5244 = vrot.slane %v5094, 7
    %v5245 = vsel %vm237, %v5243, %v5244
    %v5246 = vrot.slane %v5095, 7
    %v5247 = vrot.slane %v5096, 7
    %v5248 = vsel %vm237, %v5246, %v5247
    %v5249 = vrot.slane %v5097, 7
    %v5250 = vrot.slane %v5098, 7
    %v5251 = vsel %vm237, %v5249, %v5250
    %v5252 = vrot.slane %v5099, 7
    %v5253 = vrot.slane %v5100, 7
    %v5254 = vsel %vm237, %v5252, %v5253
    %v5255 = vrot.slane %v5101, 7
    %v5256 = vrot.slane %v5102, 7
    %v5257 = vsel %vm237, %v5255, %v5256
    %v5258 = vrot.slane %v5103, 7
    %v5259 = vrot.slane %v5104, 7
    %v5260 = vsel %vm237, %v5258, %v5259
    %v5261 = vrot.slane %v5105, 7
    %v5262 = vrot.slane %v5106, 7
    %v5263 = vsel %vm237, %v5261, %v5262
    %v5264 = vrot.slane %v5107, 7
    %v5265 = vrot.slane %v5108, 7
    %v5266 = vsel %vm237, %v5264, %v5265
    %v5267 = vrot.slane %v5109, 7
    %v5268 = vrot.slane %v5110, 7
    %v5269 = vsel %vm237, %v5267, %v5268
    %v5270 = vrot.slane %v5111, 7
    %v5271 = vrot.slane %v5112, 7
    %v5272 = vsel %vm237, %v5270, %v5271
    %v5337 = vsel %vm237, -3.4028235e+38, %v5177
    %v5338 = vsel %vm237, -3.4028235e+38, %v5180
    %v5339 = vsel %vm237, -3.4028235e+38, %v5183
    %v5340 = vsel %vm237, -3.4028235e+38, %v5186
    %v5341 = vsel %vm237, -3.4028235e+38, %v5189
    %v5342 = vsel %vm237, -3.4028235e+38, %v5192
    %v5343 = vsel %vm237, -3.4028235e+38, %v5195
    %v5344 = vsel %vm237, -3.4028235e+38, %v5198
    %v5345 = vsel %vm237, -3.4028235e+38, %v5201
    %v5346 = vsel %vm237, -3.4028235e+38, %v5204
    %v5347 = vsel %vm237, -3.4028235e+38, %v5207
    %v5348 = vsel %vm237, -3.4028235e+38, %v5210
    %v5349 = vsel %vm237, -3.4028235e+38, %v5213
    %v5350 = vsel %vm237, -3.4028235e+38, %v5216
    %v5351 = vsel %vm237, -3.4028235e+38, %v5219
    %v5352 = vsel %vm237, -3.4028235e+38, %v5222
    %v5353 = vsel %vm237, -3.4028235e+38, %v5225
    %v5354 = vsel %vm237, -3.4028235e+38, %v5228
    %v5355 = vsel %vm237, -3.4028235e+38, %v5231
    %v5356 = vsel %vm237, -3.4028235e+38, %v5234
    %v5357 = vsel %vm237, -3.4028235e+38, %v5237
    %v5358 = vsel %vm237, -3.4028235e+38, %v5240
    %v5359 = vsel %vm237, -3.4028235e+38, %v5243
    %v5360 = vsel %vm237, -3.4028235e+38, %v5246
    %v5361 = vsel %vm237, -3.4028235e+38, %v5249
    %v5362 = vsel %vm237, -3.4028235e+38, %v5252
    %v5363 = vsel %vm237, -3.4028235e+38, %v5255
    %v5364 = vsel %vm237, -3.4028235e+38, %v5258
    %v5365 = vsel %vm237, -3.4028235e+38, %v5261
    %v5366 = vsel %vm237, -3.4028235e+38, %v5264
    %v5367 = vsel %vm237, -3.4028235e+38, %v5267
    %v5368 = vsel %vm237, -3.4028235e+38, %v5270
    %v5369 = vmax.f32 %v5337, %v5049
    %v5370 = vmax.f32 %v5179, %v5050
    %v5371 = vmax.f32 %v5338, %v5051
    %v5372 = vmax.f32 %v5182, %v5052
    %v5373 = vmax.f32 %v5339, %v5053
    %v5374 = vmax.f32 %v5185, %v5054
    %v5375 = vmax.f32 %v5340, %v5055
    %v5376 = vmax.f32 %v5188, %v5056
    %v5377 = vmax.f32 %v5341, %v5057
    %v5378 = vmax.f32 %v5191, %v5058
    %v5379 = vmax.f32 %v5342, %v5059
    %v5380 = vmax.f32 %v5194, %v5060
    %v5381 = vmax.f32 %v5343, %v5061
    %v5382 = vmax.f32 %v5197, %v5062
    %v5383 = vmax.f32 %v5344, %v5063
    %v5384 = vmax.f32 %v5200, %v5064
    %v5385 = vmax.f32 %v5345, %v5065
    %v5386 = vmax.f32 %v5203, %v5066
    %v5387 = vmax.f32 %v5346, %v5067
    %v5388 = vmax.f32 %v5206, %v5068
    %v5389 = vmax.f32 %v5347, %v5069
    %v5390 = vmax.f32 %v5209, %v5070
    %v5391 = vmax.f32 %v5348, %v5071
    %v5392 = vmax.f32 %v5212, %v5072
    %v5393 = vmax.f32 %v5349, %v5073
    %v5394 = vmax.f32 %v5215, %v5074
    %v5395 = vmax.f32 %v5350, %v5075
    %v5396 = vmax.f32 %v5218, %v5076
    %v5397 = vmax.f32 %v5351, %v5077
    %v5398 = vmax.f32 %v5221, %v5078
    %v5399 = vmax.f32 %v5352, %v5079
    %v5400 = vmax.f32 %v5224, %v5080
    %v5401 = vmax.f32 %v5353, %v5081
    %v5402 = vmax.f32 %v5227, %v5082
    %v5403 = vmax.f32 %v5354, %v5083
    %v5404 = vmax.f32 %v5230, %v5084
    %v5405 = vmax.f32 %v5355, %v5085
    %v5406 = vmax.f32 %v5233, %v5086
    %v5407 = vmax.f32 %v5356, %v5087
    %v5408 = vmax.f32 %v5236, %v5088
    %v5409 = vmax.f32 %v5357, %v5089
    %v5410 = vmax.f32 %v5239, %v5090
    %v5411 = vmax.f32 %v5358, %v5091
    %v5412 = vmax.f32 %v5242, %v5092
    %v5413 = vmax.f32 %v5359, %v5093
    %v5414 = vmax.f32 %v5245, %v5094
    %v5415 = vmax.f32 %v5360, %v5095
    %v5416 = vmax.f32 %v5248, %v5096
    %v5417 = vmax.f32 %v5361, %v5097
    %v5418 = vmax.f32 %v5251, %v5098
    %v5419 = vmax.f32 %v5362, %v5099
    %v5420 = vmax.f32 %v5254, %v5100
    %v5421 = vmax.f32 %v5363, %v5101
    %v5422 = vmax.f32 %v5257, %v5102
    %v5423 = vmax.f32 %v5364, %v5103
    %v5424 = vmax.f32 %v5260, %v5104
    %v5425 = vmax.f32 %v5365, %v5105
    %v5426 = vmax.f32 %v5263, %v5106
    %v5427 = vmax.f32 %v5366, %v5107
    %v5428 = vmax.f32 %v5266, %v5108
    %v5429 = vmax.f32 %v5367, %v5109
    %v5430 = vmax.f32 %v5269, %v5110
    %v5431 = vmax.f32 %v5368, %v5111
    %v5432 = vmax.f32 %v5272, %v5112
    %v5433 = vrot.slane %v5049, 1
    %v5434 = vrot.slane %v5050, 1
    %v5435 = vsel %vm430, %v5433, %v5434
    %v5436 = vrot.slane %v5051, 1
    %v5437 = vrot.slane %v5052, 1
    %v5438 = vsel %vm430, %v5436, %v5437
    %v5439 = vrot.slane %v5053, 1
    %v5440 = vrot.slane %v5054, 1
    %v5441 = vsel %vm430, %v5439, %v5440
    %v5442 = vrot.slane %v5055, 1
    %v5443 = vrot.slane %v5056, 1
    %v5444 = vsel %vm430, %v5442, %v5443
    %v5445 = vrot.slane %v5057, 1
    %v5446 = vrot.slane %v5058, 1
    %v5447 = vsel %vm430, %v5445, %v5446
    %v5448 = vrot.slane %v5059, 1
    %v5449 = vrot.slane %v5060, 1
    %v5450 = vsel %vm430, %v5448, %v5449
    %v5451 = vrot.slane %v5061, 1
    %v5452 = vrot.slane %v5062, 1
    %v5453 = vsel %vm430, %v5451, %v5452
    %v5454 = vrot.slane %v5063, 1
    %v5455 = vrot.slane %v5064, 1
    %v5456 = vsel %vm430, %v5454, %v5455
    %v5457 = vrot.slane %v5065, 1
    %v5458 = vrot.slane %v5066, 1
    %v5459 = vsel %vm430, %v5457, %v5458
    %v5460 = vrot.slane %v5067, 1
    %v5461 = vrot.slane %v5068, 1
    %v5462 = vsel %vm430, %v5460, %v5461
    %v5463 = vrot.slane %v5069, 1
    %v5464 = vrot.slane %v5070, 1
    %v5465 = vsel %vm430, %v5463, %v5464
    %v5466 = vrot.slane %v5071, 1
    %v5467 = vrot.slane %v5072, 1
    %v5468 = vsel %vm430, %v5466, %v5467
    %v5469 = vrot.slane %v5073, 1
    %v5470 = vrot.slane %v5074, 1
    %v5471 = vsel %vm430, %v5469, %v5470
    %v5472 = vrot.slane %v5075, 1
    %v5473 = vrot.slane %v5076, 1
    %v5474 = vsel %vm430, %v5472, %v5473
    %v5475 = vrot.slane %v5077, 1
    %v5476 = vrot.slane %v5078, 1
    %v5477 = vsel %vm430, %v5475, %v5476
    %v5478 = vrot.slane %v5079, 1
    %v5479 = vrot.slane %v5080, 1
    %v5480 = vsel %vm430, %v5478, %v5479
    %v5481 = vrot.slane %v5081, 1
    %v5482 = vrot.slane %v5082, 1
    %v5483 = vsel %vm430, %v5481, %v5482
    %v5484 = vrot.slane %v5083, 1
    %v5485 = vrot.slane %v5084, 1
    %v5486 = vsel %vm430, %v5484, %v5485
    %v5487 = vrot.slane %v5085, 1
    %v5488 = vrot.slane %v5086, 1
    %v5489 = vsel %vm430, %v5487, %v5488
    %v5490 = vrot.slane %v5087, 1
    %v5491 = vrot.slane %v5088, 1
    %v5492 = vsel %vm430, %v5490, %v5491
    %v5493 = vrot.slane %v5089, 1
    %v5494 = vrot.slane %v5090, 1
    %v5495 = vsel %vm430, %v5493, %v5494
    %v5496 = vrot.slane %v5091, 1
    %v5497 = vrot.slane %v5092, 1
    %v5498 = vsel %vm430, %v5496, %v5497
    %v5499 = vrot.slane %v5093, 1
    %v5500 = vrot.slane %v5094, 1
    %v5501 = vsel %vm430, %v5499, %v5500
    %v5502 = vrot.slane %v5095, 1
    %v5503 = vrot.slane %v5096, 1
    %v5504 = vsel %vm430, %v5502, %v5503
    %v5505 = vrot.slane %v5097, 1
    %v5506 = vrot.slane %v5098, 1
    %v5507 = vsel %vm430, %v5505, %v5506
    %v5508 = vrot.slane %v5099, 1
    %v5509 = vrot.slane %v5100, 1
    %v5510 = vsel %vm430, %v5508, %v5509
    %v5511 = vrot.slane %v5101, 1
    %v5512 = vrot.slane %v5102, 1
    %v5513 = vsel %vm430, %v5511, %v5512
    %v5514 = vrot.slane %v5103, 1
    %v5515 = vrot.slane %v5104, 1
    %v5516 = vsel %vm430, %v5514, %v5515
    %v5517 = vrot.slane %v5105, 1
    %v5518 = vrot.slane %v5106, 1
    %v5519 = vsel %vm430, %v5517, %v5518
    %v5520 = vrot.slane %v5107, 1
    %v5521 = vrot.slane %v5108, 1
    %v5522 = vsel %vm430, %v5520, %v5521
    %v5523 = vrot.slane %v5109, 1
    %v5524 = vrot.slane %v5110, 1
    %v5525 = vsel %vm430, %v5523, %v5524
    %v5526 = vrot.slane %v5111, 1
    %v5527 = vrot.slane %v5112, 1
    %v5528 = vsel %vm430, %v5526, %v5527
    %v5593 = vsel %vm430, %v5434, -3.4028235e+38
    %v5594 = vsel %vm430, %v5437, -3.4028235e+38
    %v5595 = vsel %vm430, %v5440, -3.4028235e+38
    %v5596 = vsel %vm430, %v5443, -3.4028235e+38
    %v5597 = vsel %vm430, %v5446, -3.4028235e+38
    %v5598 = vsel %vm430, %v5449, -3.4028235e+38
    %v5599 = vsel %vm430, %v5452, -3.4028235e+38
    %v5600 = vsel %vm430, %v5455, -3.4028235e+38
    %v5601 = vsel %vm430, %v5458, -3.4028235e+38
    %v5602 = vsel %vm430, %v5461, -3.4028235e+38
    %v5603 = vsel %vm430, %v5464, -3.4028235e+38
    %v5604 = vsel %vm430, %v5467, -3.4028235e+38
    %v5605 = vsel %vm430, %v5470, -3.4028235e+38
    %v5606 = vsel %vm430, %v5473, -3.4028235e+38
    %v5607 = vsel %vm430, %v5476, -3.4028235e+38
    %v5608 = vsel %vm430, %v5479, -3.4028235e+38
    %v5609 = vsel %vm430, %v5482, -3.4028235e+38
    %v5610 = vsel %vm430, %v5485, -3.4028235e+38
    %v5611 = vsel %vm430, %v5488, -3.4028235e+38
    %v5612 = vsel %vm430, %v5491, -3.4028235e+38
    %v5613 = vsel %vm430, %v5494, -3.4028235e+38
    %v5614 = vsel %vm430, %v5497, -3.4028235e+38
    %v5615 = vsel %vm430, %v5500, -3.4028235e+38
    %v5616 = vsel %vm430, %v5503, -3.4028235e+38
    %v5617 = vsel %vm430, %v5506, -3.4028235e+38
    %v5618 = vsel %vm430, %v5509, -3.4028235e+38
    %v5619 = vsel %vm430, %v5512, -3.4028235e+38
    %v5620 = vsel %vm430, %v5515, -3.4028235e+38
    %v5621 = vsel %vm430, %v5518, -3.4028235e+38
    %v5622 = vsel %vm430, %v5521, -3.4028235e+38
    %v5623 = vsel %vm430, %v5524, -3.4028235e+38
    %v5624 = vsel %vm430, %v5527, -3.4028235e+38
    %v5625 = vmax.f32 %v5369, %v5435
    %v5626 = vmax.f32 %v5370, %v5593
    %v5627 = vmax.f32 %v5371, %v5438
    %v5628 = vmax.f32 %v5372, %v5594
    %v5629 = vmax.f32 %v5373, %v5441
    %v5630 = vmax.f32 %v5374, %v5595
    %v5631 = vmax.f32 %v5375, %v5444
    %v5632 = vmax.f32 %v5376, %v5596
    %v5633 = vmax.f32 %v5377, %v5447
    %v5634 = vmax.f32 %v5378, %v5597
    %v5635 = vmax.f32 %v5379, %v5450
    %v5636 = vmax.f32 %v5380, %v5598
    %v5637 = vmax.f32 %v5381, %v5453
    %v5638 = vmax.f32 %v5382, %v5599
    %v5639 = vmax.f32 %v5383, %v5456
    %v5640 = vmax.f32 %v5384, %v5600
    %v5641 = vmax.f32 %v5385, %v5459
    %v5642 = vmax.f32 %v5386, %v5601
    %v5643 = vmax.f32 %v5387, %v5462
    %v5644 = vmax.f32 %v5388, %v5602
    %v5645 = vmax.f32 %v5389, %v5465
    %v5646 = vmax.f32 %v5390, %v5603
    %v5647 = vmax.f32 %v5391, %v5468
    %v5648 = vmax.f32 %v5392, %v5604
    %v5649 = vmax.f32 %v5393, %v5471
    %v5650 = vmax.f32 %v5394, %v5605
    %v5651 = vmax.f32 %v5395, %v5474
    %v5652 = vmax.f32 %v5396, %v5606
    %v5653 = vmax.f32 %v5397, %v5477
    %v5654 = vmax.f32 %v5398, %v5607
    %v5655 = vmax.f32 %v5399, %v5480
    %v5656 = vmax.f32 %v5400, %v5608
    %v5657 = vmax.f32 %v5401, %v5483
    %v5658 = vmax.f32 %v5402, %v5609
    %v5659 = vmax.f32 %v5403, %v5486
    %v5660 = vmax.f32 %v5404, %v5610
    %v5661 = vmax.f32 %v5405, %v5489
    %v5662 = vmax.f32 %v5406, %v5611
    %v5663 = vmax.f32 %v5407, %v5492
    %v5664 = vmax.f32 %v5408, %v5612
    %v5665 = vmax.f32 %v5409, %v5495
    %v5666 = vmax.f32 %v5410, %v5613
    %v5667 = vmax.f32 %v5411, %v5498
    %v5668 = vmax.f32 %v5412, %v5614
    %v5669 = vmax.f32 %v5413, %v5501
    %v5670 = vmax.f32 %v5414, %v5615
    %v5671 = vmax.f32 %v5415, %v5504
    %v5672 = vmax.f32 %v5416, %v5616
    %v5673 = vmax.f32 %v5417, %v5507
    %v5674 = vmax.f32 %v5418, %v5617
    %v5675 = vmax.f32 %v5419, %v5510
    %v5676 = vmax.f32 %v5420, %v5618
    %v5677 = vmax.f32 %v5421, %v5513
    %v5678 = vmax.f32 %v5422, %v5619
    %v5679 = vmax.f32 %v5423, %v5516
    %v5680 = vmax.f32 %v5424, %v5620
    %v5681 = vmax.f32 %v5425, %v5519
    %v5682 = vmax.f32 %v5426, %v5621
    %v5683 = vmax.f32 %v5427, %v5522
    %v5684 = vmax.f32 %v5428, %v5622
    %v5685 = vmax.f32 %v5429, %v5525
    %v5686 = vmax.f32 %v5430, %v5623
    %v5687 = vmax.f32 %v5431, %v5528
    %v5688 = vmax.f32 %v5432, %v5624
    %v5689 = vmax.f32 %v5625, %v5627
    %v5690 = vmax.f32 %v5626, %v5628
    %v5691 = vmax.f32 %v5629, %v5631
    %v5692 = vmax.f32 %v5630, %v5632
    %v5693 = vmax.f32 %v5633, %v5635
    %v5694 = vmax.f32 %v5634, %v5636
    %v5695 = vmax.f32 %v5637, %v5639
    %v5696 = vmax.f32 %v5638, %v5640
    %v5697 = vmax.f32 %v5641, %v5643
    %v5698 = vmax.f32 %v5642, %v5644
    %v5699 = vmax.f32 %v5645, %v5647
    %v5700 = vmax.f32 %v5646, %v5648
    %v5701 = vmax.f32 %v5649, %v5651
    %v5702 = vmax.f32 %v5650, %v5652
    %v5703 = vmax.f32 %v5653, %v5655
    %v5704 = vmax.f32 %v5654, %v5656
    %v5705 = vmax.f32 %v5657, %v5659
    %v5706 = vmax.f32 %v5658, %v5660
    %v5707 = vmax.f32 %v5661, %v5663
    %v5708 = vmax.f32 %v5662, %v5664
    %v5709 = vmax.f32 %v5665, %v5667
    %v5710 = vmax.f32 %v5666, %v5668
    %v5711 = vmax.f32 %v5669, %v5671
    %v5712 = vmax.f32 %v5670, %v5672
    %v5713 = vmax.f32 %v5673, %v5675
    %v5714 = vmax.f32 %v5674, %v5676
    %v5715 = vmax.f32 %v5677, %v5679
    %v5716 = vmax.f32 %v5678, %v5680
    %v5717 = vmax.f32 %v5681, %v5683
    %v5718 = vmax.f32 %v5682, %v5684
    %v5719 = vmax.f32 %v5685, %v5687
    %v5720 = vmax.f32 %v5686, %v5688
    %v5721 = vmax.f32 %v5689, -3.4028235e+38
    %v5722 = vmax.f32 %v5690, -3.4028235e+38
    %v5723 = vmax.f32 %v5691, %v5627
    %v5724 = vmax.f32 %v5692, %v5628
    %v5725 = vmax.f32 %v5693, %v5631
    %v5726 = vmax.f32 %v5694, %v5632
    %v5727 = vmax.f32 %v5695, %v5635
    %v5728 = vmax.f32 %v5696, %v5636
    %v5729 = vmax.f32 %v5697, %v5639
    %v5730 = vmax.f32 %v5698, %v5640
    %v5731 = vmax.f32 %v5699, %v5643
    %v5732 = vmax.f32 %v5700, %v5644
    %v5733 = vmax.f32 %v5701, %v5647
    %v5734 = vmax.f32 %v5702, %v5648
    %v5735 = vmax.f32 %v5703, %v5651
    %v5736 = vmax.f32 %v5704, %v5652
    %v5737 = vmax.f32 %v5705, -3.4028235e+38
    %v5738 = vmax.f32 %v5706, -3.4028235e+38
    %v5739 = vmax.f32 %v5707, %v5659
    %v5740 = vmax.f32 %v5708, %v5660
    %v5741 = vmax.f32 %v5709, %v5663
    %v5742 = vmax.f32 %v5710, %v5664
    %v5743 = vmax.f32 %v5711, %v5667
    %v5744 = vmax.f32 %v5712, %v5668
    %v5745 = vmax.f32 %v5713, %v5671
    %v5746 = vmax.f32 %v5714, %v5672
    %v5747 = vmax.f32 %v5715, %v5675
    %v5748 = vmax.f32 %v5716, %v5676
    %v5749 = vmax.f32 %v5717, %v5679
    %v5750 = vmax.f32 %v5718, %v5680
    %v5751 = vmax.f32 %v5719, %v5683
    %v5752 = vmax.f32 %v5720, %v5684
    %5753 = vst.msk [vmem:[#allocation2] sm:$0xff] %vm2133, %v5721
    %5754 = vst.msk [vmem:[#allocation2 + $0x8] sm:$0xff] %vm2133, %v5722
    %5755 = vst.msk [vmem:[#allocation2 + $0x10] sm:$0xff] %vm2133, %v5723
    %5756 = vst.msk [vmem:[#allocation2 + $0x18] sm:$0xff] %vm2133, %v5724
    %5757 = vst.msk [vmem:[#allocation2 + $0x20] sm:$0xff] %vm2133, %v5725
    %5758 = vst.msk [vmem:[#allocation2 + $0x28] sm:$0xff] %vm2133, %v5726
    %5759 = vst.msk [vmem:[#allocation2 + $0x30] sm:$0xff] %vm2133, %v5727
    %5760 = vst.msk [vmem:[#allocation2 + $0x38] sm:$0xff] %vm2133, %v5728
    %5761 = vst.msk [vmem:[#allocation2 + $0x40] sm:$0xff] %vm2133, %v5729
    %5762 = vst.msk [vmem:[#allocation2 + $0x48] sm:$0xff] %vm2133, %v5730
    %5763 = vst.msk [vmem:[#allocation2 + $0x50] sm:$0xff] %vm2133, %v5731
    %5764 = vst.msk [vmem:[#allocation2 + $0x58] sm:$0xff] %vm2133, %v5732
    %5765 = vst.msk [vmem:[#allocation2 + $0x60] sm:$0xff] %vm2133, %v5733
    %5766 = vst.msk [vmem:[#allocation2 + $0x68] sm:$0xff] %vm2133, %v5734
    %5767 = vst.msk [vmem:[#allocation2 + $0x70] sm:$0xff] %vm2133, %v5735
    %5768 = vst.msk [vmem:[#allocation2 + $0x78] sm:$0xff] %vm2133, %v5736
    %5769 = vst.msk [vmem:[#allocation2 + $0x80] sm:$0xff] %vm2133, %v5737
    %5770 = vst.msk [vmem:[#allocation2 + $0x88] sm:$0xff] %vm2133, %v5738
    %5771 = vst.msk [vmem:[#allocation2 + $0x90] sm:$0xff] %vm2133, %v5739
    %5772 = vst.msk [vmem:[#allocation2 + $0x98] sm:$0xff] %vm2133, %v5740
    %5773 = vst.msk [vmem:[#allocation2 + $0xa0] sm:$0xff] %vm2133, %v5741
    %5774 = vst.msk [vmem:[#allocation2 + $0xa8] sm:$0xff] %vm2133, %v5742
    %5775 = vst.msk [vmem:[#allocation2 + $0xb0] sm:$0xff] %vm2133, %v5743
    %5776 = vst.msk [vmem:[#allocation2 + $0xb8] sm:$0xff] %vm2133, %v5744
    %5777 = vst.msk [vmem:[#allocation2 + $0xc0] sm:$0xff] %vm2133, %v5745
    %5778 = vst.msk [vmem:[#allocation2 + $0xc8] sm:$0xff] %vm2133, %v5746
    %5779 = vst.msk [vmem:[#allocation2 + $0xd0] sm:$0xff] %vm2133, %v5747
    %5780 = vst.msk [vmem:[#allocation2 + $0xd8] sm:$0xff] %vm2133, %v5748
    %5781 = vst.msk [vmem:[#allocation2 + $0xe0] sm:$0xff] %vm2133, %v5749
    %5782 = vst.msk [vmem:[#allocation2 + $0xe8] sm:$0xff] %vm2133, %v5750
    %5783 = vst.msk [vmem:[#allocation2 + $0xf0] sm:$0xff] %vm2133, %v5751
    %5784 = vst.msk [vmem:[#allocation2 + $0xf8] sm:$0xff] %vm2133, %v5752
    %v5785 = vld [vmem:[#allocation2] ss:$2 sm:$0xff]
    %s5786 = scalar_lea.vmem [#allocation2], 16
    %v5787 = vld [vmem:[%s5786] ss:$2 sm:$0xff]
    %s5788 = scalar_lea.vmem [#allocation2], 32
    %v5789 = vld [vmem:[%s5788] ss:$2 sm:$0xff]
    %s5790 = scalar_lea.vmem [#allocation2], 48
    %v5791 = vld [vmem:[%s5790] ss:$2 sm:$0xff]
    %s5792 = scalar_lea.vmem [#allocation2], 64
    %v5793 = vld [vmem:[%s5792] ss:$2 sm:$0xff]
    %s5794 = scalar_lea.vmem [#allocation2], 80
    %v5795 = vld [vmem:[%s5794] ss:$2 sm:$0xff]
    %s5796 = scalar_lea.vmem [#allocation2], 96
    %v5797 = vld [vmem:[%s5796] ss:$2 sm:$0xff]
    %s5798 = scalar_lea.vmem [#allocation2], 112
    %v5799 = vld [vmem:[%s5798] ss:$2 sm:$0xff]
    %s5800 = scalar_lea.vmem [#allocation2], 128
    %v5801 = vld [vmem:[%s5800] ss:$2 sm:$0xff]
    %s5802 = scalar_lea.vmem [#allocation2], 144
    %v5803 = vld [vmem:[%s5802] ss:$2 sm:$0xff]
    %s5804 = scalar_lea.vmem [#allocation2], 160
    %v5805 = vld [vmem:[%s5804] ss:$2 sm:$0xff]
    %s5806 = scalar_lea.vmem [#allocation2], 176
    %v5807 = vld [vmem:[%s5806] ss:$2 sm:$0xff]
    %s5808 = scalar_lea.vmem [#allocation2], 192
    %v5809 = vld [vmem:[%s5808] ss:$2 sm:$0xff]
    %s5810 = scalar_lea.vmem [#allocation2], 208
    %v5811 = vld [vmem:[%s5810] ss:$2 sm:$0xff]
    %s5812 = scalar_lea.vmem [#allocation2], 224
    %v5813 = vld [vmem:[%s5812] ss:$2 sm:$0xff]
    %s5814 = scalar_lea.vmem [#allocation2], 240
    %v5815 = vld [vmem:[%s5814] ss:$2 sm:$0xff]
    %5816 = vst.msk [vmem:[#allocation3] sm:$0xff] %vm1741, %v43
    %5817 = vst.msk [vmem:[#allocation3 + $0x8] sm:$0xff] %vm1741, %v44
    %5818 = vst.msk [vmem:[#allocation3 + $0x10] sm:$0xff] %vm1741, %v47
    %5819 = vst.msk [vmem:[#allocation3 + $0x18] sm:$0xff] %vm1741, %v48
    %5820 = vst.msk [vmem:[#allocation3 + $0x20] sm:$0xff] %vm1741, %v51
    %5821 = vst.msk [vmem:[#allocation3 + $0x28] sm:$0xff] %vm1741, %v52
    %5822 = vst.msk [vmem:[#allocation3 + $0x30] sm:$0xff] %vm1741, %v55
    %5823 = vst.msk [vmem:[#allocation3 + $0x38] sm:$0xff] %vm1741, %v56
    %5824 = vst.msk [vmem:[#allocation3 + $0x40] sm:$0xff] %vm1741, %v59
    %5825 = vst.msk [vmem:[#allocation3 + $0x48] sm:$0xff] %vm1741, %v60
    %5826 = vst.msk [vmem:[#allocation3 + $0x50] sm:$0xff] %vm1741, %v63
    %5827 = vst.msk [vmem:[#allocation3 + $0x58] sm:$0xff] %vm1741, %v64
    %5828 = vst.msk [vmem:[#allocation3 + $0x60] sm:$0xff] %vm1741, %v67
    %5829 = vst.msk [vmem:[#allocation3 + $0x68] sm:$0xff] %vm1741, %v68
    %5830 = vst.msk [vmem:[#allocation3 + $0x70] sm:$0xff] %vm1741, %v71
    %5831 = vst.msk [vmem:[#allocation3 + $0x78] sm:$0xff] %vm1741, %v72
    %5832 = vst.msk [vmem:[#allocation3 + $0x80] sm:$0xff] %vm1741, %v75
    %5833 = vst.msk [vmem:[#allocation3 + $0x88] sm:$0xff] %vm1741, %v76
    %5834 = vst.msk [vmem:[#allocation3 + $0x90] sm:$0xff] %vm1741, %v79
    %5835 = vst.msk [vmem:[#allocation3 + $0x98] sm:$0xff] %vm1741, %v80
    %5836 = vst.msk [vmem:[#allocation3 + $0xa0] sm:$0xff] %vm1741, %v83
    %5837 = vst.msk [vmem:[#allocation3 + $0xa8] sm:$0xff] %vm1741, %v84
    %5838 = vst.msk [vmem:[#allocation3 + $0xb0] sm:$0xff] %vm1741, %v87
    %5839 = vst.msk [vmem:[#allocation3 + $0xb8] sm:$0xff] %vm1741, %v88
    %5840 = vst.msk [vmem:[#allocation3 + $0xc0] sm:$0xff] %vm1741, %v91
    %5841 = vst.msk [vmem:[#allocation3 + $0xc8] sm:$0xff] %vm1741, %v92
    %5842 = vst.msk [vmem:[#allocation3 + $0xd0] sm:$0xff] %vm1741, %v95
    %5843 = vst.msk [vmem:[#allocation3 + $0xd8] sm:$0xff] %vm1741, %v96
    %5844 = vst.msk [vmem:[#allocation3 + $0xe0] sm:$0xff] %vm1741, %v99
    %5845 = vst.msk [vmem:[#allocation3 + $0xe8] sm:$0xff] %vm1741, %v100
    %5846 = vst.msk [vmem:[#allocation3 + $0xf0] sm:$0xff] %vm1741, %v103
    %5847 = vst.msk [vmem:[#allocation3 + $0xf8] sm:$0xff] %vm1741, %v104
    %v5848 = vld [vmem:[#allocation3] ss:$2 sm:$0xff]
    %s5849 = scalar_lea.vmem [#allocation3], 16
    %v5850 = vld [vmem:[%s5849] ss:$2 sm:$0xff]
    %s5851 = scalar_lea.vmem [#allocation3], 32
    %v5852 = vld [vmem:[%s5851] ss:$2 sm:$0xff]
    %s5853 = scalar_lea.vmem [#allocation3], 48
    %v5854 = vld [vmem:[%s5853] ss:$2 sm:$0xff]
    %s5855 = scalar_lea.vmem [#allocation3], 64
    %v5856 = vld [vmem:[%s5855] ss:$2 sm:$0xff]
    %s5857 = scalar_lea.vmem [#allocation3], 80
    %v5858 = vld [vmem:[%s5857] ss:$2 sm:$0xff]
    %s5859 = scalar_lea.vmem [#allocation3], 96
    %v5860 = vld [vmem:[%s5859] ss:$2 sm:$0xff]
    %s5861 = scalar_lea.vmem [#allocation3], 112
    %v5862 = vld [vmem:[%s5861] ss:$2 sm:$0xff]
    %s5863 = scalar_lea.vmem [#allocation3], 128
    %v5864 = vld [vmem:[%s5863] ss:$2 sm:$0xff]
    %s5865 = scalar_lea.vmem [#allocation3], 144
    %v5866 = vld [vmem:[%s5865] ss:$2 sm:$0xff]
    %s5867 = scalar_lea.vmem [#allocation3], 160
    %v5868 = vld [vmem:[%s5867] ss:$2 sm:$0xff]
    %s5869 = scalar_lea.vmem [#allocation3], 176
    %v5870 = vld [vmem:[%s5869] ss:$2 sm:$0xff]
    %s5871 = scalar_lea.vmem [#allocation3], 192
    %v5872 = vld [vmem:[%s5871] ss:$2 sm:$0xff]
    %s5873 = scalar_lea.vmem [#allocation3], 208
    %v5874 = vld [vmem:[%s5873] ss:$2 sm:$0xff]
    %s5875 = scalar_lea.vmem [#allocation3], 224
    %v5876 = vld [vmem:[%s5875] ss:$2 sm:$0xff]
    %s5877 = scalar_lea.vmem [#allocation3], 240
    %v5878 = vld [vmem:[%s5877] ss:$2 sm:$0xff]
    %v5879 = vpack.c.bf16 %v5850, %v5848
    %v5880 = vpack.c.bf16 %v5854, %v5852
    %v5881 = vpack.c.bf16 %v5858, %v5856
    %v5882 = vpack.c.bf16 %v5862, %v5860
    %v5883 = vpack.c.bf16 %v5866, %v5864
    %v5884 = vpack.c.bf16 %v5870, %v5868
    %v5885 = vpack.c.bf16 %v5874, %v5872
    %v5886 = vpack.c.bf16 %v5878, %v5876
    %v5887 = vld [vmem:[%s9] sm:$0xf]
    %v5888 = vpack.c.bf16 %v5887, %v5887
    %v5890 = vsel %vm1741, %v5879, 0
    %v5893 = vsel %vm1741, %v5880, 0
    %v5896 = vsel %vm1741, %v5881, 0
    %v5899 = vsel %vm1741, %v5882, 0
    %v5902 = vsel %vm1741, %v5883, 0
    %v5905 = vsel %vm1741, %v5884, 0
    %v5908 = vsel %vm1741, %v5885, 0
    %v5911 = vsel %vm1741, %v5886, 0
    %v5914 = vsel %vm1838, %v5888, 0
    %5916 = vmatprep.subr.bf16.mxu0 0
    %5917 = vmatpush1.bf16.msra.mxu0 0
    %5918 = vmatprep.subr.bf16.mxu0 0
    %5919 = vmatpush1.bf16.msra.mxu0 0
    %5920 = vmatprep.subr.bf16.mxu0 0
    %5921 = vmatpush1.bf16.msra.mxu0 0
    %5922 = vmatprep.subr.bf16.mxu0 0
    %5923 = vmatpush1.bf16.msra.mxu0 0
    %5924 = vmatprep.subr.bf16.mxu0 0
    %5925 = vmatpush1.bf16.msra.mxu0 0
    %5926 = vmatprep.subr.bf16.mxu0 0
    %5927 = vmatpush1.bf16.msra.mxu0 0
    %5928 = vmatprep.subr.bf16.mxu0 0
    %5929 = vmatpush1.bf16.msra.mxu0 0
    %5930 = vmatprep.subr.bf16.mxu0 0
    %5931 = vmatpush1.bf16.msra.mxu0 %v5914
    %5932 = vmatprep.subr.bf16.mxu0 0
    %5933 = vmatpush2.bf16.msra.mxu0 0
    %5934 = vmatprep.subr.bf16.mxu0 0
    %5935 = vmatpush2.bf16.msra.mxu0 0
    %5936 = vmatprep.subr.bf16.mxu0 0
    %5937 = vmatpush2.bf16.msra.mxu0 0
    %5938 = vmatprep.subr.bf16.mxu0 0
    %5939 = vmatpush2.bf16.msra.mxu0 0
    %5940 = vmatprep.subr.bf16.mxu0 0
    %5941 = vmatpush2.bf16.msra.mxu0 0
    %5942 = vmatprep.subr.bf16.mxu0 0
    %5943 = vmatpush2.bf16.msra.mxu0 0
    %5944 = vmatprep.subr.bf16.mxu0 0
    %5945 = vmatpush2.bf16.msra.mxu0 0
    %5946 = vmatprep.subr.bf16.mxu0 0
    %5947 = vmatpush2.bf16.msra.mxu0 0
    %5948 = vmatprep.mubr.bf16.mxu0 0
    %5949 = vmatmul.mubr.bf16.gmra.mxu0 %v5890
    %v5950 = vpop.f32.mrf.mxu0
    %v5951 = vadd.f32 0.0, %v5950
    %v5952 = vpop.f32.mrf.mxu0
    %v5953 = vpop.f32.mrf.mxu0
    %v5954 = vadd.f32 0.0, %v5953
    %v5955 = vpop.f32.mrf.mxu0
    %5956 = vmatprep.mubr.bf16.mxu0 0
    %5957 = vmatmul.mubr.bf16.gmra.mxu0 %v5893
    %v5958 = vpop.f32.mrf.mxu0
    %v5959 = vadd.f32 0.0, %v5958
    %v5960 = vpop.f32.mrf.mxu0
    %v5961 = vpop.f32.mrf.mxu0
    %v5962 = vadd.f32 0.0, %v5961
    %v5963 = vpop.f32.mrf.mxu0
    %5964 = vmatprep.mubr.bf16.mxu0 0
    %5965 = vmatmul.mubr.bf16.gmra.mxu0 %v5896
    %v5966 = vpop.f32.mrf.mxu0
    %v5967 = vadd.f32 0.0, %v5966
    %v5968 = vpop.f32.mrf.mxu0
    %v5969 = vpop.f32.mrf.mxu0
    %v5970 = vadd.f32 0.0, %v5969
    %v5971 = vpop.f32.mrf.mxu0
    %5972 = vmatprep.mubr.bf16.mxu0 0
    %5973 = vmatmul.mubr.bf16.gmra.mxu0 %v5899
    %v5974 = vpop.f32.mrf.mxu0
    %v5975 = vadd.f32 0.0, %v5974
    %v5976 = vpop.f32.mrf.mxu0
    %v5977 = vpop.f32.mrf.mxu0
    %v5978 = vadd.f32 0.0, %v5977
    %v5979 = vpop.f32.mrf.mxu0
    %5980 = vmatprep.mubr.bf16.mxu0 0
    %5981 = vmatmul.mubr.bf16.gmra.mxu0 %v5902
    %v5982 = vpop.f32.mrf.mxu0
    %v5983 = vadd.f32 0.0, %v5982
    %v5984 = vpop.f32.mrf.mxu0
    %v5985 = vpop.f32.mrf.mxu0
    %v5986 = vadd.f32 0.0, %v5985
    %v5987 = vpop.f32.mrf.mxu0
    %5988 = vmatprep.mubr.bf16.mxu0 0
    %5989 = vmatmul.mubr.bf16.gmra.mxu0 %v5905
    %v5990 = vpop.f32.mrf.mxu0
    %v5991 = vadd.f32 0.0, %v5990
    %v5992 = vpop.f32.mrf.mxu0
    %v5993 = vpop.f32.mrf.mxu0
    %v5994 = vadd.f32 0.0, %v5993
    %v5995 = vpop.f32.mrf.mxu0
    %5996 = vmatprep.mubr.bf16.mxu0 0
    %5997 = vmatmul.mubr.bf16.gmra.mxu0 %v5908
    %v5998 = vpop.f32.mrf.mxu0
    %v5999 = vadd.f32 0.0, %v5998
    %v6000 = vpop.f32.mrf.mxu0
    %v6001 = vpop.f32.mrf.mxu0
    %v6002 = vadd.f32 0.0, %v6001
    %v6003 = vpop.f32.mrf.mxu0
    %6004 = vmatprep.mubr.bf16.mxu0 0
    %6005 = vmatmul.mubr.bf16.gmra.mxu0 %v5911
    %v6006 = vpop.f32.mrf.mxu0
    %v6007 = vadd.f32 0.0, %v6006
    %v6008 = vpop.f32.mrf.mxu0
    %v6009 = vpop.f32.mrf.mxu0
    %v6010 = vadd.f32 0.0, %v6009
    %v6011 = vpop.f32.mrf.mxu0
    %6012 = vdwg.mxu0
    %v6013 = vld [vmem:[%s10] sm:$0x1]
    %v6014 = vld [vmem:[%s11] sm:$0x1]
    %v6015 = vsel %vm2133, %v5951, 0.0
    %v6016 = vsel %vm2133, %v5954, 0.0
    %v6017 = vadd.f32 %v6015, %v6016
    %v6018 = vsel %vm2133, %v5959, 0.0
    %v6019 = vadd.f32 %v6017, %v6018
    %v6020 = vsel %vm2133, %v5962, 0.0
    %v6021 = vadd.f32 %v6019, %v6020
    %v6022 = vsel %vm2133, %v5967, 0.0
    %v6023 = vadd.f32 %v6021, %v6022
    %v6024 = vsel %vm2133, %v5970, 0.0
    %v6025 = vadd.f32 %v6023, %v6024
    %v6026 = vsel %vm2133, %v5975, 0.0
    %v6027 = vadd.f32 %v6025, %v6026
    %v6028 = vsel %vm2133, %v5978, 0.0
    %v6029 = vadd.f32 %v6027, %v6028
    %v6030 = vsel %vm2133, %v5983, 0.0
    %v6031 = vadd.f32 %v6029, %v6030
    %v6032 = vsel %vm2133, %v5986, 0.0
    %v6033 = vadd.f32 %v6031, %v6032
    %v6034 = vsel %vm2133, %v5991, 0.0
    %v6035 = vadd.f32 %v6033, %v6034
    %v6036 = vsel %vm2133, %v5994, 0.0
    %v6037 = vadd.f32 %v6035, %v6036
    %v6038 = vsel %vm2133, %v5999, 0.0
    %v6039 = vadd.f32 %v6037, %v6038
    %v6040 = vsel %vm2133, %v6002, 0.0
    %v6041 = vadd.f32 %v6039, %v6040
    %v6042 = vsel %vm2133, %v6007, 0.0
    %v6043 = vadd.f32 %v6041, %v6042
    %v6044 = vsel %vm2133, %v6010, 0.0
    %v6045 = vadd.f32 %v6043, %v6044
    %v6046 = vrot.slane %v6045, 4
    %v6047 = vadd.f32 %v6045, %v6046
    %v6048 = vrot.slane %v6047, 2
    %v6049 = vadd.f32 %v6047, %v6048
    %v6050 = vrot.slane %v6049, 1
    %v6051 = vadd.f32 %v6049, %v6050
    %v6052 = vmul.f32 %v5951, %v5951
    %v6053 = vmul.f32 %v5954, %v5954
    %v6054 = vmul.f32 %v5959, %v5959
    %v6055 = vmul.f32 %v5962, %v5962
    %v6056 = vmul.f32 %v5967, %v5967
    %v6057 = vmul.f32 %v5970, %v5970
    %v6058 = vmul.f32 %v5975, %v5975
    %v6059 = vmul.f32 %v5978, %v5978
    %v6060 = vmul.f32 %v5983, %v5983
    %v6061 = vmul.f32 %v5986, %v5986
    %v6062 = vmul.f32 %v5991, %v5991
    %v6063 = vmul.f32 %v5994, %v5994
    %v6064 = vmul.f32 %v5999, %v5999
    %v6065 = vmul.f32 %v6002, %v6002
    %v6066 = vmul.f32 %v6007, %v6007
    %v6067 = vmul.f32 %v6010, %v6010
    %v6068 = vsel %vm2133, %v6052, 0.0
    %v6069 = vsel %vm2133, %v6053, 0.0
    %v6070 = vadd.f32 %v6068, %v6069
    %v6071 = vsel %vm2133, %v6054, 0.0
    %v6072 = vadd.f32 %v6070, %v6071
    %v6073 = vsel %vm2133, %v6055, 0.0
    %v6074 = vadd.f32 %v6072, %v6073
    %v6075 = vsel %vm2133, %v6056, 0.0
    %v6076 = vadd.f32 %v6074, %v6075
    %v6077 = vsel %vm2133, %v6057, 0.0
    %v6078 = vadd.f32 %v6076, %v6077
    %v6079 = vsel %vm2133, %v6058, 0.0
    %v6080 = vadd.f32 %v6078, %v6079
    %v6081 = vsel %vm2133, %v6059, 0.0
    %v6082 = vadd.f32 %v6080, %v6081
    %v6083 = vsel %vm2133, %v6060, 0.0
    %v6084 = vadd.f32 %v6082, %v6083
    %v6085 = vsel %vm2133, %v6061, 0.0
    %v6086 = vadd.f32 %v6084, %v6085
    %v6087 = vsel %vm2133, %v6062, 0.0
    %v6088 = vadd.f32 %v6086, %v6087
    %v6089 = vsel %vm2133, %v6063, 0.0
    %v6090 = vadd.f32 %v6088, %v6089
    %v6091 = vsel %vm2133, %v6064, 0.0
    %v6092 = vadd.f32 %v6090, %v6091
    %v6093 = vsel %vm2133, %v6065, 0.0
    %v6094 = vadd.f32 %v6092, %v6093
    %v6095 = vsel %vm2133, %v6066, 0.0
    %v6096 = vadd.f32 %v6094, %v6095
    %v6097 = vsel %vm2133, %v6067, 0.0
    %v6098 = vadd.f32 %v6096, %v6097
    %v6099 = vrot.slane %v6098, 4
    %v6100 = vadd.f32 %v6098, %v6099
    %v6101 = vrot.slane %v6100, 2
    %v6102 = vadd.f32 %v6100, %v6101
    %v6103 = vrot.slane %v6102, 1
    %v6104 = vadd.f32 %v6102, %v6103
    %v6105 = vmul.f32 %v6051, 0.0078125
    %v6106 = vmul.f32 %v6104, 0.0078125
    %v6107 = vmul.f32 %v6105, %v6105
    %v6108 = vsub.f32 %v6106, %v6107
    %v6109 = vmax.f32 %v6108, 0.0
    %v6110 = vadd.f32 %v6109, 1e-05
    %v6111 = vrsqrt.pop %v6110
    %v6112 = vmul.f32 %v6111, %v6013
    %v6113 = vmul.f32 %v6105, %v6112
    %v6114 = vsub.f32 %v6014, %v6113
    %v6115 = vlaneseq
    %v6116 = vshrl.u32 %v6115, 7
    %v6117 = vsub.s32 0, %v6116
    %v6118 = vrot.slane %v6112, %v6117
    %v6119 = vmul.f32 %v5951, %v6118
    %v6120 = vmul.f32 %v5954, %v6118
    %v6121 = vmul.f32 %v5959, %v6118
    %v6122 = vmul.f32 %v5962, %v6118
    %v6123 = vmul.f32 %v5967, %v6118
    %v6124 = vmul.f32 %v5970, %v6118
    %v6125 = vmul.f32 %v5975, %v6118
    %v6126 = vmul.f32 %v5978, %v6118
    %v6127 = vmul.f32 %v5983, %v6118
    %v6128 = vmul.f32 %v5986, %v6118
    %v6129 = vmul.f32 %v5991, %v6118
    %v6130 = vmul.f32 %v5994, %v6118
    %v6131 = vmul.f32 %v5999, %v6118
    %v6132 = vmul.f32 %v6002, %v6118
    %v6133 = vmul.f32 %v6007, %v6118
    %v6134 = vmul.f32 %v6010, %v6118
    %v6136 = vlaneseq
    %v6137 = vshrl.u32 %v6136, 7
    %v6138 = vsub.s32 0, %v6137
    %v6139 = vrot.slane %v6114, %v6138
    %v6141 = vadd.f32 %v6119, %v6139
    %v6142 = vadd.f32 %v6120, %v6139
    %v6143 = vadd.f32 %v6121, %v6139
    %v6144 = vadd.f32 %v6122, %v6139
    %v6145 = vadd.f32 %v6123, %v6139
    %v6146 = vadd.f32 %v6124, %v6139
    %v6147 = vadd.f32 %v6125, %v6139
    %v6148 = vadd.f32 %v6126, %v6139
    %v6149 = vadd.f32 %v6127, %v6139
    %v6150 = vadd.f32 %v6128, %v6139
    %v6151 = vadd.f32 %v6129, %v6139
    %v6152 = vadd.f32 %v6130, %v6139
    %v6153 = vadd.f32 %v6131, %v6139
    %v6154 = vadd.f32 %v6132, %v6139
    %v6155 = vadd.f32 %v6133, %v6139
    %v6156 = vadd.f32 %v6134, %v6139
    %v6157 = vadd.f32 %v5785, %v6141
    %v6158 = vadd.f32 %v5787, %v6142
    %v6159 = vadd.f32 %v5789, %v6143
    %v6160 = vadd.f32 %v5791, %v6144
    %v6161 = vadd.f32 %v5793, %v6145
    %v6162 = vadd.f32 %v5795, %v6146
    %v6163 = vadd.f32 %v5797, %v6147
    %v6164 = vadd.f32 %v5799, %v6148
    %v6165 = vadd.f32 %v5801, %v6149
    %v6166 = vadd.f32 %v5803, %v6150
    %v6167 = vadd.f32 %v5805, %v6151
    %v6168 = vadd.f32 %v5807, %v6152
    %v6169 = vadd.f32 %v5809, %v6153
    %v6170 = vadd.f32 %v5811, %v6154
    %v6171 = vadd.f32 %v5813, %v6155
    %v6172 = vadd.f32 %v5815, %v6156
    %6173 = vst.msk [vmem:[#allocation4] sm:$0xff] %vm2133, %v6157
    %6174 = vst.msk [vmem:[#allocation4 + $0x8] sm:$0xff] %vm2133, %v6158
    %6175 = vst.msk [vmem:[#allocation4 + $0x10] sm:$0xff] %vm2133, %v6159
    %6176 = vst.msk [vmem:[#allocation4 + $0x18] sm:$0xff] %vm2133, %v6160
    %6177 = vst.msk [vmem:[#allocation4 + $0x20] sm:$0xff] %vm2133, %v6161
    %6178 = vst.msk [vmem:[#allocation4 + $0x28] sm:$0xff] %vm2133, %v6162
    %6179 = vst.msk [vmem:[#allocation4 + $0x30] sm:$0xff] %vm2133, %v6163
    %6180 = vst.msk [vmem:[#allocation4 + $0x38] sm:$0xff] %vm2133, %v6164
    %6181 = vst.msk [vmem:[#allocation4 + $0x40] sm:$0xff] %vm2133, %v6165
    %6182 = vst.msk [vmem:[#allocation4 + $0x48] sm:$0xff] %vm2133, %v6166
    %6183 = vst.msk [vmem:[#allocation4 + $0x50] sm:$0xff] %vm2133, %v6167
    %6184 = vst.msk [vmem:[#allocation4 + $0x58] sm:$0xff] %vm2133, %v6168
    %6185 = vst.msk [vmem:[#allocation4 + $0x60] sm:$0xff] %vm2133, %v6169
    %6186 = vst.msk [vmem:[#allocation4 + $0x68] sm:$0xff] %vm2133, %v6170
    %6187 = vst.msk [vmem:[#allocation4 + $0x70] sm:$0xff] %vm2133, %v6171
    %6188 = vst.msk [vmem:[#allocation4 + $0x78] sm:$0xff] %vm2133, %v6172
    // Predicated region
    $region50: #{tpu_custom_call.1} parent=1 // pred_check
      _
    $region51: #{tpu_custom_call.1} parent=1 // pred_check_branch
      %6190 = sbr.rel (0) target = $region53
    $region52: #{tpu_custom_call.1} parent=1 // pred_region
      %s6192 = ssub.s32 2048, 2048
      %6193 = vsyncadd [#allocation5], %s6192
      %s6194 = sshll.u32 [#allocation4], 4
      %s6195 = int_to_ptr.vmem [resolvable:$true] %s6194
      %6200 = dma.vmem_to_hbm [thread:$0]  %s6195, 2048, %s12, [#allocation5], 128, 128, 8
    $region53: #{tpu_custom_call.1} parent=1 // pred_fallthru
      _
    // Predicated region
    $region54: #{tpu_custom_call.1} parent=1 // pred_check
      _
    $region55: #{tpu_custom_call.1} parent=1 // pred_check_branch
      %6202 = sbr.rel (0) target = $region57
    $region56: #{tpu_custom_call.1} parent=1 // pred_region
      %6203 = dma.done [#allocation5], 2048
    $region57: #{tpu_custom_call.1} parent=1 // pred_fallthru
      _
    %6204 = vsyncpa [#allocation5], 1

</llo_original>
